<compile_context>
chip_gen: v7x
topology: tpu7x:2x2x1
jax: 0.10.0
libtpu: 0.0.40
codegen_flags: <defaults>
</compile_context>

<pallas_src>
import math

import numpy as np
import jax
import jax.numpy as jnp
from jax.experimental import pallas as pl
from jax.experimental.pallas import tpu as pltpu

freq_map = {'h': 4, 't': 5, 's': 6, 'm': 1, 'a': 1, 'w': 2, 'd': 3, 'b': 3}

# Rows of the per-layer packed bias / LayerNorm table (each row lane-padded).
_BQ, _BK, _BV, _BOUT, _BFF1, _BFF2, _G1, _B1, _G2, _B2, _NROWS = range(11)


def _round_up(x, m):
    return (x + m - 1) // m * m


# ----------------------------------------------------------------------------
# Pallas kernel: one (batch block, encoder layer) per grid step.
# ----------------------------------------------------------------------------
def make_kernel(cfg, bb, V, p_pad):
    d = cfg["d_model"]
    H = cfg["n_heads"]
    hd = d // H
    dff = cfg["d_ff"]
    EL = cfg["e_layers"]
    E = cfg["num_experts"]
    L = cfg["seq_len"]
    R = bb * V
    scale = 1.0 / math.sqrt(hd)
    eps = 1e-5
    # bf16 recommended at production sizes on v6e/v7x (f32 accumulation kept).
    cdt = cfg.get("compute_dtype", jnp.float32)
    use_relu = cfg.get("activation", "gelu") == "relu"

    def mm(a, w):
        return jnp.dot(a.astype(cdt), w.astype(cdt),
                       preferred_element_type=jnp.float32)

    def layernorm(z, g, b):          # f32 on every chip (v5e has no bf16 VPU)
        mu = jnp.mean(z, axis=-1, keepdims=True)
        zc = z - mu
        var = jnp.mean(zc * zc, axis=-1, keepdims=True)
        return zc * jax.lax.rsqrt(var + eps) * g + b

    def kernel(tok_ref, emb_ref, encln_ref, moe_ref,
               wqkv_ref, wout_ref, wff1_ref, wff2_ref, lvec_ref,
               out_ref, h_ref):
        l = pl.program_id(1)

        # ---- layer 0: DataEmbedding_inverted (Linear L -> d_model per token)
        @pl.when(l == 0)
        def _():
            emb = emb_ref[...]                               # (L+1, d)
            tok = tok_ref[...]                               # (R, L)
            h_ref[...] = mm(tok, emb[:L]) + emb[L:L + 1]

        h = h_ref[...]                                       # (R, d) f32
        lv = lvec_ref[...]                                   # (10, Wpad) f32
        wqkv = wqkv_ref[...]                                 # (d, 3d)
        wout = wout_ref[...]                                 # (d, d)

        # ---- fused Q|K|V projection (one MXU call)
        qkv = mm(h, wqkv)                                    # (R, 3d)
        q = (qkv[:, 0:d] + lv[_BQ:_BQ + 1, :d]).reshape(bb, V, d)
        k = (qkv[:, d:2 * d] + lv[_BK:_BK + 1, :d]).reshape(bb, V, d)
        v = (qkv[:, 2 * d:3 * d] + lv[_BV:_BV + 1, :d]).reshape(bb, V, d)

        # ---- attention: per-head, out-projection folded into the head loop
        #      (no stack/concat relayouts; V is tiny so score matmuls are free)
        a = jnp.zeros((R, d), jnp.float32) + lv[_BOUT:_BOUT + 1, :d]
        for i in range(H):
            sl = slice(i * hd, (i + 1) * hd)
            s = jnp.einsum('bqe,bke->bqk',
                           q[:, :, sl].astype(cdt), k[:, :, sl].astype(cdt),
                           preferred_element_type=jnp.float32) * scale
            s = s - jnp.max(s, axis=-1, keepdims=True)
            p = jnp.exp(s)
            p = p * pl.reciprocal(jnp.sum(p, axis=-1, keepdims=True),
                                  approx=True)
            ctx = jnp.einsum('bqk,bke->bqe',
                             p.astype(cdt), v[:, :, sl].astype(cdt),
                             preferred_element_type=jnp.float32)
            a = a + mm(ctx.reshape(R, hd), wout[sl, :])

        # ---- residual + LN + FFN + LN
        hx = layernorm(h + a, lv[_G1:_G1 + 1, :d], lv[_B1:_B1 + 1, :d])
        y = mm(hx, wff1_ref[...]) + lv[_BFF1:_BFF1 + 1, :dff]
        # TODO(synk): torch F.gelu defaults to exact erf; tanh approximation used here.
        y = jnp.maximum(y, 0.0) if use_relu else jax.nn.gelu(y)
        y = mm(y, wff2_ref[...]) + lv[_BFF2:_BFF2 + 1, :d]
        h_new = layernorm(hx + y, lv[_G2:_G2 + 1, :d], lv[_B2:_B2 + 1, :d])
        h_ref[...] = h_new

        # ---- last layer: final LN + fused MMoE decode, lane-dense store
        @pl.when(l == EL - 1)
        def _():
            encln = encln_ref[...]                           # (2, d)
            hf = layernorm(h_new, encln[0:1, :], encln[1:2, :])
            mw = moe_ref[...]                                # (d+1, E*Pp + 128)
            z = mm(hf, mw[:d, :]) + mw[d:d + 1, :]           # (R, E*Pp + 128)
            gl = z[:, E * p_pad:E * p_pad + E]               # (R, E) gate logits
            gl = gl - jnp.max(gl, axis=-1, keepdims=True)
            gp = jnp.exp(gl)
            gate = gp * pl.reciprocal(jnp.sum(gp, axis=-1, keepdims=True),
                                      approx=True)
            dec = gate[:, 0:1] * z[:, 0:p_pad]
            for e in range(1, E):                            # 128-aligned slices
                dec = dec + gate[:, e:e + 1] * z[:, e * p_pad:(e + 1) * p_pad]
            out_ref[...] = dec.astype(out_ref.dtype)

    return kernel


# ----------------------------------------------------------------------------
# Wrapper: normalization + layout plumbing in XLA, heavy compute in the kernel.
# ----------------------------------------------------------------------------
def itrans_forward(x_enc, x_mark_enc, x_dec, x_mark_dec, params, cfg):
    del x_dec, x_mark_dec                                    # unused (forecast path)
    B, L, N = x_enc.shape
    T = x_mark_enc.shape[-1]
    V = N + T
    P = cfg["pred_len"]
    EL = cfg["e_layers"]
    d = cfg["d_model"]
    p_pad = _round_up(P, 128)
    assert L == cfg["seq_len"]

    # series-wise normalization (mean over time, biased variance — matches torch)
    mean = jnp.mean(x_enc, axis=1, keepdims=True)            # (B, 1, N)
    xc = x_enc - mean
    stdev = jnp.sqrt(jnp.mean(xc * xc, axis=1, keepdims=True) + 1e-5)
    xn = xc / stdev

    # token slab (B, V, L): inverted-embedding layout built outside the kernel
    tok = jnp.concatenate(
        [jnp.swapaxes(xn, 1, 2), jnp.swapaxes(x_mark_enc, 1, 2)], axis=1)

    # batch blocking: R = bb*V rows per grid step; target >=256 rows for the MXU
    # M-dim, while keeping >=2 blocks when possible so both v7x TCs have work.
    bb = cfg.get("batch_block")
    if bb is None:
        bb = max(1, min(B, -(-256 // V)))
    bb = min(int(bb), B)
    nblk = pl.cdiv(B, bb)
    Bp = nblk * bb
    if nblk > 1 and (bb * V) % 8 != 0:
        bb, nblk, Bp = B, 1, B        # single full-extent block is always legal
    if Bp != B:
        tok = jnp.pad(tok, ((0, Bp - B), (0, 0), (0, 0)))
    R = bb * V
    tok_flat = tok.reshape(Bp * V, L)

    emb_wb, encln, moe_wb, w_qkv, w_out, w_ff1, w_ff2, lvec = params

    def const2(i, l):
        return (0, 0)

    def perlayer3(i, l):
        return (l, 0, 0)

    in_specs = [
        pl.BlockSpec((R, L), lambda i, l: (i, 0)),           # tokens, per block
        pl.BlockSpec(emb_wb.shape, const2),                  # constant weights
        pl.BlockSpec(encln.shape, const2),
        pl.BlockSpec(moe_wb.shape, const2),
        pl.BlockSpec((None,) + w_qkv.shape[1:], perlayer3),  # per-layer weights
        pl.BlockSpec((None,) + w_out.shape[1:], perlayer3),
        pl.BlockSpec((None,) + w_ff1.shape[1:], perlayer3),
        pl.BlockSpec((None,) + w_ff2.shape[1:], perlayer3),
        pl.BlockSpec((None,) + lvec.shape[1:], perlayer3),
    ]

    # scoped-VMEM budget: double-buffered blocks + f32 carry scratch + headroom
    def nbytes(shape, dt):
        return int(np.prod(shape)) * jnp.dtype(dt).itemsize

    blk_bytes = (nbytes((R, L), tok_flat.dtype)
                 + nbytes(emb_wb.shape, emb_wb.dtype)
                 + nbytes(encln.shape, encln.dtype)
                 + nbytes(moe_wb.shape, moe_wb.dtype)
                 + nbytes(w_qkv.shape[1:], w_qkv.dtype)
                 + nbytes(w_out.shape[1:], w_out.dtype)
                 + nbytes(w_ff1.shape[1:], w_ff1.dtype)
                 + nbytes(w_ff2.shape[1:], w_ff2.dtype)
                 + nbytes(lvec.shape[1:], lvec.dtype)
                 + nbytes((R, p_pad), jnp.float32))
    est = 2 * blk_bytes + nbytes((R, d), jnp.float32)
    vmem_limit = int(min(128 * 2**20, max(32 * 2**20, 2 * est)))

    out = pl.pallas_call(
        make_kernel(cfg, bb, V, p_pad),
        grid=(nblk, EL),
        in_specs=in_specs,
        out_specs=pl.BlockSpec((R, p_pad), lambda i, l: (i, 0)),
        out_shape=jax.ShapeDtypeStruct((Bp * V, p_pad), jnp.float32),
        scratch_shapes=[pltpu.VMEM((R, d), jnp.float32)],    # residual-stream carry
        compiler_params=pltpu.CompilerParams(
            dimension_semantics=("parallel", "arbitrary"),
            vmem_limit_bytes=vmem_limit),
    )(tok_flat, emb_wb, encln, moe_wb, w_qkv, w_out, w_ff1, w_ff2, lvec)

    dec = out[:, :P].reshape(Bp, V, P)[:B, :N, :]            # (B, N, P)
    dec = jnp.swapaxes(dec, 1, 2)                            # (B, P, N)
    return dec * stdev + mean                                # de-normalize


# ----------------------------------------------------------------------------
# Packed deterministic parameter init (shapes follow the PyTorch module).
# ----------------------------------------------------------------------------
def init_params(key, cfg):
    L = cfg["seq_len"]
    d = cfg["d_model"]
    dff = cfg["d_ff"]
    EL = cfg["e_layers"]
    P = cfg["pred_len"]
    E = cfg["num_experts"]
    p_pad = _round_up(P, 128)
    wpad = _round_up(max(d, dff), 128)
    wdt = cfg.get("param_dtype", jnp.float32)   # set bf16 at production sizes
    keys = iter(jax.random.split(key, 1024))

    def rnd(shape, s=0.05):
        return (s * jax.random.normal(next(keys), shape)).astype(jnp.float32)

    def row(v):
        return jnp.pad(v, (0, wpad - v.shape[0]))

    emb_wb = jnp.concatenate([rnd((L, d)), rnd((1, d), 0.02)], axis=0).astype(wdt)

    wqkv, wout, wff1, wff2, lvecs = [], [], [], [], []
    for _ in range(EL):
        wqkv.append(jnp.concatenate([rnd((d, d)), rnd((d, d)), rnd((d, d))], axis=1))
        wout.append(rnd((d, d)))
        wff1.append(rnd((d, dff)))
        wff2.append(rnd((dff, d)))
        lvecs.append(jnp.stack([
            row(rnd((d,), 0.02)),          # b_q
            row(rnd((d,), 0.02)),          # b_k
            row(rnd((d,), 0.02)),          # b_v
            row(rnd((d,), 0.02)),          # b_out
            row(rnd((dff,), 0.02)),        # b_ffn1
            row(rnd((d,), 0.02)),          # b_ffn2
            row(1.0 + rnd((d,), 0.02)),    # LN1 gamma
            row(rnd((d,), 0.02)),          # LN1 beta
            row(1.0 + rnd((d,), 0.02)),    # LN2 gamma
            row(rnd((d,), 0.02)),          # LN2 beta
        ], axis=0))

    w_qkv = jnp.stack(wqkv).astype(wdt)     # (EL, d, 3d)
    w_out = jnp.stack(wout).astype(wdt)     # (EL, d, d)
    w_ff1 = jnp.stack(wff1).astype(wdt)     # (EL, d, dff)
    w_ff2 = jnp.stack(wff2).astype(wdt)     # (EL, dff, d)
    lvec = jnp.stack(lvecs)                 # (EL, 10, wpad) f32

    encln = jnp.stack([1.0 + rnd((d,), 0.02), rnd((d,), 0.02)], axis=0)  # (2, d)

    # MMoE: experts Linear(d->P), each lane-padded to p_pad; gate Linear(d->E)
    # in a trailing 128-lane block; the whole decode is one fused matmul.
    we_cols = [jnp.pad(rnd((d, P)), ((0, 0), (0, p_pad - P))) for _ in range(E)]
    be_cols = [jnp.pad(rnd((P,), 0.02), (0, p_pad - P)) for _ in range(E)]
    wg = jnp.pad(rnd((d, E)), ((0, 0), (0, 128 - E)))
    bg = jnp.pad(rnd((E,), 0.02), (0, 128 - E))
    moe_w = jnp.concatenate(we_cols + [wg], axis=1)          # (d, E*p_pad + 128)
    moe_b = jnp.concatenate(be_cols + [bg], axis=0)[None, :]
    moe_wb = jnp.concatenate([moe_w, moe_b], axis=0).astype(wdt)  # (d+1, ...)

    return [emb_wb, encln, moe_wb, w_qkv, w_out, w_ff1, w_ff2, lvec]


# ----------------------------------------------------------------------------
# Pure-JAX reference (per-sample math, vmapped) for validation.
# ----------------------------------------------------------------------------
def reference_forward(x_enc, x_mark_enc, params, cfg):
    emb_wb, encln, moe_wb, w_qkv, w_out, w_ff1, w_ff2, lvec = [
        p.astype(jnp.float32) for p in params]
    d = cfg["d_model"]
    H = cfg["n_heads"]
    hd = d // H
    dff = cfg["d_ff"]
    EL = cfg["e_layers"]
    P = cfg["pred_len"]
    E = cfg["num_experts"]
    L = cfg["seq_len"]
    p_pad = _round_up(P, 128)
    scale = 1.0 / math.sqrt(hd)
    eps = 1e-5
    use_relu = cfg.get("activation", "gelu") == "relu"
    hp = jax.lax.Precision.HIGHEST
    dot = lambda a, b: jnp.dot(a, b, precision=hp)

    def layernorm(z, g, b):
        mu = jnp.mean(z, axis=-1, keepdims=True)
        zc = z - mu
        var = jnp.mean(zc * zc, axis=-1, keepdims=True)
        return zc * jax.lax.rsqrt(var + eps) * g + b

    def one(x, mark):
        N = x.shape[-1]
        mean = jnp.mean(x, axis=0, keepdims=True)
        xc = x - mean
        std = jnp.sqrt(jnp.mean(xc * xc, axis=0, keepdims=True) + 1e-5)
        xn = xc / std
        tok = jnp.concatenate([xn.T, mark.T], axis=0)        # (V, L)
        h = dot(tok, emb_wb[:L]) + emb_wb[L]
        for l in range(EL):
            lv = lvec[l]
            q = dot(h, w_qkv[l][:, 0:d]) + lv[_BQ, :d]
            k = dot(h, w_qkv[l][:, d:2 * d]) + lv[_BK, :d]
            v = dot(h, w_qkv[l][:, 2 * d:3 * d]) + lv[_BV, :d]
            heads = []
            for i in range(H):
                sl = slice(i * hd, (i + 1) * hd)
                s = dot(q[:, sl], k[:, sl].T) * scale
                p = jax.nn.softmax(s, axis=-1)
                heads.append(dot(p, v[:, sl]))
            a = jnp.concatenate(heads, axis=-1)
            a = dot(a, w_out[l]) + lv[_BOUT, :d]
            hx = layernorm(h + a, lv[_G1, :d], lv[_B1, :d])
            y = dot(hx, w_ff1[l]) + lv[_BFF1, :dff]
            y = jnp.maximum(y, 0.0) if use_relu else jax.nn.gelu(y)
            y = dot(y, w_ff2[l]) + lv[_BFF2, :d]
            h = layernorm(hx + y, lv[_G2, :d], lv[_B2, :d])
        h = layernorm(h, encln[0], encln[1])
        gsl = slice(E * p_pad, E * p_pad + E)
        gate = jax.nn.softmax(dot(h, moe_wb[:d, gsl]) + moe_wb[d, gsl], axis=-1)
        dec = jnp.zeros((h.shape[0], P), jnp.float32)
        for e in range(E):
            sl = slice(e * p_pad, e * p_pad + P)
            eo = dot(h, moe_wb[:d, sl]) + moe_wb[d, sl]
            dec = dec + gate[:, e:e + 1] * eo
        return dec.T[:, :N] * std + mean                      # (P, N)

    return jax.vmap(one)(x_enc, x_mark_enc)


# ----------------------------------------------------------------------------
if __name__ == "__main__":
    cfg = dict(
        task_name="long_term_forecast",
        seq_len=8,
        pred_len=8,
        d_model=32,
        d_ff=64,
        n_heads=4,
        e_layers=2,
        enc_in=4,
        freq='h',
        num_experts=4,
        activation="gelu",
        batch_block=2,          # 2 batch blocks -> exercises both grid axes
        # Production on v6e/v7x: param_dtype=jnp.bfloat16, compute_dtype=jnp.bfloat16
    )
    cfg["time_in"] = freq_map[cfg["freq"]]

    B = 4
    key = jax.random.PRNGKey(0)
    kx, km, kp = jax.random.split(key, 3)
    x_enc = jax.random.normal(kx, (B, cfg["seq_len"], cfg["enc_in"]), jnp.float32)
    x_mark_enc = jax.random.normal(km, (B, cfg["seq_len"], cfg["time_in"]), jnp.float32)
    x_dec = jnp.zeros((B, cfg["pred_len"], cfg["enc_in"]), jnp.float32)          # unused
    x_mark_dec = jnp.zeros((B, cfg["pred_len"], cfg["time_in"]), jnp.float32)    # unused

    params = init_params(kp, cfg)

    out = itrans_forward(x_enc, x_mark_enc, x_dec, x_mark_dec, params, cfg)
    out = jax.block_until_ready(out)

    ref = jax.block_until_ready(reference_forward(x_enc, x_mark_enc, params, cfg))

    assert out.shape == (B, cfg["pred_len"], cfg["enc_in"])
    assert bool(jnp.all(jnp.isfinite(out)))
    np.testing.assert_allclose(np.asarray(out), np.asarray(ref), rtol=1e-2, atol=1e-2)
    print("KERNEL_OK")
</pallas_src>

<mosaic_0001>
module attributes {stable_mosaic.version = 11 : i64} {
  func.func @kernel(%arg0: i32, %arg1: i32, %arg2: memref<16x8xf32, #tpu.memory_space<vmem>>, %arg3: memref<9x32xf32, #tpu.memory_space<vmem>>, %arg4: memref<2x32xf32, #tpu.memory_space<vmem>>, %arg5: memref<33x640xf32, #tpu.memory_space<vmem>>, %arg6: memref<1x32x96xf32, #tpu.memory_space<vmem>>, %arg7: memref<1x32x32xf32, #tpu.memory_space<vmem>>, %arg8: memref<1x32x64xf32, #tpu.memory_space<vmem>>, %arg9: memref<1x64x32xf32, #tpu.memory_space<vmem>>, %arg10: memref<1x10x128xf32, #tpu.memory_space<vmem>>, %arg11: memref<16x128xf32, #tpu.memory_space<vmem>>, %arg12: memref<16x32xf32, #tpu.memory_space<vmem>>) attributes {dimension_semantics = [#tpu.dimension_semantics<parallel>, #tpu.dimension_semantics<arbitrary>], iteration_bounds = array<i64: 2, 2>, scalar_prefetch = 0 : i64, scratch_operands = 1 : i64, tpu.core_type = #tpu.core_type<tc>, window_params = [{transform_indices = @transform_0, window_bounds = array<i64: 16, 8>}, {pipeline_mode = #tpu.pipeline_mode<synchronous>, transform_indices = @transform_1, window_bounds = array<i64: 9, 32>}, {pipeline_mode = #tpu.pipeline_mode<synchronous>, transform_indices = @transform_2, window_bounds = array<i64: 2, 32>}, {pipeline_mode = #tpu.pipeline_mode<synchronous>, transform_indices = @transform_3, window_bounds = array<i64: 33, 640>}, {transform_indices = @transform_4, window_bounds = array<i64: 1, 32, 96>}, {transform_indices = @transform_5, window_bounds = array<i64: 1, 32, 32>}, {transform_indices = @transform_6, window_bounds = array<i64: 1, 32, 64>}, {transform_indices = @transform_7, window_bounds = array<i64: 1, 64, 32>}, {transform_indices = @transform_8, window_bounds = array<i64: 1, 10, 128>}, {transform_indices = @transform_9, window_bounds = array<i64: 16, 128>}]} {
    %c0_i32 = arith.constant 0 : i32
    %0 = arith.cmpi eq, %arg1, %c0_i32 : i32
    %1 = arith.extui %0 : i1 to i32
    %c0_i32_0 = arith.constant 0 : i32
    %2 = arith.cmpi ne, %1, %c0_i32_0 : i32
    scf.if %2 {
      %c0_61 = arith.constant 0 : index
      %c0_62 = arith.constant 0 : index
      %189 = vector.load %arg3[%c0_61, %c0_62] : memref<9x32xf32, #tpu.memory_space<vmem>>, vector<9x32xf32>
      %c0_63 = arith.constant 0 : index
      %c0_64 = arith.constant 0 : index
      %190 = vector.load %arg2[%c0_63, %c0_64] : memref<16x8xf32, #tpu.memory_space<vmem>>, vector<16x8xf32>
      %191 = vector.extract_strided_slice %189 {offsets = [0, 0], sizes = [8, 32], strides = [1, 1]} : vector<9x32xf32> to vector<8x32xf32>
      %cst_65 = arith.constant dense<0.000000e+00> : vector<16x32xf32>
      %192 = tpu.matmul %190, %191, %cst_65 {dimension_numbers = #tpu.dot_dimension_numbers<[1], [0], [0], [1], [0, 0, 1, 1], [], []>} : vector<16x8xf32>, vector<8x32xf32>, vector<16x32xf32> -> vector<16x32xf32>
      %193 = vector.extract_strided_slice %189 {offsets = [8, 0], sizes = [1, 32], strides = [1, 1]} : vector<9x32xf32> to vector<1x32xf32>
      %194 = vector.broadcast %193 : vector<1x32xf32> to vector<16x32xf32>
      %195 = arith.addf %192, %194 : vector<16x32xf32>
      %c0_66 = arith.constant 0 : index
      %c0_67 = arith.constant 0 : index
      %196 = vector.load %arg12[%c0_66, %c0_67] : memref<16x32xf32, #tpu.memory_space<vmem>>, vector<16x32xf32>
      tpu.vector_store %arg12[%c0_66, %c0_67], %195 {strides = array<i32>} : memref<16x32xf32, #tpu.memory_space<vmem>>, vector<16x32xf32>,
    } else {
    }
    %c0 = arith.constant 0 : index
    %c0_1 = arith.constant 0 : index
    %3 = vector.load %arg12[%c0, %c0_1] : memref<16x32xf32, #tpu.memory_space<vmem>>, vector<16x32xf32>
    %c0_2 = arith.constant 0 : index
    %c0_3 = arith.constant 0 : index
    %c0_4 = arith.constant 0 : index
    %4 = vector.load %arg10[%c0_2, %c0_3, %c0_4] : memref<1x10x128xf32, #tpu.memory_space<vmem>>, vector<1x10x128xf32>
    %5 = vector.shape_cast %4 : vector<1x10x128xf32> to vector<10x128xf32>
    %c0_5 = arith.constant 0 : index
    %c0_6 = arith.constant 0 : index
    %c0_7 = arith.constant 0 : index
    %6 = vector.load %arg6[%c0_5, %c0_6, %c0_7] : memref<1x32x96xf32, #tpu.memory_space<vmem>>, vector<1x32x96xf32>
    %7 = vector.shape_cast %6 : vector<1x32x96xf32> to vector<32x96xf32>
    %c0_8 = arith.constant 0 : index
    %c0_9 = arith.constant 0 : index
    %c0_10 = arith.constant 0 : index
    %8 = vector.load %arg7[%c0_8, %c0_9, %c0_10] : memref<1x32x32xf32, #tpu.memory_space<vmem>>, vector<1x32x32xf32>
    %9 = vector.shape_cast %8 : vector<1x32x32xf32> to vector<32x32xf32>
    %cst = arith.constant dense<0.000000e+00> : vector<16x96xf32>
    %10 = tpu.matmul %3, %7, %cst {dimension_numbers = #tpu.dot_dimension_numbers<[1], [0], [0], [1], [0, 0, 1, 1], [], []>} : vector<16x32xf32>, vector<32x96xf32>, vector<16x96xf32> -> vector<16x96xf32>
    %11 = vector.extract_strided_slice %10 {offsets = [0, 0], sizes = [16, 32], strides = [1, 1]} : vector<16x96xf32> to vector<16x32xf32>
    %12 = vector.extract_strided_slice %5 {offsets = [0, 0], sizes = [1, 32], strides = [1, 1]} : vector<10x128xf32> to vector<1x32xf32>
    %13 = vector.broadcast %12 : vector<1x32xf32> to vector<16x32xf32>
    %14 = arith.addf %11, %13 : vector<16x32xf32>
    %15 = vector.shape_cast %14 : vector<16x32xf32> to vector<2x8x32xf32>
    %16 = vector.extract_strided_slice %10 {offsets = [0, 32], sizes = [16, 32], strides = [1, 1]} : vector<16x96xf32> to vector<16x32xf32>
    %17 = vector.extract_strided_slice %5 {offsets = [1, 0], sizes = [1, 32], strides = [1, 1]} : vector<10x128xf32> to vector<1x32xf32>
    %18 = vector.broadcast %17 : vector<1x32xf32> to vector<16x32xf32>
    %19 = arith.addf %16, %18 : vector<16x32xf32>
    %20 = vector.shape_cast %19 : vector<16x32xf32> to vector<2x8x32xf32>
    %21 = vector.extract_strided_slice %10 {offsets = [0, 64], sizes = [16, 32], strides = [1, 1]} : vector<16x96xf32> to vector<16x32xf32>
    %22 = vector.extract_strided_slice %5 {offsets = [2, 0], sizes = [1, 32], strides = [1, 1]} : vector<10x128xf32> to vector<1x32xf32>
    %23 = vector.broadcast %22 : vector<1x32xf32> to vector<16x32xf32>
    %24 = arith.addf %21, %23 : vector<16x32xf32>
    %25 = vector.shape_cast %24 : vector<16x32xf32> to vector<2x8x32xf32>
    %cst_11 = arith.constant 0.000000e+00 : f32
    %26 = vector.broadcast %cst_11 : f32 to vector<16x32xf32>
    %27 = vector.extract_strided_slice %5 {offsets = [3, 0], sizes = [1, 32], strides = [1, 1]} : vector<10x128xf32> to vector<1x32xf32>
    %28 = vector.broadcast %27 : vector<1x32xf32> to vector<16x32xf32>
    %29 = arith.addf %26, %28 : vector<16x32xf32>
    %30 = vector.extract_strided_slice %15 {offsets = [0, 0, 0], sizes = [2, 8, 8], strides = [1, 1, 1]} : vector<2x8x32xf32> to vector<2x8x8xf32>
    %31 = vector.extract_strided_slice %20 {offsets = [0, 0, 0], sizes = [2, 8, 8], strides = [1, 1, 1]} : vector<2x8x32xf32> to vector<2x8x8xf32>
    "tpu.trace_start"() <{level = 10 : i32, message = "bqe,bke->bqk"}> : () -> ()
    %cst_12 = arith.constant dense<0.000000e+00> : vector<2x8x8xf32>
    %32 = tpu.matmul %30, %31, %cst_12 {dimension_numbers = #tpu.dot_dimension_numbers<[2], [2], [1], [1], [0, 0, 0, 1, 1, 1], [0], [0]>} : vector<2x8x8xf32>, vector<2x8x8xf32>, vector<2x8x8xf32> -> vector<2x8x8xf32>
    "tpu.trace_stop"() : () -> ()
    %cst_13 = arith.constant 0.353553385 : f32
    %33 = vector.broadcast %cst_13 : f32 to vector<2x8x8xf32>
    %34 = arith.mulf %32, %33 : vector<2x8x8xf32>
    %cst_14 = arith.constant dense<0xFF800000> : vector<2x8xf32>
    %35 = vector.multi_reduction <maximumf>, %34, %cst_14 [2] : vector<2x8x8xf32> to vector<2x8xf32>
    %36 = vector.shape_cast %35 : vector<2x8xf32> to vector<2x8x1xf32>
    %37 = vector.broadcast %36 : vector<2x8x1xf32> to vector<2x8x8xf32>
    %38 = arith.subf %34, %37 : vector<2x8x8xf32>
    %39 = math.exp %38 : vector<2x8x8xf32>
    %cst_15 = arith.constant dense<0.000000e+00> : vector<2x8xf32>
    %40 = vector.multi_reduction <add>, %39, %cst_15 [2] : vector<2x8x8xf32> to vector<2x8xf32>
    %41 = vector.shape_cast %40 : vector<2x8xf32> to vector<2x8x1xf32>
    %42 = tpu.reciprocal %41 {approx = true} : vector<2x8x1xf32> -> vector<2x8x1xf32>
    %43 = vector.broadcast %42 : vector<2x8x1xf32> to vector<2x8x8xf32>
    %44 = arith.mulf %39, %43 : vector<2x8x8xf32>
    %45 = vector.extract_strided_slice %25 {offsets = [0, 0, 0], sizes = [2, 8, 8], strides = [1, 1, 1]} : vector<2x8x32xf32> to vector<2x8x8xf32>
    "tpu.trace_start"() <{level = 10 : i32, message = "bqk,bke->bqe"}> : () -> ()
    %cst_16 = arith.constant dense<0.000000e+00> : vector<2x8x8xf32>
    %46 = tpu.matmul %44, %45, %cst_16 {dimension_numbers = #tpu.dot_dimension_numbers<[2], [1], [1], [2], [0, 0, 0, 1, 1, 2], [0], [0]>} : vector<2x8x8xf32>, vector<2x8x8xf32>, vector<2x8x8xf32> -> vector<2x8x8xf32>
    "tpu.trace_stop"() : () -> ()
    %47 = vector.shape_cast %46 : vector<2x8x8xf32> to vector<16x8xf32>
    %48 = vector.extract_strided_slice %9 {offsets = [0, 0], sizes = [8, 32], strides = [1, 1]} : vector<32x32xf32> to vector<8x32xf32>
    %cst_17 = arith.constant dense<0.000000e+00> : vector<16x32xf32>
    %49 = tpu.matmul %47, %48, %cst_17 {dimension_numbers = #tpu.dot_dimension_numbers<[1], [0], [0], [1], [0, 0, 1, 1], [], []>} : vector<16x8xf32>, vector<8x32xf32>, vector<16x32xf32> -> vector<16x32xf32>
    %50 = arith.addf %29, %49 : vector<16x32xf32>
    %51 = vector.extract_strided_slice %15 {offsets = [0, 0, 8], sizes = [2, 8, 8], strides = [1, 1, 1]} : vector<2x8x32xf32> to vector<2x8x8xf32>
    %52 = vector.extract_strided_slice %20 {offsets = [0, 0, 8], sizes = [2, 8, 8], strides = [1, 1, 1]} : vector<2x8x32xf32> to vector<2x8x8xf32>
    "tpu.trace_start"() <{level = 10 : i32, message = "bqe,bke->bqk"}> : () -> ()
    %cst_18 = arith.constant dense<0.000000e+00> : vector<2x8x8xf32>
    %53 = tpu.matmul %51, %52, %cst_18 {dimension_numbers = #tpu.dot_dimension_numbers<[2], [2], [1], [1], [0, 0, 0, 1, 1, 1], [0], [0]>} : vector<2x8x8xf32>, vector<2x8x8xf32>, vector<2x8x8xf32> -> vector<2x8x8xf32>
    "tpu.trace_stop"() : () -> ()
    %cst_19 = arith.constant 0.353553385 : f32
    %54 = vector.broadcast %cst_19 : f32 to vector<2x8x8xf32>
    %55 = arith.mulf %53, %54 : vector<2x8x8xf32>
    %cst_20 = arith.constant dense<0xFF800000> : vector<2x8xf32>
    %56 = vector.multi_reduction <maximumf>, %55, %cst_20 [2] : vector<2x8x8xf32> to vector<2x8xf32>
    %57 = vector.shape_cast %56 : vector<2x8xf32> to vector<2x8x1xf32>
    %58 = vector.broadcast %57 : vector<2x8x1xf32> to vector<2x8x8xf32>
    %59 = arith.subf %55, %58 : vector<2x8x8xf32>
    %60 = math.exp %59 : vector<2x8x8xf32>
    %cst_21 = arith.constant dense<0.000000e+00> : vector<2x8xf32>
    %61 = vector.multi_reduction <add>, %60, %cst_21 [2] : vector<2x8x8xf32> to vector<2x8xf32>
    %62 = vector.shape_cast %61 : vector<2x8xf32> to vector<2x8x1xf32>
    %63 = tpu.reciprocal %62 {approx = true} : vector<2x8x1xf32> -> vector<2x8x1xf32>
    %64 = vector.broadcast %63 : vector<2x8x1xf32> to vector<2x8x8xf32>
    %65 = arith.mulf %60, %64 : vector<2x8x8xf32>
    %66 = vector.extract_strided_slice %25 {offsets = [0, 0, 8], sizes = [2, 8, 8], strides = [1, 1, 1]} : vector<2x8x32xf32> to vector<2x8x8xf32>
    "tpu.trace_start"() <{level = 10 : i32, message = "bqk,bke->bqe"}> : () -> ()
    %cst_22 = arith.constant dense<0.000000e+00> : vector<2x8x8xf32>
    %67 = tpu.matmul %65, %66, %cst_22 {dimension_numbers = #tpu.dot_dimension_numbers<[2], [1], [1], [2], [0, 0, 0, 1, 1, 2], [0], [0]>} : vector<2x8x8xf32>, vector<2x8x8xf32>, vector<2x8x8xf32> -> vector<2x8x8xf32>
    "tpu.trace_stop"() : () -> ()
    %68 = vector.shape_cast %67 : vector<2x8x8xf32> to vector<16x8xf32>
    %69 = vector.extract_strided_slice %9 {offsets = [8, 0], sizes = [8, 32], strides = [1, 1]} : vector<32x32xf32> to vector<8x32xf32>
    %cst_23 = arith.constant dense<0.000000e+00> : vector<16x32xf32>
    %70 = tpu.matmul %68, %69, %cst_23 {dimension_numbers = #tpu.dot_dimension_numbers<[1], [0], [0], [1], [0, 0, 1, 1], [], []>} : vector<16x8xf32>, vector<8x32xf32>, vector<16x32xf32> -> vector<16x32xf32>
    %71 = arith.addf %50, %70 : vector<16x32xf32>
    %72 = vector.extract_strided_slice %15 {offsets = [0, 0, 16], sizes = [2, 8, 8], strides = [1, 1, 1]} : vector<2x8x32xf32> to vector<2x8x8xf32>
    %73 = vector.extract_strided_slice %20 {offsets = [0, 0, 16], sizes = [2, 8, 8], strides = [1, 1, 1]} : vector<2x8x32xf32> to vector<2x8x8xf32>
    "tpu.trace_start"() <{level = 10 : i32, message = "bqe,bke->bqk"}> : () -> ()
    %cst_24 = arith.constant dense<0.000000e+00> : vector<2x8x8xf32>
    %74 = tpu.matmul %72, %73, %cst_24 {dimension_numbers = #tpu.dot_dimension_numbers<[2], [2], [1], [1], [0, 0, 0, 1, 1, 1], [0], [0]>} : vector<2x8x8xf32>, vector<2x8x8xf32>, vector<2x8x8xf32> -> vector<2x8x8xf32>
    "tpu.trace_stop"() : () -> ()
    %cst_25 = arith.constant 0.353553385 : f32
    %75 = vector.broadcast %cst_25 : f32 to vector<2x8x8xf32>
    %76 = arith.mulf %74, %75 : vector<2x8x8xf32>
    %cst_26 = arith.constant dense<0xFF800000> : vector<2x8xf32>
    %77 = vector.multi_reduction <maximumf>, %76, %cst_26 [2] : vector<2x8x8xf32> to vector<2x8xf32>
    %78 = vector.shape_cast %77 : vector<2x8xf32> to vector<2x8x1xf32>
    %79 = vector.broadcast %78 : vector<2x8x1xf32> to vector<2x8x8xf32>
    %80 = arith.subf %76, %79 : vector<2x8x8xf32>
    %81 = math.exp %80 : vector<2x8x8xf32>
    %cst_27 = arith.constant dense<0.000000e+00> : vector<2x8xf32>
    %82 = vector.multi_reduction <add>, %81, %cst_27 [2] : vector<2x8x8xf32> to vector<2x8xf32>
    %83 = vector.shape_cast %82 : vector<2x8xf32> to vector<2x8x1xf32>
    %84 = tpu.reciprocal %83 {approx = true} : vector<2x8x1xf32> -> vector<2x8x1xf32>
    %85 = vector.broadcast %84 : vector<2x8x1xf32> to vector<2x8x8xf32>
    %86 = arith.mulf %81, %85 : vector<2x8x8xf32>
    %87 = vector.extract_strided_slice %25 {offsets = [0, 0, 16], sizes = [2, 8, 8], strides = [1, 1, 1]} : vector<2x8x32xf32> to vector<2x8x8xf32>
    "tpu.trace_start"() <{level = 10 : i32, message = "bqk,bke->bqe"}> : () -> ()
    %cst_28 = arith.constant dense<0.000000e+00> : vector<2x8x8xf32>
    %88 = tpu.matmul %86, %87, %cst_28 {dimension_numbers = #tpu.dot_dimension_numbers<[2], [1], [1], [2], [0, 0, 0, 1, 1, 2], [0], [0]>} : vector<2x8x8xf32>, vector<2x8x8xf32>, vector<2x8x8xf32> -> vector<2x8x8xf32>
    "tpu.trace_stop"() : () -> ()
    %89 = vector.shape_cast %88 : vector<2x8x8xf32> to vector<16x8xf32>
    %90 = vector.extract_strided_slice %9 {offsets = [16, 0], sizes = [8, 32], strides = [1, 1]} : vector<32x32xf32> to vector<8x32xf32>
    %cst_29 = arith.constant dense<0.000000e+00> : vector<16x32xf32>
    %91 = tpu.matmul %89, %90, %cst_29 {dimension_numbers = #tpu.dot_dimension_numbers<[1], [0], [0], [1], [0, 0, 1, 1], [], []>} : vector<16x8xf32>, vector<8x32xf32>, vector<16x32xf32> -> vector<16x32xf32>
    %92 = arith.addf %71, %91 : vector<16x32xf32>
    %93 = vector.extract_strided_slice %15 {offsets = [0, 0, 24], sizes = [2, 8, 8], strides = [1, 1, 1]} : vector<2x8x32xf32> to vector<2x8x8xf32>
    %94 = vector.extract_strided_slice %20 {offsets = [0, 0, 24], sizes = [2, 8, 8], strides = [1, 1, 1]} : vector<2x8x32xf32> to vector<2x8x8xf32>
    "tpu.trace_start"() <{level = 10 : i32, message = "bqe,bke->bqk"}> : () -> ()
    %cst_30 = arith.constant dense<0.000000e+00> : vector<2x8x8xf32>
    %95 = tpu.matmul %93, %94, %cst_30 {dimension_numbers = #tpu.dot_dimension_numbers<[2], [2], [1], [1], [0, 0, 0, 1, 1, 1], [0], [0]>} : vector<2x8x8xf32>, vector<2x8x8xf32>, vector<2x8x8xf32> -> vector<2x8x8xf32>
    "tpu.trace_stop"() : () -> ()
    %cst_31 = arith.constant 0.353553385 : f32
    %96 = vector.broadcast %cst_31 : f32 to vector<2x8x8xf32>
    %97 = arith.mulf %95, %96 : vector<2x8x8xf32>
    %cst_32 = arith.constant dense<0xFF800000> : vector<2x8xf32>
    %98 = vector.multi_reduction <maximumf>, %97, %cst_32 [2] : vector<2x8x8xf32> to vector<2x8xf32>
    %99 = vector.shape_cast %98 : vector<2x8xf32> to vector<2x8x1xf32>
    %100 = vector.broadcast %99 : vector<2x8x1xf32> to vector<2x8x8xf32>
    %101 = arith.subf %97, %100 : vector<2x8x8xf32>
    %102 = math.exp %101 : vector<2x8x8xf32>
    %cst_33 = arith.constant dense<0.000000e+00> : vector<2x8xf32>
    %103 = vector.multi_reduction <add>, %102, %cst_33 [2] : vector<2x8x8xf32> to vector<2x8xf32>
    %104 = vector.shape_cast %103 : vector<2x8xf32> to vector<2x8x1xf32>
    %105 = tpu.reciprocal %104 {approx = true} : vector<2x8x1xf32> -> vector<2x8x1xf32>
    %106 = vector.broadcast %105 : vector<2x8x1xf32> to vector<2x8x8xf32>
    %107 = arith.mulf %102, %106 : vector<2x8x8xf32>
    %108 = vector.extract_strided_slice %25 {offsets = [0, 0, 24], sizes = [2, 8, 8], strides = [1, 1, 1]} : vector<2x8x32xf32> to vector<2x8x8xf32>
    "tpu.trace_start"() <{level = 10 : i32, message = "bqk,bke->bqe"}> : () -> ()
    %cst_34 = arith.constant dense<0.000000e+00> : vector<2x8x8xf32>
    %109 = tpu.matmul %107, %108, %cst_34 {dimension_numbers = #tpu.dot_dimension_numbers<[2], [1], [1], [2], [0, 0, 0, 1, 1, 2], [0], [0]>} : vector<2x8x8xf32>, vector<2x8x8xf32>, vector<2x8x8xf32> -> vector<2x8x8xf32>
    "tpu.trace_stop"() : () -> ()
    %110 = vector.shape_cast %109 : vector<2x8x8xf32> to vector<16x8xf32>
    %111 = vector.extract_strided_slice %9 {offsets = [24, 0], sizes = [8, 32], strides = [1, 1]} : vector<32x32xf32> to vector<8x32xf32>
    %cst_35 = arith.constant dense<0.000000e+00> : vector<16x32xf32>
    %112 = tpu.matmul %110, %111, %cst_35 {dimension_numbers = #tpu.dot_dimension_numbers<[1], [0], [0], [1], [0, 0, 1, 1], [], []>} : vector<16x8xf32>, vector<8x32xf32>, vector<16x32xf32> -> vector<16x32xf32>
    %113 = arith.addf %92, %112 : vector<16x32xf32>
    %114 = arith.addf %3, %113 : vector<16x32xf32>
    %115 = vector.extract_strided_slice %5 {offsets = [6, 0], sizes = [1, 32], strides = [1, 1]} : vector<10x128xf32> to vector<1x32xf32>
    %116 = vector.extract_strided_slice %5 {offsets = [7, 0], sizes = [1, 32], strides = [1, 1]} : vector<10x128xf32> to vector<1x32xf32>
    %cst_36 = arith.constant dense<0.000000e+00> : vector<16xf32>
    %117 = vector.multi_reduction <add>, %114, %cst_36 [1] : vector<16x32xf32> to vector<16xf32>
    %118 = vector.shape_cast %117 : vector<16xf32> to vector<16x1xf32>
    %cst_37 = arith.constant 3.200000e+01 : f32
    %119 = vector.broadcast %cst_37 : f32 to vector<16x1xf32>
    %120 = arith.divf %118, %119 : vector<16x1xf32>
    %121 = vector.broadcast %120 : vector<16x1xf32> to vector<16x32xf32>
    %122 = arith.subf %114, %121 : vector<16x32xf32>
    %123 = arith.mulf %122, %122 : vector<16x32xf32>
    %cst_38 = arith.constant dense<0.000000e+00> : vector<16xf32>
    %124 = vector.multi_reduction <add>, %123, %cst_38 [1] : vector<16x32xf32> to vector<16xf32>
    %125 = vector.shape_cast %124 : vector<16xf32> to vector<16x1xf32>
    %cst_39 = arith.constant 3.200000e+01 : f32
    %126 = vector.broadcast %cst_39 : f32 to vector<16x1xf32>
    %127 = arith.divf %125, %126 : vector<16x1xf32>
    %cst_40 = arith.constant 9.99999974E-6 : f32
    %128 = vector.broadcast %cst_40 : f32 to vector<16x1xf32>
    %129 = arith.addf %127, %128 : vector<16x1xf32>
    %130 = math.rsqrt %129 : vector<16x1xf32>
    %131 = vector.broadcast %130 : vector<16x1xf32> to vector<16x32xf32>
    %132 = arith.mulf %122, %131 : vector<16x32xf32>
    %133 = vector.broadcast %115 : vector<1x32xf32> to vector<16x32xf32>
    %134 = arith.mulf %132, %133 : vector<16x32xf32>
    %135 = vector.broadcast %116 : vector<1x32xf32> to vector<16x32xf32>
    %136 = arith.addf %134, %135 : vector<16x32xf32>
    %c0_41 = arith.constant 0 : index
    %c0_42 = arith.constant 0 : index
    %c0_43 = arith.constant 0 : index
    %137 = vector.load %arg8[%c0_41, %c0_42, %c0_43] : memref<1x32x64xf32, #tpu.memory_space<vmem>>, vector<1x32x64xf32>
    %138 = vector.shape_cast %137 : vector<1x32x64xf32> to vector<32x64xf32>
    %cst_44 = arith.constant dense<0.000000e+00> : vector<16x64xf32>
    %139 = tpu.matmul %136, %138, %cst_44 {dimension_numbers = #tpu.dot_dimension_numbers<[1], [0], [0], [1], [0, 0, 1, 1], [], []>} : vector<16x32xf32>, vector<32x64xf32>, vector<16x64xf32> -> vector<16x64xf32>
    %140 = vector.extract_strided_slice %5 {offsets = [4, 0], sizes = [1, 64], strides = [1, 1]} : vector<10x128xf32> to vector<1x64xf32>
    %141 = vector.broadcast %140 : vector<1x64xf32> to vector<16x64xf32>
    %142 = arith.addf %139, %141 : vector<16x64xf32>
    %143 = arith.mulf %142, %142 : vector<16x64xf32>
    %144 = arith.mulf %142, %143 : vector<16x64xf32>
    %cst_45 = arith.constant 4.471500e-02 : f32
    %145 = vector.broadcast %cst_45 : f32 to vector<16x64xf32>
    %146 = arith.mulf %145, %144 : vector<16x64xf32>
    %147 = arith.addf %142, %146 : vector<16x64xf32>
    %cst_46 = arith.constant 0.797884583 : f32
    %148 = vector.broadcast %cst_46 : f32 to vector<16x64xf32>
    %149 = arith.mulf %148, %147 : vector<16x64xf32>
    %150 = math.tanh %149 : vector<16x64xf32>
    %cst_47 = arith.constant 1.000000e+00 : f32
    %151 = vector.broadcast %cst_47 : f32 to vector<16x64xf32>
    %152 = arith.addf %151, %150 : vector<16x64xf32>
    %cst_48 = arith.constant 5.000000e-01 : f32
    %153 = vector.broadcast %cst_48 : f32 to vector<16x64xf32>
    %154 = arith.mulf %153, %152 : vector<16x64xf32>
    %155 = arith.mulf %142, %154 : vector<16x64xf32>
    %c0_49 = arith.constant 0 : index
    %c0_50 = arith.constant 0 : index
    %c0_51 = arith.constant 0 : index
    %156 = vector.load %arg9[%c0_49, %c0_50, %c0_51] : memref<1x64x32xf32, #tpu.memory_space<vmem>>, vector<1x64x32xf32>
    %157 = vector.shape_cast %156 : vector<1x64x32xf32> to vector<64x32xf32>
    %cst_52 = arith.constant dense<0.000000e+00> : vector<16x32xf32>
    %158 = tpu.matmul %155, %157, %cst_52 {dimension_numbers = #tpu.dot_dimension_numbers<[1], [0], [0], [1], [0, 0, 1, 1], [], []>} : vector<16x64xf32>, vector<64x32xf32>, vector<16x32xf32> -> vector<16x32xf32>
    %159 = vector.extract_strided_slice %5 {offsets = [5, 0], sizes = [1, 32], strides = [1, 1]} : vector<10x128xf32> to vector<1x32xf32>
    %160 = vector.broadcast %159 : vector<1x32xf32> to vector<16x32xf32>
    %161 = arith.addf %158, %160 : vector<16x32xf32>
    %162 = arith.addf %136, %161 : vector<16x32xf32>
    %163 = vector.extract_strided_slice %5 {offsets = [8, 0], sizes = [1, 32], strides = [1, 1]} : vector<10x128xf32> to vector<1x32xf32>
    %164 = vector.extract_strided_slice %5 {offsets = [9, 0], sizes = [1, 32], strides = [1, 1]} : vector<10x128xf32> to vector<1x32xf32>
    %cst_53 = arith.constant dense<0.000000e+00> : vector<16xf32>
    %165 = vector.multi_reduction <add>, %162, %cst_53 [1] : vector<16x32xf32> to vector<16xf32>
    %166 = vector.shape_cast %165 : vector<16xf32> to vector<16x1xf32>
    %cst_54 = arith.constant 3.200000e+01 : f32
    %167 = vector.broadcast %cst_54 : f32 to vector<16x1xf32>
    %168 = arith.divf %166, %167 : vector<16x1xf32>
    %169 = vector.broadcast %168 : vector<16x1xf32> to vector<16x32xf32>
    %170 = arith.subf %162, %169 : vector<16x32xf32>
    %171 = arith.mulf %170, %170 : vector<16x32xf32>
    %cst_55 = arith.constant dense<0.000000e+00> : vector<16xf32>
    %172 = vector.multi_reduction <add>, %171, %cst_55 [1] : vector<16x32xf32> to vector<16xf32>
    %173 = vector.shape_cast %172 : vector<16xf32> to vector<16x1xf32>
    %cst_56 = arith.constant 3.200000e+01 : f32
    %174 = vector.broadcast %cst_56 : f32 to vector<16x1xf32>
    %175 = arith.divf %173, %174 : vector<16x1xf32>
    %cst_57 = arith.constant 9.99999974E-6 : f32
    %176 = vector.broadcast %cst_57 : f32 to vector<16x1xf32>
    %177 = arith.addf %175, %176 : vector<16x1xf32>
    %178 = math.rsqrt %177 : vector<16x1xf32>
    %179 = vector.broadcast %178 : vector<16x1xf32> to vector<16x32xf32>
    %180 = arith.mulf %170, %179 : vector<16x32xf32>
    %181 = vector.broadcast %163 : vector<1x32xf32> to vector<16x32xf32>
    %182 = arith.mulf %180, %181 : vector<16x32xf32>
    %183 = vector.broadcast %164 : vector<1x32xf32> to vector<16x32xf32>
    %184 = arith.addf %182, %183 : vector<16x32xf32>
    %c0_58 = arith.constant 0 : index
    %c0_59 = arith.constant 0 : index
    %185 = vector.load %arg12[%c0_58, %c0_59] : memref<16x32xf32, #tpu.memory_space<vmem>>, vector<16x32xf32>
    tpu.vector_store %arg12[%c0_58, %c0_59], %184 {strides = array<i32>} : memref<16x32xf32, #tpu.memory_space<vmem>>, vector<16x32xf32>,
    %c1_i32 = arith.constant 1 : i32
    %186 = arith.cmpi eq, %arg1, %c1_i32 : i32
    %187 = arith.extui %186 : i1 to i32
    %c0_i32_60 = arith.constant 0 : i32
    %188 = arith.cmpi ne, %187, %c0_i32_60 : i32
    scf.if %188 {
      %c0_61 = arith.constant 0 : index
      %c0_62 = arith.constant 0 : index
      %189 = vector.load %arg4[%c0_61, %c0_62] : memref<2x32xf32, #tpu.memory_space<vmem>>, vector<2x32xf32>
      %190 = vector.extract_strided_slice %189 {offsets = [0, 0], sizes = [1, 32], strides = [1, 1]} : vector<2x32xf32> to vector<1x32xf32>
      %191 = vector.extract_strided_slice %189 {offsets = [1, 0], sizes = [1, 32], strides = [1, 1]} : vector<2x32xf32> to vector<1x32xf32>
      %cst_63 = arith.constant dense<0.000000e+00> : vector<16xf32>
      %192 = vector.multi_reduction <add>, %184, %cst_63 [1] : vector<16x32xf32> to vector<16xf32>
      %193 = vector.shape_cast %192 : vector<16xf32> to vector<16x1xf32>
      %cst_64 = arith.constant 3.200000e+01 : f32
      %194 = vector.broadcast %cst_64 : f32 to vector<16x1xf32>
      %195 = arith.divf %193, %194 : vector<16x1xf32>
      %196 = vector.broadcast %195 : vector<16x1xf32> to vector<16x32xf32>
      %197 = arith.subf %184, %196 : vector<16x32xf32>
      %198 = arith.mulf %197, %197 : vector<16x32xf32>
      %cst_65 = arith.constant dense<0.000000e+00> : vector<16xf32>
      %199 = vector.multi_reduction <add>, %198, %cst_65 [1] : vector<16x32xf32> to vector<16xf32>
      %200 = vector.shape_cast %199 : vector<16xf32> to vector<16x1xf32>
      %cst_66 = arith.constant 3.200000e+01 : f32
      %201 = vector.broadcast %cst_66 : f32 to vector<16x1xf32>
      %202 = arith.divf %200, %201 : vector<16x1xf32>
      %cst_67 = arith.constant 9.99999974E-6 : f32
      %203 = vector.broadcast %cst_67 : f32 to vector<16x1xf32>
      %204 = arith.addf %202, %203 : vector<16x1xf32>
      %205 = math.rsqrt %204 : vector<16x1xf32>
      %206 = vector.broadcast %205 : vector<16x1xf32> to vector<16x32xf32>
      %207 = arith.mulf %197, %206 : vector<16x32xf32>
      %208 = vector.broadcast %190 : vector<1x32xf32> to vector<16x32xf32>
      %209 = arith.mulf %207, %208 : vector<16x32xf32>
      %210 = vector.broadcast %191 : vector<1x32xf32> to vector<16x32xf32>
      %211 = arith.addf %209, %210 : vector<16x32xf32>
      %c0_68 = arith.constant 0 : index
      %c0_69 = arith.constant 0 : index
      %212 = vector.load %arg5[%c0_68, %c0_69] : memref<33x640xf32, #tpu.memory_space<vmem>>, vector<33x640xf32>
      %213 = vector.extract_strided_slice %212 {offsets = [0, 0], sizes = [32, 640], strides = [1, 1]} : vector<33x640xf32> to vector<32x640xf32>
      %cst_70 = arith.constant dense<0.000000e+00> : vector<16x640xf32>
      %214 = tpu.matmul %211, %213, %cst_70 {dimension_numbers = #tpu.dot_dimension_numbers<[1], [0], [0], [1], [0, 0, 1, 1], [], []>} : vector<16x32xf32>, vector<32x640xf32>, vector<16x640xf32> -> vector<16x640xf32>
      %215 = vector.extract_strided_slice %212 {offsets = [32, 0], sizes = [1, 640], strides = [1, 1]} : vector<33x640xf32> to vector<1x640xf32>
      %216 = vector.broadcast %215 : vector<1x640xf32> to vector<16x640xf32>
      %217 = arith.addf %214, %216 : vector<16x640xf32>
      %218 = vector.extract_strided_slice %217 {offsets = [0, 512], sizes = [16, 4], strides = [1, 1]} : vector<16x640xf32> to vector<16x4xf32>
      %cst_71 = arith.constant dense<0xFF800000> : vector<16xf32>
      %219 = vector.multi_reduction <maximumf>, %218, %cst_71 [1] : vector<16x4xf32> to vector<16xf32>
      %220 = vector.shape_cast %219 : vector<16xf32> to vector<16x1xf32>
      %221 = vector.broadcast %220 : vector<16x1xf32> to vector<16x4xf32>
      %222 = arith.subf %218, %221 : vector<16x4xf32>
      %223 = math.exp %222 : vector<16x4xf32>
      %cst_72 = arith.constant dense<0.000000e+00> : vector<16xf32>
      %224 = vector.multi_reduction <add>, %223, %cst_72 [1] : vector<16x4xf32> to vector<16xf32>
      %225 = vector.shape_cast %224 : vector<16xf32> to vector<16x1xf32>
      %226 = tpu.reciprocal %225 {approx = true} : vector<16x1xf32> -> vector<16x1xf32>
      %227 = vector.broadcast %226 : vector<16x1xf32> to vector<16x4xf32>
      %228 = arith.mulf %223, %227 : vector<16x4xf32>
      %229 = vector.extract_strided_slice %228 {offsets = [0, 0], sizes = [16, 1], strides = [1, 1]} : vector<16x4xf32> to vector<16x1xf32>
      %230 = vector.extract_strided_slice %217 {offsets = [0, 0], sizes = [16, 128], strides = [1, 1]} : vector<16x640xf32> to vector<16x128xf32>
      %231 = vector.broadcast %229 : vector<16x1xf32> to vector<16x128xf32>
      %232 = arith.mulf %231, %230 : vector<16x128xf32>
      %233 = vector.extract_strided_slice %228 {offsets = [0, 1], sizes = [16, 1], strides = [1, 1]} : vector<16x4xf32> to vector<16x1xf32>
      %234 = vector.extract_strided_slice %217 {offsets = [0, 128], sizes = [16, 128], strides = [1, 1]} : vector<16x640xf32> to vector<16x128xf32>
      %235 = vector.broadcast %233 : vector<16x1xf32> to vector<16x128xf32>
      %236 = arith.mulf %235, %234 : vector<16x128xf32>
      %237 = arith.addf %232, %236 : vector<16x128xf32>
      %238 = vector.extract_strided_slice %228 {offsets = [0, 2], sizes = [16, 1], strides = [1, 1]} : vector<16x4xf32> to vector<16x1xf32>
      %239 = vector.extract_strided_slice %217 {offsets = [0, 256], sizes = [16, 128], strides = [1, 1]} : vector<16x640xf32> to vector<16x128xf32>
      %240 = vector.broadcast %238 : vector<16x1xf32> to vector<16x128xf32>
      %241 = arith.mulf %240, %239 : vector<16x128xf32>
      %242 = arith.addf %237, %241 : vector<16x128xf32>
      %243 = vector.extract_strided_slice %228 {offsets = [0, 3], sizes = [16, 1], strides = [1, 1]} : vector<16x4xf32> to vector<16x1xf32>
      %244 = vector.extract_strided_slice %217 {offsets = [0, 384], sizes = [16, 128], strides = [1, 1]} : vector<16x640xf32> to vector<16x128xf32>
      %245 = vector.broadcast %243 : vector<16x1xf32> to vector<16x128xf32>
      %246 = arith.mulf %245, %244 : vector<16x128xf32>
      %247 = arith.addf %242, %246 : vector<16x128xf32>
      %c0_73 = arith.constant 0 : index
      %c0_74 = arith.constant 0 : index
      %248 = vector.load %arg11[%c0_73, %c0_74] : memref<16x128xf32, #tpu.memory_space<vmem>>, vector<16x128xf32>
      tpu.vector_store %arg11[%c0_73, %c0_74], %247 {strides = array<i32>} : memref<16x128xf32, #tpu.memory_space<vmem>>, vector<16x128xf32>,
    } else {
    }
    return
  }
  func.func @transform_0(%arg0: i32, %arg1: i32) -> (i32, i32) {
    %c0_i32 = arith.constant 0 : i32
    %c0_i32_0 = arith.constant 0 : i32
    return %arg0, %c0_i32 : i32, i32
  }
  func.func @transform_1(%arg0: i32, %arg1: i32) -> (i32, i32) {
    %c0_i32 = arith.constant 0 : i32
    %c0_i32_0 = arith.constant 0 : i32
    %c0_i32_1 = arith.constant 0 : i32
    return %c0_i32, %c0_i32_0 : i32, i32
  }
  func.func @transform_2(%arg0: i32, %arg1: i32) -> (i32, i32) {
    %c0_i32 = arith.constant 0 : i32
    %c0_i32_0 = arith.constant 0 : i32
    %c0_i32_1 = arith.constant 0 : i32
    return %c0_i32, %c0_i32_0 : i32, i32
  }
  func.func @transform_3(%arg0: i32, %arg1: i32) -> (i32, i32) {
    %c0_i32 = arith.constant 0 : i32
    %c0_i32_0 = arith.constant 0 : i32
    %c0_i32_1 = arith.constant 0 : i32
    return %c0_i32, %c0_i32_0 : i32, i32
  }
  func.func @transform_4(%arg0: i32, %arg1: i32) -> (i32, i32, i32) {
    %c0_i32 = arith.constant 0 : i32
    %c0_i32_0 = arith.constant 0 : i32
    %c0_i32_1 = arith.constant 0 : i32
    return %arg1, %c0_i32, %c0_i32_0 : i32, i32, i32
  }
  func.func @transform_5(%arg0: i32, %arg1: i32) -> (i32, i32, i32) {
    %c0_i32 = arith.constant 0 : i32
    %c0_i32_0 = arith.constant 0 : i32
    %c0_i32_1 = arith.constant 0 : i32
    return %arg1, %c0_i32, %c0_i32_0 : i32, i32, i32
  }
  func.func @transform_6(%arg0: i32, %arg1: i32) -> (i32, i32, i32) {
    %c0_i32 = arith.constant 0 : i32
    %c0_i32_0 = arith.constant 0 : i32
    %c0_i32_1 = arith.constant 0 : i32
    return %arg1, %c0_i32, %c0_i32_0 : i32, i32, i32
  }
  func.func @transform_7(%arg0: i32, %arg1: i32) -> (i32, i32, i32) {
    %c0_i32 = arith.constant 0 : i32
    %c0_i32_0 = arith.constant 0 : i32
    %c0_i32_1 = arith.constant 0 : i32
    return %arg1, %c0_i32, %c0_i32_0 : i32, i32, i32
  }
  func.func @transform_8(%arg0: i32, %arg1: i32) -> (i32, i32, i32) {
    %c0_i32 = arith.constant 0 : i32
    %c0_i32_0 = arith.constant 0 : i32
    %c0_i32_1 = arith.constant 0 : i32
    return %arg1, %c0_i32, %c0_i32_0 : i32, i32, i32
  }
  func.func @transform_9(%arg0: i32, %arg1: i32) -> (i32, i32) {
    %c0_i32 = arith.constant 0 : i32
    %c0_i32_0 = arith.constant 0 : i32
    return %arg0, %c0_i32 : i32, i32
  }
}

</mosaic_0001>

<llo_original>
// kernel: tpu_custom_call.1
$region0: #{tpu_custom_call.1}
  #allocation0 [shape = 'u32[]', space=smem, size = 0x4, offset = 0x4, fixed_abs, tag = 'smem constant byte address 0x4 - core index']
  #allocation1 [shape = 'u32[144,128]{1,0:T(1,128)}', space=vmem, size = 0x12000, scoped, tag = 'internal scratch']
  #allocation2 [shape = 'f32[16,32]{1,0:T(8,128)}', space=vmem, size = 0x2000, scoped, tag = 'scratch operand']
  %s0 = inlined_call_operand.vmem [shape: f32[32,8], index: 0, kind: input, shape index: {}]
  %s1 = inlined_call_operand.vmem [shape: f32[9,32], index: 1, kind: input, shape index: {}]
  %s2 = inlined_call_operand.vmem [shape: f32[2,32], index: 2, kind: input, shape index: {}]
  %s3 = inlined_call_operand.vmem [shape: f32[33,640], index: 3, kind: input, shape index: {}]
  %s4 = inlined_call_operand.hbm [shape: f32[2,32,96], index: 4, kind: input, shape index: {}]
  %s5 = inlined_call_operand.hbm [shape: f32[2,32,32], index: 5, kind: input, shape index: {}]
  %s6 = inlined_call_operand.hbm [shape: f32[2,32,64], index: 6, kind: input, shape index: {}]
  %s7 = inlined_call_operand.vmem [shape: f32[2,64,32], index: 7, kind: input, shape index: {}]
  %s8 = inlined_call_operand.vmem [shape: f32[2,10,128], index: 8, kind: input, shape index: {}]
  %s9 = inlined_call_operand.hbm [shape: f32[32,128], index: 9, kind: output, shape index: {}]
  %s10 = sld [smem:[#allocation0]]
  $region89: #{tpu_custom_call.1} parent=0
    _
  %s12 = ssub.s32 1, %s10
  %s13 = scalar_select 0, %s12, %s10
  $region1: #{tpu_custom_call.1} parent=0
    #allocation3 [shape = 'u8[32768]{0}', space=vmem, size = 0x8000, scoped, tag = 'input window, operand 4']
    #allocation4 [shape = 's32[2]{0}', space=sflag, size = 0x8, scoped, tag = 'scoped memory for tpu_custom_call.1']
    #allocation5 [shape = 's32[2]{0}', space=sflag, size = 0x8, scoped, tag = 'scoped memory for tpu_custom_call.1']
    #allocation6 [shape = 'u8[32768]{0}', space=vmem, size = 0x8000, scoped, tag = 'input window, operand 5']
    #allocation7 [shape = 's32[2]{0}', space=sflag, size = 0x8, scoped, tag = 'scoped memory for tpu_custom_call.1']
    #allocation8 [shape = 'u8[32768]{0}', space=vmem, size = 0x8000, scoped, tag = 'input window, operand 6']
    #allocation9 [shape = 'u8[16384]{0}', space=vmem, size = 0x4000, scoped, tag = 'output window, operand 0']
    %14 = vsyncpa [#allocation4], 0
    %s15 = scalar_lea.sflag [#allocation4], 1
    %16 = vsyncpa %s15, 0
    %17 = vsyncpa [#allocation7], 0
    %s18 = scalar_lea.sflag [#allocation7], 1
    %19 = vsyncpa %s18, 0
    %20 = vsyncpa [#allocation5], 0
    %s21 = scalar_lea.sflag [#allocation5], 1
    %22 = vsyncpa %s21, 0
    loop: start=0, step=1, limit=6
    $region2: #{tpu_custom_call.1} parent=1 // loop_pre_header
      _
    $region3: #{tpu_custom_call.1} parent=1 // loop_header
      %s24 = sphi 0, %s28
      %p25 = scmp.ge.s32.totalorder %s24, 6
      %s31 = sphi 0, %s43
      %s32 = sphi 0, %s39
      %s33 = sphi 0, %s31
      %s34 = sphi 0, %s32
      %s35 = sphi 0, %s33
      %s36 = sphi 0, %s34
      %s46 = sphi 0, %s48
      %s49 = sphi 0, %s46
      %s50 = sphi 0, %s49
      %s66 = sphi 0, %s50
      %s70 = sphi 0, %s70
      %s72 = sphi 0, %s70
      %s73 = sphi 0, %s72
      %s87 = sphi 0, %s73
      %s91 = sphi 0, %s91
      %s93 = sphi 0, %s91
      %s94 = sphi 0, %s93
      %s108 = sphi 0, %s94
      %s112 = sphi 0, %s112
      %s114 = sphi 0, %s112
      %s115 = sphi 0, %s114
      %s129 = sphi 0, %s115
      %s135 = sphi 0, %s137
      %s138 = sphi 0, %s135
      %s139 = sphi 0, %s138
      %s155 = sphi 0, %s139
      %s161 = sphi 0, %s163
      %s164 = sphi 0, %s161
      %s165 = sphi 0, %s164
      %s181 = sphi 0, %s165
      %s187 = sphi 0, %s189
      %s190 = sphi 0, %s187
      %s191 = sphi 0, %s190
      %s207 = sphi 0, %s191
      %s213 = sphi 0, %s215
      %s216 = sphi 0, %s213
      %s217 = sphi 0, %s216
      %s233 = sphi 0, %s217
      %s239 = sphi 0, %s241
      %s242 = sphi 0, %s239
      %s243 = sphi 0, %s242
      %s259 = sphi 0, %s243
      %s265 = sphi 0, %s267
      %s268 = sphi 0, %s265
      %s269 = sphi 0, %s268
      %s285 = sphi 0, %s269
    $region4: #{tpu_custom_call.1} parent=1 // loop_header_branch
      %27 = sbr.rel (%p25) target = $region8
    $region5: #{tpu_custom_call.1} parent=1 // loop_body
      %s29 = ssub.s32 %s24, 1
      %s30 = ssub.s32 %s24, 2
      %s37 = sadd.s32 1, %s32
      %p38 = scmp.ge.s32.totalorder %s37, 2
      %s39 = scalar_select %p38, 0, %s37
      %s40 = sadd.s32 1, %s31
      %s41 = scalar_select %p38, %s40, %s31
      %p42 = scmp.ge.s32.totalorder %s41, 2
      %s43 = scalar_select %p42, 0, %s41
      %s44 = ssub.s32 %s31, %s43
      %p45 = scmp.eq.s32.totalorder %s44, 0
      %s47 = sadd.s32 %s46, 1
      %s48 = scalar_select %p45, %s46, %s47
      %p51 = pneg %p45
      %p52 = scmp.eq.s32.totalorder %s24, 3
      %p53 = por %p51, %p52
      %p54 = scmp.ne.s32.totalorder %s46, %s49
      %p55 = scmp.eq.s32.totalorder %s24, 0
      %p56 = por %p54, %p55
      %p57 = scmp.ne.s32.totalorder %s46, %s49
      %p58 = scmp.eq.s32.totalorder %s29, 3
      %p59 = por %p57, %p58
      %p60 = scmp.ne.s32.totalorder %s49, %s50
      %p61 = scmp.eq.s32.totalorder %s29, 0
      %p62 = por %p60, %p61
      %p63 = scmp.ne.s32.totalorder %s49, %s50
      %p64 = scmp.eq.s32.totalorder %s30, 3
      %p65 = por %p63, %p64
      %p67 = scmp.ne.s32.totalorder %s50, %s66
      %p68 = scmp.eq.s32.totalorder %s30, 0
      %p69 = por %p67, %p68
      %s71 = sadd.s32 %s70, 1
      %p74 = scmp.eq.s32.totalorder %s24, 3
      %p75 = scmp.ne.s32.totalorder %s70, %s72
      %p76 = scmp.eq.s32.totalorder %s24, 0
      %p77 = por %p75, %p76
      %p78 = scmp.ne.s32.totalorder %s70, %s72
      %p79 = scmp.eq.s32.totalorder %s29, 3
      %p80 = por %p78, %p79
      %p81 = scmp.ne.s32.totalorder %s72, %s73
      %p82 = scmp.eq.s32.totalorder %s29, 0
      %p83 = por %p81, %p82
      %p84 = scmp.ne.s32.totalorder %s72, %s73
      %p85 = scmp.eq.s32.totalorder %s30, 3
      %p86 = por %p84, %p85
      %p88 = scmp.ne.s32.totalorder %s73, %s87
      %p89 = scmp.eq.s32.totalorder %s30, 0
      %p90 = por %p88, %p89
      %s92 = sadd.s32 %s91, 1
      %p95 = scmp.eq.s32.totalorder %s24, 3
      %p96 = scmp.ne.s32.totalorder %s91, %s93
      %p97 = scmp.eq.s32.totalorder %s24, 0
      %p98 = por %p96, %p97
      %p99 = scmp.ne.s32.totalorder %s91, %s93
      %p100 = scmp.eq.s32.totalorder %s29, 3
      %p101 = por %p99, %p100
      %p102 = scmp.ne.s32.totalorder %s93, %s94
      %p103 = scmp.eq.s32.totalorder %s29, 0
      %p104 = por %p102, %p103
      %p105 = scmp.ne.s32.totalorder %s93, %s94
      %p106 = scmp.eq.s32.totalorder %s30, 3
      %p107 = por %p105, %p106
      %p109 = scmp.ne.s32.totalorder %s94, %s108
      %p110 = scmp.eq.s32.totalorder %s30, 0
      %p111 = por %p109, %p110
      %s113 = sadd.s32 %s112, 1
      %p116 = scmp.eq.s32.totalorder %s24, 3
      %p117 = scmp.ne.s32.totalorder %s112, %s114
      %p118 = scmp.eq.s32.totalorder %s24, 0
      %p119 = por %p117, %p118
      %p120 = scmp.ne.s32.totalorder %s112, %s114
      %p121 = scmp.eq.s32.totalorder %s29, 3
      %p122 = por %p120, %p121
      %p123 = scmp.ne.s32.totalorder %s114, %s115
      %p124 = scmp.eq.s32.totalorder %s29, 0
      %p125 = por %p123, %p124
      %p126 = scmp.ne.s32.totalorder %s114, %s115
      %p127 = scmp.eq.s32.totalorder %s30, 3
      %p128 = por %p126, %p127
      %p130 = scmp.ne.s32.totalorder %s115, %s129
      %p131 = scmp.eq.s32.totalorder %s30, 0
      %p132 = por %p130, %p131
      %s133 = ssub.s32 %s32, %s39
      %p134 = scmp.eq.s32.totalorder %s133, 0
      %s136 = sadd.s32 %s135, 1
      %s137 = scalar_select %p134, %s135, %s136
      %p140 = pneg %p134
      %p141 = scmp.eq.s32.totalorder %s24, 3
      %p142 = por %p140, %p141
      %p143 = scmp.ne.s32.totalorder %s135, %s138
      %p144 = scmp.eq.s32.totalorder %s24, 0
      %p145 = por %p143, %p144
      %p146 = scmp.ne.s32.totalorder %s135, %s138
      %p147 = scmp.eq.s32.totalorder %s29, 3
      %p148 = por %p146, %p147
      %p149 = scmp.ne.s32.totalorder %s138, %s139
      %p150 = scmp.eq.s32.totalorder %s29, 0
      %p151 = por %p149, %p150
      %p152 = scmp.ne.s32.totalorder %s138, %s139
      %p153 = scmp.eq.s32.totalorder %s30, 3
      %p154 = por %p152, %p153
      %p156 = scmp.ne.s32.totalorder %s139, %s155
      %p157 = scmp.eq.s32.totalorder %s30, 0
      %p158 = por %p156, %p157
      %s159 = ssub.s32 %s32, %s39
      %p160 = scmp.eq.s32.totalorder %s159, 0
      %s162 = sadd.s32 %s161, 1
      %s163 = scalar_select %p160, %s161, %s162
      %p166 = pneg %p160
      %p167 = scmp.eq.s32.totalorder %s24, 3
      %p168 = por %p166, %p167
      %p169 = scmp.ne.s32.totalorder %s161, %s164
      %p170 = scmp.eq.s32.totalorder %s24, 0
      %p171 = por %p169, %p170
      %p172 = scmp.ne.s32.totalorder %s161, %s164
      %p173 = scmp.eq.s32.totalorder %s29, 3
      %p174 = por %p172, %p173
      %p175 = scmp.ne.s32.totalorder %s164, %s165
      %p176 = scmp.eq.s32.totalorder %s29, 0
      %p177 = por %p175, %p176
      %p178 = scmp.ne.s32.totalorder %s164, %s165
      %p179 = scmp.eq.s32.totalorder %s30, 3
      %p180 = por %p178, %p179
      %p182 = scmp.ne.s32.totalorder %s165, %s181
      %p183 = scmp.eq.s32.totalorder %s30, 0
      %p184 = por %p182, %p183
      %s185 = ssub.s32 %s32, %s39
      %p186 = scmp.eq.s32.totalorder %s185, 0
      %s188 = sadd.s32 %s187, 1
      %s189 = scalar_select %p186, %s187, %s188
      %p192 = pneg %p186
      %p193 = scmp.eq.s32.totalorder %s24, 3
      %p194 = por %p192, %p193
      %p195 = scmp.ne.s32.totalorder %s187, %s190
      %p196 = scmp.eq.s32.totalorder %s24, 0
      %p197 = por %p195, %p196
      %p198 = scmp.ne.s32.totalorder %s187, %s190
      %p199 = scmp.eq.s32.totalorder %s29, 3
      %p200 = por %p198, %p199
      %p201 = scmp.ne.s32.totalorder %s190, %s191
      %p202 = scmp.eq.s32.totalorder %s29, 0
      %p203 = por %p201, %p202
      %p204 = scmp.ne.s32.totalorder %s190, %s191
      %p205 = scmp.eq.s32.totalorder %s30, 3
      %p206 = por %p204, %p205
      %p208 = scmp.ne.s32.totalorder %s191, %s207
      %p209 = scmp.eq.s32.totalorder %s30, 0
      %p210 = por %p208, %p209
      %s211 = ssub.s32 %s32, %s39
      %p212 = scmp.eq.s32.totalorder %s211, 0
      %s214 = sadd.s32 %s213, 1
      %s215 = scalar_select %p212, %s213, %s214
      %p218 = pneg %p212
      %p219 = scmp.eq.s32.totalorder %s24, 3
      %p220 = por %p218, %p219
      %p221 = scmp.ne.s32.totalorder %s213, %s216
      %p222 = scmp.eq.s32.totalorder %s24, 0
      %p223 = por %p221, %p222
      %p224 = scmp.ne.s32.totalorder %s213, %s216
      %p225 = scmp.eq.s32.totalorder %s29, 3
      %p226 = por %p224, %p225
      %p227 = scmp.ne.s32.totalorder %s216, %s217
      %p228 = scmp.eq.s32.totalorder %s29, 0
      %p229 = por %p227, %p228
      %p230 = scmp.ne.s32.totalorder %s216, %s217
      %p231 = scmp.eq.s32.totalorder %s30, 3
      %p232 = por %p230, %p231
      %p234 = scmp.ne.s32.totalorder %s217, %s233
      %p235 = scmp.eq.s32.totalorder %s30, 0
      %p236 = por %p234, %p235
      %s237 = ssub.s32 %s32, %s39
      %p238 = scmp.eq.s32.totalorder %s237, 0
      %s240 = sadd.s32 %s239, 1
      %s241 = scalar_select %p238, %s239, %s240
      %p244 = pneg %p238
      %p245 = scmp.eq.s32.totalorder %s24, 3
      %p246 = por %p244, %p245
      %p247 = scmp.ne.s32.totalorder %s239, %s242
      %p248 = scmp.eq.s32.totalorder %s24, 0
      %p249 = por %p247, %p248
      %p250 = scmp.ne.s32.totalorder %s239, %s242
      %p251 = scmp.eq.s32.totalorder %s29, 3
      %p252 = por %p250, %p251
      %p253 = scmp.ne.s32.totalorder %s242, %s243
      %p254 = scmp.eq.s32.totalorder %s29, 0
      %p255 = por %p253, %p254
      %p256 = scmp.ne.s32.totalorder %s242, %s243
      %p257 = scmp.eq.s32.totalorder %s30, 3
      %p258 = por %p256, %p257
      %p260 = scmp.ne.s32.totalorder %s243, %s259
      %p261 = scmp.eq.s32.totalorder %s30, 0
      %p262 = por %p260, %p261
      %s263 = ssub.s32 %s31, %s43
      %p264 = scmp.eq.s32.totalorder %s263, 0
      %s266 = sadd.s32 %s265, 1
      %s267 = scalar_select %p264, %s265, %s266
      %p270 = pneg %p264
      %p271 = scmp.eq.s32.totalorder %s24, 3
      %p272 = por %p270, %p271
      %p273 = scmp.ne.s32.totalorder %s265, %s268
      %p274 = scmp.eq.s32.totalorder %s24, 0
      %p275 = por %p273, %p274
      %p276 = scmp.ne.s32.totalorder %s265, %s268
      %p277 = scmp.eq.s32.totalorder %s29, 3
      %p278 = por %p276, %p277
      %p279 = scmp.ne.s32.totalorder %s268, %s269
      %p280 = scmp.eq.s32.totalorder %s29, 0
      %p281 = por %p279, %p280
      %p282 = scmp.ne.s32.totalorder %s268, %s269
      %p283 = scmp.eq.s32.totalorder %s30, 3
      %p284 = por %p282, %p283
      %p286 = scmp.ne.s32.totalorder %s269, %s285
      %p287 = scmp.eq.s32.totalorder %s30, 0
      %p288 = por %p286, %p287
      %p289 = scmp.le.s32.totalorder 1, %s24
      %p290 = scmp.lt.s32.totalorder %s24, 5
      %p291 = pnand %p289, %p290
      %p292 = pneg %p291
      // Predicated region
      $region9: #{tpu_custom_call.1} parent=5 // pred_check
        _
      $region10: #{tpu_custom_call.1} parent=5 // pred_check_branch
        %294 = sbr.rel (%p291) target = $region12
      $region11: #{tpu_custom_call.1} parent=5 // pred_region
        %s295 = ssub.s32 %s24, 1
        // Predicated region
        $region13: #{tpu_custom_call.1} parent=11 // pred_check
          %p296 = pneg %p83
        $region14: #{tpu_custom_call.1} parent=11 // pred_check_branch
          %298 = sbr.rel (%p296) target = $region16
        $region15: #{tpu_custom_call.1} parent=11 // pred_region
          _
        $region16: #{tpu_custom_call.1} parent=11 // pred_fallthru
          _
        // Predicated region
        $region17: #{tpu_custom_call.1} parent=11 // pred_check
          %p299 = pneg %p104
        $region18: #{tpu_custom_call.1} parent=11 // pred_check_branch
          %301 = sbr.rel (%p299) target = $region20
        $region19: #{tpu_custom_call.1} parent=11 // pred_region
          _
        $region20: #{tpu_custom_call.1} parent=11 // pred_fallthru
          _
        // Predicated region
        $region21: #{tpu_custom_call.1} parent=11 // pred_check
          %p302 = pneg %p125
        $region22: #{tpu_custom_call.1} parent=11 // pred_check_branch
          %304 = sbr.rel (%p302) target = $region24
        $region23: #{tpu_custom_call.1} parent=11 // pred_region
          _
        $region24: #{tpu_custom_call.1} parent=11 // pred_fallthru
          _
      $region12: #{tpu_custom_call.1} parent=5 // pred_fallthru
        _
      %p305 = scmp.lt.s32.totalorder %s24, 4
      // Predicated region
      $region25: #{tpu_custom_call.1} parent=5 // pred_check
        %p306 = pneg %p305
      $region26: #{tpu_custom_call.1} parent=5 // pred_check_branch
        %308 = sbr.rel (%p306) target = $region28
      $region27: #{tpu_custom_call.1} parent=5 // pred_region
        // Predicated region
        $region29: #{tpu_custom_call.1} parent=27 // pred_check
          %p309 = pneg %p56
        $region30: #{tpu_custom_call.1} parent=27 // pred_check_branch
          %311 = sbr.rel (%p309) target = $region32
        $region31: #{tpu_custom_call.1} parent=27 // pred_region
          %s312 = smul.u32 2, %s31
          %p313 = scmp.lt.s32.totalorder %s312, 3
          %s314 = scalar_select %p313, %s312, 3
          %s315 = smul.addr %s314, 8
          %s316 = scalar_lea.vmem %s0, %s315
          %s317 = smul.u32 2, %s31
        $region32: #{tpu_custom_call.1} parent=27 // pred_fallthru
          _
        // Predicated region
        $region33: #{tpu_custom_call.1} parent=27 // pred_check
          %p318 = pneg %p145
        $region34: #{tpu_custom_call.1} parent=27 // pred_check_branch
          %320 = sbr.rel (%p318) target = $region36
        $region35: #{tpu_custom_call.1} parent=27 // pred_region
          %s321 = sand.u32 %s135, 1
          %s322 = scalar_lea.sflag [#allocation4], %s321
          %s323 = sand.u32 %s135, 1
          %s324 = smul.addr %s323, 32
          %s325 = scalar_lea.vmem [#allocation3], %s324
          %s327 = ssub.s32 512, 512
          %328 = vsyncadd %s322, %s327
          %s329 = smul.addr %s32, 4
          %s330 = smul.addr %s329, 128
          %s331 = scalar_lea.hbm %s4, %s330
          %s332 = sshll.u32 %s325, 4
          %s333 = int_to_ptr.vmem [resolvable:$true] %s332
          %338 = dma.hbm_to_vmem [thread:$0]  %s331, 512, %s333, %s322, 128, 128, 8
        $region36: #{tpu_custom_call.1} parent=27 // pred_fallthru
          _
        // Predicated region
        $region37: #{tpu_custom_call.1} parent=27 // pred_check
          %p339 = pneg %p171
        $region38: #{tpu_custom_call.1} parent=27 // pred_check_branch
          %341 = sbr.rel (%p339) target = $region40
        $region39: #{tpu_custom_call.1} parent=27 // pred_region
          %s342 = sand.u32 %s24, 1
          %s343 = scalar_lea.sflag [#allocation7], %s342
          %s344 = sand.u32 %s161, 1
          %s345 = smul.addr %s344, 32
          %s346 = scalar_lea.vmem [#allocation6], %s345
          %s348 = ssub.s32 512, 512
          %349 = vsyncadd %s343, %s348
          %s350 = smul.addr %s32, 4
          %s351 = smul.addr %s350, 128
          %s352 = scalar_lea.hbm %s5, %s351
          %s353 = sshll.u32 %s346, 4
          %s354 = int_to_ptr.vmem [resolvable:$true] %s353
          %359 = dma.hbm_to_vmem [thread:$0]  %s352, 512, %s354, %s343, 128, 128, 8
        $region40: #{tpu_custom_call.1} parent=27 // pred_fallthru
          _
        // Predicated region
        $region41: #{tpu_custom_call.1} parent=27 // pred_check
          %p360 = pneg %p197
        $region42: #{tpu_custom_call.1} parent=27 // pred_check_branch
          %362 = sbr.rel (%p360) target = $region44
        $region43: #{tpu_custom_call.1} parent=27 // pred_region
          %s363 = sand.u32 %s24, 1
          %s364 = scalar_lea.sflag [#allocation7], %s363
          %s365 = sand.u32 %s187, 1
          %s366 = smul.addr %s365, 32
          %s367 = scalar_lea.vmem [#allocation8], %s366
          %s369 = ssub.s32 512, 512
          %370 = vsyncadd %s364, %s369
          %s371 = smul.addr %s32, 4
          %s372 = smul.addr %s371, 128
          %s373 = scalar_lea.hbm %s6, %s372
          %s374 = sshll.u32 %s367, 4
          %s375 = int_to_ptr.vmem [resolvable:$true] %s374
          %380 = dma.hbm_to_vmem [thread:$0]  %s373, 512, %s375, %s364, 128, 128, 8
        $region44: #{tpu_custom_call.1} parent=27 // pred_fallthru
          _
        // Predicated region
        $region45: #{tpu_custom_call.1} parent=27 // pred_check
          %p381 = pneg %p223
        $region46: #{tpu_custom_call.1} parent=27 // pred_check_branch
          %383 = sbr.rel (%p381) target = $region48
        $region47: #{tpu_custom_call.1} parent=27 // pred_region
          %p384 = scmp.lt.s32.totalorder %s32, 1
          %s385 = scalar_select %p384, %s32, 1
          %s386 = smul.addr %s385, 8
          %s387 = smul.addr %s386, 8
          %s388 = scalar_lea.vmem %s7, %s387
        $region48: #{tpu_custom_call.1} parent=27 // pred_fallthru
          _
        // Predicated region
        $region49: #{tpu_custom_call.1} parent=27 // pred_check
          %p389 = pneg %p249
        $region50: #{tpu_custom_call.1} parent=27 // pred_check_branch
          %391 = sbr.rel (%p389) target = $region52
        $region51: #{tpu_custom_call.1} parent=27 // pred_region
          %p392 = scmp.lt.s32.totalorder %s32, 1
          %s393 = scalar_select %p392, %s32, 1
          %s394 = smul.addr %s393, 2
          %s395 = smul.addr %s394, 8
          %s396 = scalar_lea.vmem %s8, %s395
        $region52: #{tpu_custom_call.1} parent=27 // pred_fallthru
          _
      $region28: #{tpu_custom_call.1} parent=5 // pred_fallthru
        _
      %p397 = scmp.le.s32.totalorder 1, %s24
      %p398 = scmp.lt.s32.totalorder %s24, 5
      %p399 = pnand %p397, %p398
      %p400 = pneg %p399
      // Predicated region
      $region53: #{tpu_custom_call.1} parent=5 // pred_check
        _
      $region54: #{tpu_custom_call.1} parent=5 // pred_check_branch
        %402 = sbr.rel (%p399) target = $region56
      $region55: #{tpu_custom_call.1} parent=5 // pred_region
        %s403 = ssub.s32 %s24, 1
        %s404 = sand.u32 %s138, 1
        %s405 = scalar_lea.sflag [#allocation4], %s404
        %s406 = sand.u32 %s138, 1
        %s407 = smul.addr %s406, 32
        %s408 = scalar_lea.vmem [#allocation3], %s407
        // Predicated region
        $region57: #{tpu_custom_call.1} parent=55 // pred_check
          %p409 = pneg %p151
        $region58: #{tpu_custom_call.1} parent=55 // pred_check_branch
          %411 = sbr.rel (%p409) target = $region60
        $region59: #{tpu_custom_call.1} parent=55 // pred_region
          %412 = dma.done %s405, 512
        $region60: #{tpu_custom_call.1} parent=55 // pred_fallthru
          _
        %s413 = sand.u32 %s29, 1
        %s414 = scalar_lea.sflag [#allocation7], %s413
        %s415 = sand.u32 %s164, 1
        %s416 = smul.addr %s415, 32
        %s417 = scalar_lea.vmem [#allocation6], %s416
        // Predicated region
        $region61: #{tpu_custom_call.1} parent=55 // pred_check
          %p418 = pneg %p177
        $region62: #{tpu_custom_call.1} parent=55 // pred_check_branch
          %420 = sbr.rel (%p418) target = $region64
        $region63: #{tpu_custom_call.1} parent=55 // pred_region
          %421 = dma.done %s414, 512
        $region64: #{tpu_custom_call.1} parent=55 // pred_fallthru
          _
        %s422 = sand.u32 %s29, 1
        %s423 = scalar_lea.sflag [#allocation7], %s422
        %s424 = sand.u32 %s190, 1
        %s425 = smul.addr %s424, 32
        %s426 = scalar_lea.vmem [#allocation8], %s425
        // Predicated region
        $region65: #{tpu_custom_call.1} parent=55 // pred_check
          %p427 = pneg %p203
        $region66: #{tpu_custom_call.1} parent=55 // pred_check_branch
          %429 = sbr.rel (%p427) target = $region68
        $region67: #{tpu_custom_call.1} parent=55 // pred_region
          %430 = dma.done %s423, 512
        $region68: #{tpu_custom_call.1} parent=55 // pred_fallthru
          _
        %s431 = smul.u32 2, %s33
        %p432 = scmp.lt.s32.totalorder %s431, 3
        %s433 = scalar_select %p432, %s431, 3
        %s434 = smul.addr %s433, 8
        %s435 = scalar_lea.vmem %s0, %s434
        %p436 = pneg %p62
        %p437 = pneg %p59
        %p438 = pneg %p83
        %p439 = pneg %p80
        %p440 = pneg %p104
        %p441 = pneg %p101
        %p442 = pneg %p125
        %p443 = pneg %p122
        %s444 = sand.u32 %s138, 1
        %s445 = scalar_lea.sflag [#allocation4], %s444
        %s446 = sand.u32 %s138, 1
        %s447 = smul.addr %s446, 32
        %s448 = scalar_lea.vmem [#allocation3], %s447
        %p449 = pneg %p151
        %p450 = pneg %p148
        %s451 = sand.u32 %s29, 1
        %s452 = scalar_lea.sflag [#allocation7], %s451
        %s453 = sand.u32 %s164, 1
        %s454 = smul.addr %s453, 32
        %s455 = scalar_lea.vmem [#allocation6], %s454
        %p456 = pneg %p177
        %p457 = pneg %p174
        %s458 = sand.u32 %s29, 1
        %s459 = scalar_lea.sflag [#allocation7], %s458
        %s460 = sand.u32 %s190, 1
        %s461 = smul.addr %s460, 32
        %s462 = scalar_lea.vmem [#allocation8], %s461
        %p463 = pneg %p203
        %p464 = pneg %p200
        %p465 = scmp.lt.s32.totalorder %s34, 1
        %s466 = scalar_select %p465, %s34, 1
        %s467 = smul.addr %s466, 8
        %s468 = smul.addr %s467, 8
        %s469 = scalar_lea.vmem %s7, %s468
        %p470 = pneg %p229
        %p471 = pneg %p226
        %p472 = scmp.lt.s32.totalorder %s34, 1
        %s473 = scalar_select %p472, %s34, 1
        %s474 = smul.addr %s473, 2
        %s475 = smul.addr %s474, 8
        %s476 = scalar_lea.vmem %s8, %s475
        %p477 = pneg %p255
        %p478 = pneg %p252
        %p479 = pneg %p281
        %p480 = pneg %p278
        %s481 = sand.u32 %s268, 1
        %s482 = scalar_lea.sflag [#allocation5], %s481
        %s483 = sand.u32 %s268, 1
        %s484 = smul.addr %s483, 16
        %s485 = scalar_lea.vmem [#allocation9], %s484
        %s486 = smul.u32 2, %s33
        %p487 = scmp.lt.s32.totalorder %s486, 3
        %s488 = scalar_select %p487, %s486, 3
        %s489 = smul.addr %s488, 8
        %s490 = scalar_lea.vmem %s0, %s489
        %s491 = smul.u32 2, %s33
        %p492 = scmp.lt.s32.totalorder %s34, 1
        %s493 = scalar_select %p492, %s34, 1
        %s494 = smul.addr %s493, 8
        %s495 = smul.addr %s494, 8
        %s496 = scalar_lea.vmem %s7, %s495
        %p497 = scmp.lt.s32.totalorder %s34, 1
        %s498 = scalar_select %p497, %s34, 1
        %s499 = smul.addr %s498, 2
        %s500 = smul.addr %s499, 8
        %s501 = scalar_lea.vmem %s8, %s500
        %s502 = smul.u32 2, %s33
        %p503 = scmp.eq.s32.totalorder %s34, 0
        // Predicated region
        $region69: #{tpu_custom_call.1} parent=55 // pred_check
          %p504 = pneg %p503
        $region70: #{tpu_custom_call.1} parent=55 // pred_check_branch
          %506 = sbr.rel (%p504) target = $region72
        $region71: #{tpu_custom_call.1} parent=55 // pred_region
          %v507 = vld [vmem:[%s1] sm:$0xff]
          %v508 = vld [vmem:[%s1 + $0x8] sm:$0x1]
          %v509 = vld [vmem:[%s490] sm:$0xff]
          %v510 = vld [vmem:[%s490 + $0x8] sm:$0xff]
          %v511 = vlaneseq
          %v512 = vshrl.u32 %v511, 7
          %v513 = vsub.s32 0, %v512
          %v514 = vrot.slane %v508, %v513
          %vm515 = vcmask 64512
          %v517 = vsel %vm515, %v509, 0
          %v520 = vsel %vm515, %v510, 0
          %522 = vmatprep.subr.mxu0 0.0
          %523 = vmatpush1.msra.mxu0 %v507
          %524 = vmatprep.subr.mxu0 0.0
          %525 = vmatpush1.msra.mxu0 0.0
          %526 = vmatprep.subr.mxu0 0.0
          %527 = vmatpush1.msra.mxu0 0.0
          %528 = vmatprep.subr.mxu0 0.0
          %529 = vmatpush1.msra.mxu0 0.0
          %530 = vmatprep.subr.mxu0 0.0
          %531 = vmatpush1.msra.mxu0 0.0
          %532 = vmatprep.subr.mxu0 0.0
          %533 = vmatpush1.msra.mxu0 0.0
          %534 = vmatprep.subr.mxu0 0.0
          %535 = vmatpush1.msra.mxu0 0.0
          %536 = vmatprep.subr.mxu0 0.0
          %537 = vmatpush1.msra.mxu0 0.0
          %538 = vmatprep.subr.mxu0 0.0
          %539 = vmatpush1.msra.mxu0 0.0
          %540 = vmatprep.subr.mxu0 0.0
          %541 = vmatpush1.msra.mxu0 0.0
          %542 = vmatprep.subr.mxu0 0.0
          %543 = vmatpush1.msra.mxu0 0.0
          %544 = vmatprep.subr.mxu0 0.0
          %545 = vmatpush1.msra.mxu0 0.0
          %546 = vmatprep.subr.mxu0 0.0
          %547 = vmatpush1.msra.mxu0 0.0
          %548 = vmatprep.subr.mxu0 0.0
          %549 = vmatpush1.msra.mxu0 0.0
          %550 = vmatprep.subr.mxu0 0.0
          %551 = vmatpush1.msra.mxu0 0.0
          %552 = vmatprep.subr.mxu0 0.0
          %553 = vmatpush1.msra.mxu0 0.0
          %554 = vmatprep.subr.mxu0 0.0
          %555 = vmatpush1.msra.mxu0 0.0
          %556 = vmatprep.subr.mxu0 0.0
          %557 = vmatpush1.msra.mxu0 0.0
          %558 = vmatprep.subr.mxu0 0.0
          %559 = vmatpush1.msra.mxu0 0.0
          %560 = vmatprep.subr.mxu0 0.0
          %561 = vmatpush1.msra.mxu0 0.0
          %562 = vmatprep.subr.mxu0 0.0
          %563 = vmatpush1.msra.mxu0 0.0
          %564 = vmatprep.subr.mxu0 0.0
          %565 = vmatpush1.msra.mxu0 0.0
          %566 = vmatprep.subr.mxu0 0.0
          %567 = vmatpush1.msra.mxu0 0.0
          %568 = vmatprep.subr.mxu0 0.0
          %569 = vmatpush1.msra.mxu0 0.0
          %570 = vmatprep.subr.mxu0 0.0
          %571 = vmatpush1.msra.mxu0 0.0
          %572 = vmatprep.subr.mxu0 0.0
          %573 = vmatpush1.msra.mxu0 0.0
          %574 = vmatprep.subr.mxu0 0.0
          %575 = vmatpush1.msra.mxu0 0.0
          %576 = vmatprep.subr.mxu0 0.0
          %577 = vmatpush1.msra.mxu0 0.0
          %578 = vmatprep.subr.mxu0 0.0
          %579 = vmatpush1.msra.mxu0 0.0
          %580 = vmatprep.subr.mxu0 0.0
          %581 = vmatpush1.msra.mxu0 0.0
          %582 = vmatprep.subr.mxu0 0.0
          %583 = vmatpush1.msra.mxu0 0.0
          %584 = vmatprep.subr.mxu0 0.0
          %585 = vmatpush1.msra.mxu0 0.0
          %586 = vmatprep.mubr.f32.mxu0 0.0
          %587 = vmatmul.mubr.f32.gmra.mrb[0].mxu0 %v517
          %v588 = vpop.f32.mrb[0].mxu0
          %v589 = vadd.f32 %v514, %v588
          %v590 = vpop.f32.mrb[0].mxu0
          %591 = vmatprep.mubr.f32.mxu0 0.0
          %592 = vmatmul.mubr.f32.gmra.mrb[0].mxu0 %v520
          %v593 = vpop.f32.mrb[0].mxu0
          %v594 = vadd.f32 %v514, %v593
          %v595 = vpop.f32.mrb[0].mxu0
          %596 = vdwg.mxu0
          %vm597 = vcmask 261120
          %598 = vst.msk [vmem:[#allocation2] sm:$0xff] %vm597, %v589
          %599 = vst.msk [vmem:[#allocation2 + $0x8] sm:$0xff] %vm597, %v594
        $region72: #{tpu_custom_call.1} parent=55 // pred_fallthru
          _
        %v600 = vld [vmem:[#allocation2] sm:$0xff]
        %v601 = vld [vmem:[#allocation2 + $0x8] sm:$0xff]
        %v602 = vld [vmem:[%s501] sm:$0xff]
        %v603 = vld [vmem:[%s501 + $0x8] sm:$0x3]
        %v604 = vld [vmem:[%s408] sm:$0xff]
        %v605 = vld [vmem:[%s408 + $0x8] sm:$0xff]
        %v606 = vld [vmem:[%s408 + $0x10] sm:$0xff]
        %v607 = vld [vmem:[%s408 + $0x18] sm:$0xff]
        %v608 = vld [vmem:[%s417] sm:$0xff]
        %v609 = vld [vmem:[%s417 + $0x8] sm:$0xff]
        %v610 = vld [vmem:[%s417 + $0x10] sm:$0xff]
        %v611 = vld [vmem:[%s417 + $0x18] sm:$0xff]
        %vm612 = vcmask 261120
        %v614 = vsel %vm612, %v600, 0
        %v617 = vsel %vm612, %v601, 0
        %619 = vmatprep.subr.mxu0 0.0
        %620 = vmatpush1.msra.mxu0 %v604
        %621 = vmatprep.subr.mxu0 0.0
        %622 = vmatpush1.msra.mxu0 %v605
        %623 = vmatprep.subr.mxu0 0.0
        %624 = vmatpush1.msra.mxu0 %v606
        %625 = vmatprep.subr.mxu0 0.0
        %626 = vmatpush1.msra.mxu0 %v607
        %627 = vmatprep.subr.mxu0 0.0
        %628 = vmatpush1.msra.mxu0 0.0
        %629 = vmatprep.subr.mxu0 0.0
        %630 = vmatpush1.msra.mxu0 0.0
        %631 = vmatprep.subr.mxu0 0.0
        %632 = vmatpush1.msra.mxu0 0.0
        %633 = vmatprep.subr.mxu0 0.0
        %634 = vmatpush1.msra.mxu0 0.0
        %635 = vmatprep.subr.mxu0 0.0
        %636 = vmatpush1.msra.mxu0 0.0
        %637 = vmatprep.subr.mxu0 0.0
        %638 = vmatpush1.msra.mxu0 0.0
        %639 = vmatprep.subr.mxu0 0.0
        %640 = vmatpush1.msra.mxu0 0.0
        %641 = vmatprep.subr.mxu0 0.0
        %642 = vmatpush1.msra.mxu0 0.0
        %643 = vmatprep.subr.mxu0 0.0
        %644 = vmatpush1.msra.mxu0 0.0
        %645 = vmatprep.subr.mxu0 0.0
        %646 = vmatpush1.msra.mxu0 0.0
        %647 = vmatprep.subr.mxu0 0.0
        %648 = vmatpush1.msra.mxu0 0.0
        %649 = vmatprep.subr.mxu0 0.0
        %650 = vmatpush1.msra.mxu0 0.0
        %651 = vmatprep.subr.mxu0 0.0
        %652 = vmatpush1.msra.mxu0 0.0
        %653 = vmatprep.subr.mxu0 0.0
        %654 = vmatpush1.msra.mxu0 0.0
        %655 = vmatprep.subr.mxu0 0.0
        %656 = vmatpush1.msra.mxu0 0.0
        %657 = vmatprep.subr.mxu0 0.0
        %658 = vmatpush1.msra.mxu0 0.0
        %659 = vmatprep.subr.mxu0 0.0
        %660 = vmatpush1.msra.mxu0 0.0
        %661 = vmatprep.subr.mxu0 0.0
        %662 = vmatpush1.msra.mxu0 0.0
        %663 = vmatprep.subr.mxu0 0.0
        %664 = vmatpush1.msra.mxu0 0.0
        %665 = vmatprep.subr.mxu0 0.0
        %666 = vmatpush1.msra.mxu0 0.0
        %667 = vmatprep.subr.mxu0 0.0
        %668 = vmatpush1.msra.mxu0 0.0
        %669 = vmatprep.subr.mxu0 0.0
        %670 = vmatpush1.msra.mxu0 0.0
        %671 = vmatprep.subr.mxu0 0.0
        %672 = vmatpush1.msra.mxu0 0.0
        %673 = vmatprep.subr.mxu0 0.0
        %674 = vmatpush1.msra.mxu0 0.0
        %675 = vmatprep.subr.mxu0 0.0
        %676 = vmatpush1.msra.mxu0 0.0
        %677 = vmatprep.subr.mxu0 0.0
        %678 = vmatpush1.msra.mxu0 0.0
        %679 = vmatprep.subr.mxu0 0.0
        %680 = vmatpush1.msra.mxu0 0.0
        %681 = vmatprep.subr.mxu0 0.0
        %682 = vmatpush1.msra.mxu0 0.0
        %683 = vmatprep.mubr.f32.mxu0 0.0
        %684 = vmatmul.mubr.f32.gmra.mrb[0].mxu0 %v614
        %v685 = vpop.f32.mrb[0].mxu0
        %v686 = vadd.f32 0.0, %v685
        %v687 = vpop.f32.mrb[0].mxu0
        %688 = vmatprep.mubr.f32.mxu0 0.0
        %689 = vmatmul.mubr.f32.gmra.mrb[0].mxu0 %v617
        %v690 = vpop.f32.mrb[0].mxu0
        %v691 = vadd.f32 0.0, %v690
        %v692 = vpop.f32.mrb[0].mxu0
        %693 = vdwg.mxu0
        %v694 = vlaneseq
        %v695 = vshrl.u32 %v694, 7
        %v696 = vsub.s32 0, %v695
        %v697 = vrot.slane %v602, %v696
        %v698 = vadd.f32 %v686, %v697
        %v699 = vadd.f32 %v691, %v697
        %v700 = vlaneseq
        %v701 = vshrl.u32 %v700, 7
        %v702 = vsub.s32 1, %v701
        %v703 = vrot.slane %v602, %v702
        %705 = vrot.lane.b32.xlu0 %v703, 32
        %v706 = vpop.permute.xlu0 %705
        %v708 = vadd.f32 %v686, %v706
        %v709 = vadd.f32 %v691, %v706
        %v710 = vlaneseq
        %v711 = vshrl.u32 %v710, 7
        %v712 = vsub.s32 2, %v711
        %v713 = vrot.slane %v602, %v712
        %715 = vrot.lane.b32.xlu0 %v713, 64
        %v716 = vpop.permute.xlu0 %715
        %v718 = vadd.f32 %v686, %v716
        %v719 = vadd.f32 %v691, %v716
        %v720 = vlaneseq
        %v721 = vshrl.u32 %v720, 7
        %v722 = vsub.s32 3, %v721
        %v723 = vrot.slane %v602, %v722
        %v724 = vadd.f32 %v723, 0.0
        %726 = vrot.lane.b32.xlu0 %v708, 96
        %v727 = vpop.permute.xlu0 %726
        %vm728 = vcmask 64512
        %v730 = vsel %vm728, %v698, 0
        %v732 = vsel %vm728, %v727, 0
        %734 = vmatprep.subr.mxu0 0.0
        %735 = vmatpush1.xpose.msra.mxu0 %v732
        %736 = vmatprep.subr.mxu0 0.0
        %737 = vmatpush1.xpose.msra.mxu0 0.0
        %738 = vmatprep.subr.mxu0 0.0
        %739 = vmatpush1.xpose.msra.mxu0 0.0
        %740 = vmatprep.subr.mxu0 0.0
        %741 = vmatpush1.xpose.msra.mxu0 0.0
        %742 = vmatprep.subr.mxu0 0.0
        %743 = vmatpush1.xpose.msra.mxu0 0.0
        %744 = vmatprep.subr.mxu0 0.0
        %745 = vmatpush1.xpose.msra.mxu0 0.0
        %746 = vmatprep.subr.mxu0 0.0
        %747 = vmatpush1.xpose.msra.mxu0 0.0
        %748 = vmatprep.subr.mxu0 0.0
        %749 = vmatpush1.xpose.msra.mxu0 0.0
        %750 = vmatprep.subr.mxu0 0.0
        %751 = vmatpush1.xpose.msra.mxu0 0.0
        %752 = vmatprep.subr.mxu0 0.0
        %753 = vmatpush1.xpose.msra.mxu0 0.0
        %754 = vmatprep.subr.mxu0 0.0
        %755 = vmatpush1.xpose.msra.mxu0 0.0
        %756 = vmatprep.subr.mxu0 0.0
        %757 = vmatpush1.xpose.msra.mxu0 0.0
        %758 = vmatprep.subr.mxu0 0.0
        %759 = vmatpush1.xpose.msra.mxu0 0.0
        %760 = vmatprep.subr.mxu0 0.0
        %761 = vmatpush1.xpose.msra.mxu0 0.0
        %762 = vmatprep.subr.mxu0 0.0
        %763 = vmatpush1.xpose.msra.mxu0 0.0
        %764 = vmatprep.subr.mxu0 0.0
        %765 = vmatpush1.xpose.msra.mxu0 0.0
        %766 = vmatprep.subr.mxu0 0.0
        %767 = vmatpush1.xpose.msra.mxu0 0.0
        %768 = vmatprep.subr.mxu0 0.0
        %769 = vmatpush1.xpose.msra.mxu0 0.0
        %770 = vmatprep.subr.mxu0 0.0
        %771 = vmatpush1.xpose.msra.mxu0 0.0
        %772 = vmatprep.subr.mxu0 0.0
        %773 = vmatpush1.xpose.msra.mxu0 0.0
        %774 = vmatprep.subr.mxu0 0.0
        %775 = vmatpush1.xpose.msra.mxu0 0.0
        %776 = vmatprep.subr.mxu0 0.0
        %777 = vmatpush1.xpose.msra.mxu0 0.0
        %778 = vmatprep.subr.mxu0 0.0
        %779 = vmatpush1.xpose.msra.mxu0 0.0
        %780 = vmatprep.subr.mxu0 0.0
        %781 = vmatpush1.xpose.msra.mxu0 0.0
        %782 = vmatprep.subr.mxu0 0.0
        %783 = vmatpush1.xpose.msra.mxu0 0.0
        %784 = vmatprep.subr.mxu0 0.0
        %785 = vmatpush1.xpose.msra.mxu0 0.0
        %786 = vmatprep.subr.mxu0 0.0
        %787 = vmatpush1.xpose.msra.mxu0 0.0
        %788 = vmatprep.subr.mxu0 0.0
        %789 = vmatpush1.xpose.msra.mxu0 0.0
        %790 = vmatprep.subr.mxu0 0.0
        %791 = vmatpush1.xpose.msra.mxu0 0.0
        %792 = vmatprep.subr.mxu0 0.0
        %793 = vmatpush1.xpose.msra.mxu0 0.0
        %794 = vmatprep.subr.mxu0 0.0
        %795 = vmatpush1.xpose.msra.mxu0 0.0
        %796 = vmatprep.subr.mxu0 0.0
        %797 = vmatpush1.xpose.msra.mxu0 0.0
        %798 = vmatprep.mubr.f32.mxu0 0.0
        %799 = vmatmul.mubr.f32.gmra.mrb[0].mxu0 %v730
        %v800 = vpop.f32.mrb[0].mxu0
        %v801 = vadd.f32 0.0, %v800
        %v802 = vpop.f32.mrb[0].mxu0
        %803 = vdwg.mxu0
        %805 = vrot.lane.b32.xlu0 %v709, 96
        %v806 = vpop.permute.xlu0 %805
        %v808 = vsel %vm728, %v699, 0
        %v810 = vsel %vm728, %v806, 0
        %812 = vmatprep.subr.mxu0 0.0
        %813 = vmatpush1.xpose.msra.mxu0 %v810
        %814 = vmatprep.subr.mxu0 0.0
        %815 = vmatpush1.xpose.msra.mxu0 0.0
        %816 = vmatprep.subr.mxu0 0.0
        %817 = vmatpush1.xpose.msra.mxu0 0.0
        %818 = vmatprep.subr.mxu0 0.0
        %819 = vmatpush1.xpose.msra.mxu0 0.0
        %820 = vmatprep.subr.mxu0 0.0
        %821 = vmatpush1.xpose.msra.mxu0 0.0
        %822 = vmatprep.subr.mxu0 0.0
        %823 = vmatpush1.xpose.msra.mxu0 0.0
        %824 = vmatprep.subr.mxu0 0.0
        %825 = vmatpush1.xpose.msra.mxu0 0.0
        %826 = vmatprep.subr.mxu0 0.0
        %827 = vmatpush1.xpose.msra.mxu0 0.0
        %828 = vmatprep.subr.mxu0 0.0
        %829 = vmatpush1.xpose.msra.mxu0 0.0
        %830 = vmatprep.subr.mxu0 0.0
        %831 = vmatpush1.xpose.msra.mxu0 0.0
        %832 = vmatprep.subr.mxu0 0.0
        %833 = vmatpush1.xpose.msra.mxu0 0.0
        %834 = vmatprep.subr.mxu0 0.0
        %835 = vmatpush1.xpose.msra.mxu0 0.0
        %836 = vmatprep.subr.mxu0 0.0
        %837 = vmatpush1.xpose.msra.mxu0 0.0
        %838 = vmatprep.subr.mxu0 0.0
        %839 = vmatpush1.xpose.msra.mxu0 0.0
        %840 = vmatprep.subr.mxu0 0.0
        %841 = vmatpush1.xpose.msra.mxu0 0.0
        %842 = vmatprep.subr.mxu0 0.0
        %843 = vmatpush1.xpose.msra.mxu0 0.0
        %844 = vmatprep.subr.mxu0 0.0
        %845 = vmatpush1.xpose.msra.mxu0 0.0
        %846 = vmatprep.subr.mxu0 0.0
        %847 = vmatpush1.xpose.msra.mxu0 0.0
        %848 = vmatprep.subr.mxu0 0.0
        %849 = vmatpush1.xpose.msra.mxu0 0.0
        %850 = vmatprep.subr.mxu0 0.0
        %851 = vmatpush1.xpose.msra.mxu0 0.0
        %852 = vmatprep.subr.mxu0 0.0
        %853 = vmatpush1.xpose.msra.mxu0 0.0
        %854 = vmatprep.subr.mxu0 0.0
        %855 = vmatpush1.xpose.msra.mxu0 0.0
        %856 = vmatprep.subr.mxu0 0.0
        %857 = vmatpush1.xpose.msra.mxu0 0.0
        %858 = vmatprep.subr.mxu0 0.0
        %859 = vmatpush1.xpose.msra.mxu0 0.0
        %860 = vmatprep.subr.mxu0 0.0
        %861 = vmatpush1.xpose.msra.mxu0 0.0
        %862 = vmatprep.subr.mxu0 0.0
        %863 = vmatpush1.xpose.msra.mxu0 0.0
        %864 = vmatprep.subr.mxu0 0.0
        %865 = vmatpush1.xpose.msra.mxu0 0.0
        %866 = vmatprep.subr.mxu0 0.0
        %867 = vmatpush1.xpose.msra.mxu0 0.0
        %868 = vmatprep.subr.mxu0 0.0
        %869 = vmatpush1.xpose.msra.mxu0 0.0
        %870 = vmatprep.subr.mxu0 0.0
        %871 = vmatpush1.xpose.msra.mxu0 0.0
        %872 = vmatprep.subr.mxu0 0.0
        %873 = vmatpush1.xpose.msra.mxu0 0.0
        %874 = vmatprep.subr.mxu0 0.0
        %875 = vmatpush1.xpose.msra.mxu0 0.0
        %876 = vmatprep.mubr.f32.mxu0 0.0
        %877 = vmatmul.mubr.f32.gmra.mrb[0].mxu0 %v808
        %v878 = vpop.f32.mrb[0].mxu0
        %v879 = vadd.f32 0.0, %v878
        %v880 = vpop.f32.mrb[0].mxu0
        %881 = vdwg.mxu0
        %v882 = vmul.f32 %v801, 0.35355338
        %v883 = vmul.f32 %v879, 0.35355338
        %v884 = vsel %vm728, %v882, -inf
        %885 = vmax.xlane.f32.xlu0 %v884
        %v886 = vpop.xlane.xlu0 %885
        %v887 = vsel %vm728, %v883, -inf
        %888 = vmax.xlane.f32.xlu0 %v887
        %v889 = vpop.xlane.xlu0 %888
        %v890 = vsub.f32 %v882, %v886
        %v891 = vsub.f32 %v883, %v889
        %v892 = vmul.f32 %v890, 1.442695
        %v893 = vpow.pop %v892
        %v894 = vmul.f32 %v891, 1.442695
        %v895 = vpow.pop %v894
        %v896 = vsel %vm728, %v893, 0.0
        %897 = vadd.xlane.f32.xlu0 %v896
        %v898 = vpop.xlane.xlu0 %897
        %v899 = vsel %vm728, %v895, 0.0
        %900 = vadd.xlane.f32.xlu0 %v899
        %v901 = vpop.xlane.xlu0 %900
        %v902 = vrcp.pop %v898
        %v903 = vrcp.pop %v901
        %v904 = vmul.f32 %v893, %v902
        %v905 = vmul.f32 %v895, %v903
        %907 = vrot.lane.b32.xlu0 %v718, 64
        %v908 = vpop.permute.xlu0 %907
        %v911 = vsel %vm728, %v904, 0
        %913 = vmatprep.subr.mxu0 0.0
        %914 = vmatpush1.msra.mxu0 %v908
        %915 = vmatprep.subr.mxu0 0.0
        %916 = vmatpush1.msra.mxu0 0.0
        %917 = vmatprep.subr.mxu0 0.0
        %918 = vmatpush1.msra.mxu0 0.0
        %919 = vmatprep.subr.mxu0 0.0
        %920 = vmatpush1.msra.mxu0 0.0
        %921 = vmatprep.subr.mxu0 0.0
        %922 = vmatpush1.msra.mxu0 0.0
        %923 = vmatprep.subr.mxu0 0.0
        %924 = vmatpush1.msra.mxu0 0.0
        %925 = vmatprep.subr.mxu0 0.0
        %926 = vmatpush1.msra.mxu0 0.0
        %927 = vmatprep.subr.mxu0 0.0
        %928 = vmatpush1.msra.mxu0 0.0
        %929 = vmatprep.subr.mxu0 0.0
        %930 = vmatpush1.msra.mxu0 0.0
        %931 = vmatprep.subr.mxu0 0.0
        %932 = vmatpush1.msra.mxu0 0.0
        %933 = vmatprep.subr.mxu0 0.0
        %934 = vmatpush1.msra.mxu0 0.0
        %935 = vmatprep.subr.mxu0 0.0
        %936 = vmatpush1.msra.mxu0 0.0
        %937 = vmatprep.subr.mxu0 0.0
        %938 = vmatpush1.msra.mxu0 0.0
        %939 = vmatprep.subr.mxu0 0.0
        %940 = vmatpush1.msra.mxu0 0.0
        %941 = vmatprep.subr.mxu0 0.0
        %942 = vmatpush1.msra.mxu0 0.0
        %943 = vmatprep.subr.mxu0 0.0
        %944 = vmatpush1.msra.mxu0 0.0
        %945 = vmatprep.subr.mxu0 0.0
        %946 = vmatpush1.msra.mxu0 0.0
        %947 = vmatprep.subr.mxu0 0.0
        %948 = vmatpush1.msra.mxu0 0.0
        %949 = vmatprep.subr.mxu0 0.0
        %950 = vmatpush1.msra.mxu0 0.0
        %951 = vmatprep.subr.mxu0 0.0
        %952 = vmatpush1.msra.mxu0 0.0
        %953 = vmatprep.subr.mxu0 0.0
        %954 = vmatpush1.msra.mxu0 0.0
        %955 = vmatprep.subr.mxu0 0.0
        %956 = vmatpush1.msra.mxu0 0.0
        %957 = vmatprep.subr.mxu0 0.0
        %958 = vmatpush1.msra.mxu0 0.0
        %959 = vmatprep.subr.mxu0 0.0
        %960 = vmatpush1.msra.mxu0 0.0
        %961 = vmatprep.subr.mxu0 0.0
        %962 = vmatpush1.msra.mxu0 0.0
        %963 = vmatprep.subr.mxu0 0.0
        %964 = vmatpush1.msra.mxu0 0.0
        %965 = vmatprep.subr.mxu0 0.0
        %966 = vmatpush1.msra.mxu0 0.0
        %967 = vmatprep.subr.mxu0 0.0
        %968 = vmatpush1.msra.mxu0 0.0
        %969 = vmatprep.subr.mxu0 0.0
        %970 = vmatpush1.msra.mxu0 0.0
        %971 = vmatprep.subr.mxu0 0.0
        %972 = vmatpush1.msra.mxu0 0.0
        %973 = vmatprep.subr.mxu0 0.0
        %974 = vmatpush1.msra.mxu0 0.0
        %975 = vmatprep.subr.mxu0 0.0
        %976 = vmatpush1.msra.mxu0 0.0
        %977 = vmatprep.mubr.f32.mxu0 0.0
        %978 = vmatmul.mubr.f32.gmra.mrb[0].mxu0 %v911
        %v979 = vpop.f32.mrb[0].mxu0
        %v980 = vadd.f32 0.0, %v979
        %v981 = vpop.f32.mrb[0].mxu0
        %982 = vdwg.mxu0
        %984 = vrot.lane.b32.xlu0 %v719, 64
        %v985 = vpop.permute.xlu0 %984
        %v988 = vsel %vm728, %v905, 0
        %990 = vmatprep.subr.mxu0 0.0
        %991 = vmatpush1.msra.mxu0 %v985
        %992 = vmatprep.subr.mxu0 0.0
        %993 = vmatpush1.msra.mxu0 0.0
        %994 = vmatprep.subr.mxu0 0.0
        %995 = vmatpush1.msra.mxu0 0.0
        %996 = vmatprep.subr.mxu0 0.0
        %997 = vmatpush1.msra.mxu0 0.0
        %998 = vmatprep.subr.mxu0 0.0
        %999 = vmatpush1.msra.mxu0 0.0
        %1000 = vmatprep.subr.mxu0 0.0
        %1001 = vmatpush1.msra.mxu0 0.0
        %1002 = vmatprep.subr.mxu0 0.0
        %1003 = vmatpush1.msra.mxu0 0.0
        %1004 = vmatprep.subr.mxu0 0.0
        %1005 = vmatpush1.msra.mxu0 0.0
        %1006 = vmatprep.subr.mxu0 0.0
        %1007 = vmatpush1.msra.mxu0 0.0
        %1008 = vmatprep.subr.mxu0 0.0
        %1009 = vmatpush1.msra.mxu0 0.0
        %1010 = vmatprep.subr.mxu0 0.0
        %1011 = vmatpush1.msra.mxu0 0.0
        %1012 = vmatprep.subr.mxu0 0.0
        %1013 = vmatpush1.msra.mxu0 0.0
        %1014 = vmatprep.subr.mxu0 0.0
        %1015 = vmatpush1.msra.mxu0 0.0
        %1016 = vmatprep.subr.mxu0 0.0
        %1017 = vmatpush1.msra.mxu0 0.0
        %1018 = vmatprep.subr.mxu0 0.0
        %1019 = vmatpush1.msra.mxu0 0.0
        %1020 = vmatprep.subr.mxu0 0.0
        %1021 = vmatpush1.msra.mxu0 0.0
        %1022 = vmatprep.subr.mxu0 0.0
        %1023 = vmatpush1.msra.mxu0 0.0
        %1024 = vmatprep.subr.mxu0 0.0
        %1025 = vmatpush1.msra.mxu0 0.0
        %1026 = vmatprep.subr.mxu0 0.0
        %1027 = vmatpush1.msra.mxu0 0.0
        %1028 = vmatprep.subr.mxu0 0.0
        %1029 = vmatpush1.msra.mxu0 0.0
        %1030 = vmatprep.subr.mxu0 0.0
        %1031 = vmatpush1.msra.mxu0 0.0
        %1032 = vmatprep.subr.mxu0 0.0
        %1033 = vmatpush1.msra.mxu0 0.0
        %1034 = vmatprep.subr.mxu0 0.0
        %1035 = vmatpush1.msra.mxu0 0.0
        %1036 = vmatprep.subr.mxu0 0.0
        %1037 = vmatpush1.msra.mxu0 0.0
        %1038 = vmatprep.subr.mxu0 0.0
        %1039 = vmatpush1.msra.mxu0 0.0
        %1040 = vmatprep.subr.mxu0 0.0
        %1041 = vmatpush1.msra.mxu0 0.0
        %1042 = vmatprep.subr.mxu0 0.0
        %1043 = vmatpush1.msra.mxu0 0.0
        %1044 = vmatprep.subr.mxu0 0.0
        %1045 = vmatpush1.msra.mxu0 0.0
        %1046 = vmatprep.subr.mxu0 0.0
        %1047 = vmatpush1.msra.mxu0 0.0
        %1048 = vmatprep.subr.mxu0 0.0
        %1049 = vmatpush1.msra.mxu0 0.0
        %1050 = vmatprep.subr.mxu0 0.0
        %1051 = vmatpush1.msra.mxu0 0.0
        %1052 = vmatprep.subr.mxu0 0.0
        %1053 = vmatpush1.msra.mxu0 0.0
        %1054 = vmatprep.mubr.f32.mxu0 0.0
        %1055 = vmatmul.mubr.f32.gmra.mrb[0].mxu0 %v988
        %v1056 = vpop.f32.mrb[0].mxu0
        %v1057 = vadd.f32 0.0, %v1056
        %v1058 = vpop.f32.mrb[0].mxu0
        %1059 = vdwg.mxu0
        %v1061 = vsel %vm728, %v980, 0
        %v1064 = vsel %vm728, %v1057, 0
        %1066 = vmatprep.subr.mxu0 0.0
        %1067 = vmatpush1.msra.mxu0 %v608
        %1068 = vmatprep.subr.mxu0 0.0
        %1069 = vmatpush1.msra.mxu0 0.0
        %1070 = vmatprep.subr.mxu0 0.0
        %1071 = vmatpush1.msra.mxu0 0.0
        %1072 = vmatprep.subr.mxu0 0.0
        %1073 = vmatpush1.msra.mxu0 0.0
        %1074 = vmatprep.subr.mxu0 0.0
        %1075 = vmatpush1.msra.mxu0 0.0
        %1076 = vmatprep.subr.mxu0 0.0
        %1077 = vmatpush1.msra.mxu0 0.0
        %1078 = vmatprep.subr.mxu0 0.0
        %1079 = vmatpush1.msra.mxu0 0.0
        %1080 = vmatprep.subr.mxu0 0.0
        %1081 = vmatpush1.msra.mxu0 0.0
        %1082 = vmatprep.subr.mxu0 0.0
        %1083 = vmatpush1.msra.mxu0 0.0
        %1084 = vmatprep.subr.mxu0 0.0
        %1085 = vmatpush1.msra.mxu0 0.0
        %1086 = vmatprep.subr.mxu0 0.0
        %1087 = vmatpush1.msra.mxu0 0.0
        %1088 = vmatprep.subr.mxu0 0.0
        %1089 = vmatpush1.msra.mxu0 0.0
        %1090 = vmatprep.subr.mxu0 0.0
        %1091 = vmatpush1.msra.mxu0 0.0
        %1092 = vmatprep.subr.mxu0 0.0
        %1093 = vmatpush1.msra.mxu0 0.0
        %1094 = vmatprep.subr.mxu0 0.0
        %1095 = vmatpush1.msra.mxu0 0.0
        %1096 = vmatprep.subr.mxu0 0.0
        %1097 = vmatpush1.msra.mxu0 0.0
        %1098 = vmatprep.subr.mxu0 0.0
        %1099 = vmatpush1.msra.mxu0 0.0
        %1100 = vmatprep.subr.mxu0 0.0
        %1101 = vmatpush1.msra.mxu0 0.0
        %1102 = vmatprep.subr.mxu0 0.0
        %1103 = vmatpush1.msra.mxu0 0.0
        %1104 = vmatprep.subr.mxu0 0.0
        %1105 = vmatpush1.msra.mxu0 0.0
        %1106 = vmatprep.subr.mxu0 0.0
        %1107 = vmatpush1.msra.mxu0 0.0
        %1108 = vmatprep.subr.mxu0 0.0
        %1109 = vmatpush1.msra.mxu0 0.0
        %1110 = vmatprep.subr.mxu0 0.0
        %1111 = vmatpush1.msra.mxu0 0.0
        %1112 = vmatprep.subr.mxu0 0.0
        %1113 = vmatpush1.msra.mxu0 0.0
        %1114 = vmatprep.subr.mxu0 0.0
        %1115 = vmatpush1.msra.mxu0 0.0
        %1116 = vmatprep.subr.mxu0 0.0
        %1117 = vmatpush1.msra.mxu0 0.0
        %1118 = vmatprep.subr.mxu0 0.0
        %1119 = vmatpush1.msra.mxu0 0.0
        %1120 = vmatprep.subr.mxu0 0.0
        %1121 = vmatpush1.msra.mxu0 0.0
        %1122 = vmatprep.subr.mxu0 0.0
        %1123 = vmatpush1.msra.mxu0 0.0
        %1124 = vmatprep.subr.mxu0 0.0
        %1125 = vmatpush1.msra.mxu0 0.0
        %1126 = vmatprep.subr.mxu0 0.0
        %1127 = vmatpush1.msra.mxu0 0.0
        %1128 = vmatprep.subr.mxu0 0.0
        %1129 = vmatpush1.msra.mxu0 0.0
        %1130 = vmatprep.mubr.f32.mxu0 0.0
        %1131 = vmatmul.mubr.f32.gmra.mrb[0].mxu0 %v1061
        %v1132 = vpop.f32.mrb[0].mxu0
        %v1133 = vadd.f32 0.0, %v1132
        %v1134 = vpop.f32.mrb[0].mxu0
        %1135 = vmatprep.mubr.f32.mxu0 0.0
        %1136 = vmatmul.mubr.f32.gmra.mrb[0].mxu0 %v1064
        %v1137 = vpop.f32.mrb[0].mxu0
        %v1138 = vadd.f32 0.0, %v1137
        %v1139 = vpop.f32.mrb[0].mxu0
        %1140 = vdwg.mxu0
        %v1141 = vadd.f32 %v724, %v1133
        %v1142 = vadd.f32 %v724, %v1138
        %1143 = vrot.lane.b32.xlu0 %v698, 120
        %v1144 = vpop.permute.xlu0 %1143
        %1145 = vrot.lane.b32.xlu0 %v708, 88
        %v1146 = vpop.permute.xlu0 %1145
        %v1147 = vsel %vm728, %v1144, 0
        %v1149 = vsel %vm728, %v1146, 0
        %1151 = vmatprep.subr.mxu0 0.0
        %1152 = vmatpush1.xpose.msra.mxu0 %v1149
        %1153 = vmatprep.subr.mxu0 0.0
        %1154 = vmatpush1.xpose.msra.mxu0 0.0
        %1155 = vmatprep.subr.mxu0 0.0
        %1156 = vmatpush1.xpose.msra.mxu0 0.0
        %1157 = vmatprep.subr.mxu0 0.0
        %1158 = vmatpush1.xpose.msra.mxu0 0.0
        %1159 = vmatprep.subr.mxu0 0.0
        %1160 = vmatpush1.xpose.msra.mxu0 0.0
        %1161 = vmatprep.subr.mxu0 0.0
        %1162 = vmatpush1.xpose.msra.mxu0 0.0
        %1163 = vmatprep.subr.mxu0 0.0
        %1164 = vmatpush1.xpose.msra.mxu0 0.0
        %1165 = vmatprep.subr.mxu0 0.0
        %1166 = vmatpush1.xpose.msra.mxu0 0.0
        %1167 = vmatprep.subr.mxu0 0.0
        %1168 = vmatpush1.xpose.msra.mxu0 0.0
        %1169 = vmatprep.subr.mxu0 0.0
        %1170 = vmatpush1.xpose.msra.mxu0 0.0
        %1171 = vmatprep.subr.mxu0 0.0
        %1172 = vmatpush1.xpose.msra.mxu0 0.0
        %1173 = vmatprep.subr.mxu0 0.0
        %1174 = vmatpush1.xpose.msra.mxu0 0.0
        %1175 = vmatprep.subr.mxu0 0.0
        %1176 = vmatpush1.xpose.msra.mxu0 0.0
        %1177 = vmatprep.subr.mxu0 0.0
        %1178 = vmatpush1.xpose.msra.mxu0 0.0
        %1179 = vmatprep.subr.mxu0 0.0
        %1180 = vmatpush1.xpose.msra.mxu0 0.0
        %1181 = vmatprep.subr.mxu0 0.0
        %1182 = vmatpush1.xpose.msra.mxu0 0.0
        %1183 = vmatprep.subr.mxu0 0.0
        %1184 = vmatpush1.xpose.msra.mxu0 0.0
        %1185 = vmatprep.subr.mxu0 0.0
        %1186 = vmatpush1.xpose.msra.mxu0 0.0
        %1187 = vmatprep.subr.mxu0 0.0
        %1188 = vmatpush1.xpose.msra.mxu0 0.0
        %1189 = vmatprep.subr.mxu0 0.0
        %1190 = vmatpush1.xpose.msra.mxu0 0.0
        %1191 = vmatprep.subr.mxu0 0.0
        %1192 = vmatpush1.xpose.msra.mxu0 0.0
        %1193 = vmatprep.subr.mxu0 0.0
        %1194 = vmatpush1.xpose.msra.mxu0 0.0
        %1195 = vmatprep.subr.mxu0 0.0
        %1196 = vmatpush1.xpose.msra.mxu0 0.0
        %1197 = vmatprep.subr.mxu0 0.0
        %1198 = vmatpush1.xpose.msra.mxu0 0.0
        %1199 = vmatprep.subr.mxu0 0.0
        %1200 = vmatpush1.xpose.msra.mxu0 0.0
        %1201 = vmatprep.subr.mxu0 0.0
        %1202 = vmatpush1.xpose.msra.mxu0 0.0
        %1203 = vmatprep.subr.mxu0 0.0
        %1204 = vmatpush1.xpose.msra.mxu0 0.0
        %1205 = vmatprep.subr.mxu0 0.0
        %1206 = vmatpush1.xpose.msra.mxu0 0.0
        %1207 = vmatprep.subr.mxu0 0.0
        %1208 = vmatpush1.xpose.msra.mxu0 0.0
        %1209 = vmatprep.subr.mxu0 0.0
        %1210 = vmatpush1.xpose.msra.mxu0 0.0
        %1211 = vmatprep.subr.mxu0 0.0
        %1212 = vmatpush1.xpose.msra.mxu0 0.0
        %1213 = vmatprep.subr.mxu0 0.0
        %1214 = vmatpush1.xpose.msra.mxu0 0.0
        %1215 = vmatprep.mubr.f32.mxu0 0.0
        %1216 = vmatmul.mubr.f32.gmra.mrb[0].mxu0 %v1147
        %v1217 = vpop.f32.mrb[0].mxu0
        %v1218 = vadd.f32 0.0, %v1217
        %v1219 = vpop.f32.mrb[0].mxu0
        %1220 = vdwg.mxu0
        %1221 = vrot.lane.b32.xlu0 %v699, 120
        %v1222 = vpop.permute.xlu0 %1221
        %1223 = vrot.lane.b32.xlu0 %v709, 88
        %v1224 = vpop.permute.xlu0 %1223
        %v1225 = vsel %vm728, %v1222, 0
        %v1227 = vsel %vm728, %v1224, 0
        %1229 = vmatprep.subr.mxu0 0.0
        %1230 = vmatpush1.xpose.msra.mxu0 %v1227
        %1231 = vmatprep.subr.mxu0 0.0
        %1232 = vmatpush1.xpose.msra.mxu0 0.0
        %1233 = vmatprep.subr.mxu0 0.0
        %1234 = vmatpush1.xpose.msra.mxu0 0.0
        %1235 = vmatprep.subr.mxu0 0.0
        %1236 = vmatpush1.xpose.msra.mxu0 0.0
        %1237 = vmatprep.subr.mxu0 0.0
        %1238 = vmatpush1.xpose.msra.mxu0 0.0
        %1239 = vmatprep.subr.mxu0 0.0
        %1240 = vmatpush1.xpose.msra.mxu0 0.0
        %1241 = vmatprep.subr.mxu0 0.0
        %1242 = vmatpush1.xpose.msra.mxu0 0.0
        %1243 = vmatprep.subr.mxu0 0.0
        %1244 = vmatpush1.xpose.msra.mxu0 0.0
        %1245 = vmatprep.subr.mxu0 0.0
        %1246 = vmatpush1.xpose.msra.mxu0 0.0
        %1247 = vmatprep.subr.mxu0 0.0
        %1248 = vmatpush1.xpose.msra.mxu0 0.0
        %1249 = vmatprep.subr.mxu0 0.0
        %1250 = vmatpush1.xpose.msra.mxu0 0.0
        %1251 = vmatprep.subr.mxu0 0.0
        %1252 = vmatpush1.xpose.msra.mxu0 0.0
        %1253 = vmatprep.subr.mxu0 0.0
        %1254 = vmatpush1.xpose.msra.mxu0 0.0
        %1255 = vmatprep.subr.mxu0 0.0
        %1256 = vmatpush1.xpose.msra.mxu0 0.0
        %1257 = vmatprep.subr.mxu0 0.0
        %1258 = vmatpush1.xpose.msra.mxu0 0.0
        %1259 = vmatprep.subr.mxu0 0.0
        %1260 = vmatpush1.xpose.msra.mxu0 0.0
        %1261 = vmatprep.subr.mxu0 0.0
        %1262 = vmatpush1.xpose.msra.mxu0 0.0
        %1263 = vmatprep.subr.mxu0 0.0
        %1264 = vmatpush1.xpose.msra.mxu0 0.0
        %1265 = vmatprep.subr.mxu0 0.0
        %1266 = vmatpush1.xpose.msra.mxu0 0.0
        %1267 = vmatprep.subr.mxu0 0.0
        %1268 = vmatpush1.xpose.msra.mxu0 0.0
        %1269 = vmatprep.subr.mxu0 0.0
        %1270 = vmatpush1.xpose.msra.mxu0 0.0
        %1271 = vmatprep.subr.mxu0 0.0
        %1272 = vmatpush1.xpose.msra.mxu0 0.0
        %1273 = vmatprep.subr.mxu0 0.0
        %1274 = vmatpush1.xpose.msra.mxu0 0.0
        %1275 = vmatprep.subr.mxu0 0.0
        %1276 = vmatpush1.xpose.msra.mxu0 0.0
        %1277 = vmatprep.subr.mxu0 0.0
        %1278 = vmatpush1.xpose.msra.mxu0 0.0
        %1279 = vmatprep.subr.mxu0 0.0
        %1280 = vmatpush1.xpose.msra.mxu0 0.0
        %1281 = vmatprep.subr.mxu0 0.0
        %1282 = vmatpush1.xpose.msra.mxu0 0.0
        %1283 = vmatprep.subr.mxu0 0.0
        %1284 = vmatpush1.xpose.msra.mxu0 0.0
        %1285 = vmatprep.subr.mxu0 0.0
        %1286 = vmatpush1.xpose.msra.mxu0 0.0
        %1287 = vmatprep.subr.mxu0 0.0
        %1288 = vmatpush1.xpose.msra.mxu0 0.0
        %1289 = vmatprep.subr.mxu0 0.0
        %1290 = vmatpush1.xpose.msra.mxu0 0.0
        %1291 = vmatprep.subr.mxu0 0.0
        %1292 = vmatpush1.xpose.msra.mxu0 0.0
        %1293 = vmatprep.mubr.f32.mxu0 0.0
        %1294 = vmatmul.mubr.f32.gmra.mrb[0].mxu0 %v1225
        %v1295 = vpop.f32.mrb[0].mxu0
        %v1296 = vadd.f32 0.0, %v1295
        %v1297 = vpop.f32.mrb[0].mxu0
        %1298 = vdwg.mxu0
        %v1299 = vmul.f32 %v1218, 0.35355338
        %v1300 = vmul.f32 %v1296, 0.35355338
        %v1301 = vsel %vm728, %v1299, -inf
        %1302 = vmax.xlane.f32.xlu0 %v1301
        %v1303 = vpop.xlane.xlu0 %1302
        %v1304 = vsel %vm728, %v1300, -inf
        %1305 = vmax.xlane.f32.xlu0 %v1304
        %v1306 = vpop.xlane.xlu0 %1305
        %v1307 = vsub.f32 %v1299, %v1303
        %v1308 = vsub.f32 %v1300, %v1306
        %v1309 = vmul.f32 %v1307, 1.442695
        %v1310 = vpow.pop %v1309
        %v1311 = vmul.f32 %v1308, 1.442695
        %v1312 = vpow.pop %v1311
        %v1313 = vsel %vm728, %v1310, 0.0
        %1314 = vadd.xlane.f32.xlu0 %v1313
        %v1315 = vpop.xlane.xlu0 %1314
        %v1316 = vsel %vm728, %v1312, 0.0
        %1317 = vadd.xlane.f32.xlu0 %v1316
        %v1318 = vpop.xlane.xlu0 %1317
        %v1319 = vrcp.pop %v1315
        %v1320 = vrcp.pop %v1318
        %v1321 = vmul.f32 %v1310, %v1319
        %v1322 = vmul.f32 %v1312, %v1320
        %1323 = vrot.lane.b32.xlu0 %v718, 56
        %v1324 = vpop.permute.xlu0 %1323
        %v1327 = vsel %vm728, %v1321, 0
        %1329 = vmatprep.subr.mxu0 0.0
        %1330 = vmatpush1.msra.mxu0 %v1324
        %1331 = vmatprep.subr.mxu0 0.0
        %1332 = vmatpush1.msra.mxu0 0.0
        %1333 = vmatprep.subr.mxu0 0.0
        %1334 = vmatpush1.msra.mxu0 0.0
        %1335 = vmatprep.subr.mxu0 0.0
        %1336 = vmatpush1.msra.mxu0 0.0
        %1337 = vmatprep.subr.mxu0 0.0
        %1338 = vmatpush1.msra.mxu0 0.0
        %1339 = vmatprep.subr.mxu0 0.0
        %1340 = vmatpush1.msra.mxu0 0.0
        %1341 = vmatprep.subr.mxu0 0.0
        %1342 = vmatpush1.msra.mxu0 0.0
        %1343 = vmatprep.subr.mxu0 0.0
        %1344 = vmatpush1.msra.mxu0 0.0
        %1345 = vmatprep.subr.mxu0 0.0
        %1346 = vmatpush1.msra.mxu0 0.0
        %1347 = vmatprep.subr.mxu0 0.0
        %1348 = vmatpush1.msra.mxu0 0.0
        %1349 = vmatprep.subr.mxu0 0.0
        %1350 = vmatpush1.msra.mxu0 0.0
        %1351 = vmatprep.subr.mxu0 0.0
        %1352 = vmatpush1.msra.mxu0 0.0
        %1353 = vmatprep.subr.mxu0 0.0
        %1354 = vmatpush1.msra.mxu0 0.0
        %1355 = vmatprep.subr.mxu0 0.0
        %1356 = vmatpush1.msra.mxu0 0.0
        %1357 = vmatprep.subr.mxu0 0.0
        %1358 = vmatpush1.msra.mxu0 0.0
        %1359 = vmatprep.subr.mxu0 0.0
        %1360 = vmatpush1.msra.mxu0 0.0
        %1361 = vmatprep.subr.mxu0 0.0
        %1362 = vmatpush1.msra.mxu0 0.0
        %1363 = vmatprep.subr.mxu0 0.0
        %1364 = vmatpush1.msra.mxu0 0.0
        %1365 = vmatprep.subr.mxu0 0.0
        %1366 = vmatpush1.msra.mxu0 0.0
        %1367 = vmatprep.subr.mxu0 0.0
        %1368 = vmatpush1.msra.mxu0 0.0
        %1369 = vmatprep.subr.mxu0 0.0
        %1370 = vmatpush1.msra.mxu0 0.0
        %1371 = vmatprep.subr.mxu0 0.0
        %1372 = vmatpush1.msra.mxu0 0.0
        %1373 = vmatprep.subr.mxu0 0.0
        %1374 = vmatpush1.msra.mxu0 0.0
        %1375 = vmatprep.subr.mxu0 0.0
        %1376 = vmatpush1.msra.mxu0 0.0
        %1377 = vmatprep.subr.mxu0 0.0
        %1378 = vmatpush1.msra.mxu0 0.0
        %1379 = vmatprep.subr.mxu0 0.0
        %1380 = vmatpush1.msra.mxu0 0.0
        %1381 = vmatprep.subr.mxu0 0.0
        %1382 = vmatpush1.msra.mxu0 0.0
        %1383 = vmatprep.subr.mxu0 0.0
        %1384 = vmatpush1.msra.mxu0 0.0
        %1385 = vmatprep.subr.mxu0 0.0
        %1386 = vmatpush1.msra.mxu0 0.0
        %1387 = vmatprep.subr.mxu0 0.0
        %1388 = vmatpush1.msra.mxu0 0.0
        %1389 = vmatprep.subr.mxu0 0.0
        %1390 = vmatpush1.msra.mxu0 0.0
        %1391 = vmatprep.subr.mxu0 0.0
        %1392 = vmatpush1.msra.mxu0 0.0
        %1393 = vmatprep.mubr.f32.mxu0 0.0
        %1394 = vmatmul.mubr.f32.gmra.mrb[0].mxu0 %v1327
        %v1395 = vpop.f32.mrb[0].mxu0
        %v1396 = vadd.f32 0.0, %v1395
        %v1397 = vpop.f32.mrb[0].mxu0
        %1398 = vdwg.mxu0
        %1399 = vrot.lane.b32.xlu0 %v719, 56
        %v1400 = vpop.permute.xlu0 %1399
        %v1403 = vsel %vm728, %v1322, 0
        %1405 = vmatprep.subr.mxu0 0.0
        %1406 = vmatpush1.msra.mxu0 %v1400
        %1407 = vmatprep.subr.mxu0 0.0
        %1408 = vmatpush1.msra.mxu0 0.0
        %1409 = vmatprep.subr.mxu0 0.0
        %1410 = vmatpush1.msra.mxu0 0.0
        %1411 = vmatprep.subr.mxu0 0.0
        %1412 = vmatpush1.msra.mxu0 0.0
        %1413 = vmatprep.subr.mxu0 0.0
        %1414 = vmatpush1.msra.mxu0 0.0
        %1415 = vmatprep.subr.mxu0 0.0
        %1416 = vmatpush1.msra.mxu0 0.0
        %1417 = vmatprep.subr.mxu0 0.0
        %1418 = vmatpush1.msra.mxu0 0.0
        %1419 = vmatprep.subr.mxu0 0.0
        %1420 = vmatpush1.msra.mxu0 0.0
        %1421 = vmatprep.subr.mxu0 0.0
        %1422 = vmatpush1.msra.mxu0 0.0
        %1423 = vmatprep.subr.mxu0 0.0
        %1424 = vmatpush1.msra.mxu0 0.0
        %1425 = vmatprep.subr.mxu0 0.0
        %1426 = vmatpush1.msra.mxu0 0.0
        %1427 = vmatprep.subr.mxu0 0.0
        %1428 = vmatpush1.msra.mxu0 0.0
        %1429 = vmatprep.subr.mxu0 0.0
        %1430 = vmatpush1.msra.mxu0 0.0
        %1431 = vmatprep.subr.mxu0 0.0
        %1432 = vmatpush1.msra.mxu0 0.0
        %1433 = vmatprep.subr.mxu0 0.0
        %1434 = vmatpush1.msra.mxu0 0.0
        %1435 = vmatprep.subr.mxu0 0.0
        %1436 = vmatpush1.msra.mxu0 0.0
        %1437 = vmatprep.subr.mxu0 0.0
        %1438 = vmatpush1.msra.mxu0 0.0
        %1439 = vmatprep.subr.mxu0 0.0
        %1440 = vmatpush1.msra.mxu0 0.0
        %1441 = vmatprep.subr.mxu0 0.0
        %1442 = vmatpush1.msra.mxu0 0.0
        %1443 = vmatprep.subr.mxu0 0.0
        %1444 = vmatpush1.msra.mxu0 0.0
        %1445 = vmatprep.subr.mxu0 0.0
        %1446 = vmatpush1.msra.mxu0 0.0
        %1447 = vmatprep.subr.mxu0 0.0
        %1448 = vmatpush1.msra.mxu0 0.0
        %1449 = vmatprep.subr.mxu0 0.0
        %1450 = vmatpush1.msra.mxu0 0.0
        %1451 = vmatprep.subr.mxu0 0.0
        %1452 = vmatpush1.msra.mxu0 0.0
        %1453 = vmatprep.subr.mxu0 0.0
        %1454 = vmatpush1.msra.mxu0 0.0
        %1455 = vmatprep.subr.mxu0 0.0
        %1456 = vmatpush1.msra.mxu0 0.0
        %1457 = vmatprep.subr.mxu0 0.0
        %1458 = vmatpush1.msra.mxu0 0.0
        %1459 = vmatprep.subr.mxu0 0.0
        %1460 = vmatpush1.msra.mxu0 0.0
        %1461 = vmatprep.subr.mxu0 0.0
        %1462 = vmatpush1.msra.mxu0 0.0
        %1463 = vmatprep.subr.mxu0 0.0
        %1464 = vmatpush1.msra.mxu0 0.0
        %1465 = vmatprep.subr.mxu0 0.0
        %1466 = vmatpush1.msra.mxu0 0.0
        %1467 = vmatprep.subr.mxu0 0.0
        %1468 = vmatpush1.msra.mxu0 0.0
        %1469 = vmatprep.mubr.f32.mxu0 0.0
        %1470 = vmatmul.mubr.f32.gmra.mrb[0].mxu0 %v1403
        %v1471 = vpop.f32.mrb[0].mxu0
        %v1472 = vadd.f32 0.0, %v1471
        %v1473 = vpop.f32.mrb[0].mxu0
        %1474 = vdwg.mxu0
        %v1476 = vsel %vm728, %v1396, 0
        %v1479 = vsel %vm728, %v1472, 0
        %1481 = vmatprep.subr.mxu0 0.0
        %1482 = vmatpush1.msra.mxu0 %v609
        %1483 = vmatprep.subr.mxu0 0.0
        %1484 = vmatpush1.msra.mxu0 0.0
        %1485 = vmatprep.subr.mxu0 0.0
        %1486 = vmatpush1.msra.mxu0 0.0
        %1487 = vmatprep.subr.mxu0 0.0
        %1488 = vmatpush1.msra.mxu0 0.0
        %1489 = vmatprep.subr.mxu0 0.0
        %1490 = vmatpush1.msra.mxu0 0.0
        %1491 = vmatprep.subr.mxu0 0.0
        %1492 = vmatpush1.msra.mxu0 0.0
        %1493 = vmatprep.subr.mxu0 0.0
        %1494 = vmatpush1.msra.mxu0 0.0
        %1495 = vmatprep.subr.mxu0 0.0
        %1496 = vmatpush1.msra.mxu0 0.0
        %1497 = vmatprep.subr.mxu0 0.0
        %1498 = vmatpush1.msra.mxu0 0.0
        %1499 = vmatprep.subr.mxu0 0.0
        %1500 = vmatpush1.msra.mxu0 0.0
        %1501 = vmatprep.subr.mxu0 0.0
        %1502 = vmatpush1.msra.mxu0 0.0
        %1503 = vmatprep.subr.mxu0 0.0
        %1504 = vmatpush1.msra.mxu0 0.0
        %1505 = vmatprep.subr.mxu0 0.0
        %1506 = vmatpush1.msra.mxu0 0.0
        %1507 = vmatprep.subr.mxu0 0.0
        %1508 = vmatpush1.msra.mxu0 0.0
        %1509 = vmatprep.subr.mxu0 0.0
        %1510 = vmatpush1.msra.mxu0 0.0
        %1511 = vmatprep.subr.mxu0 0.0
        %1512 = vmatpush1.msra.mxu0 0.0
        %1513 = vmatprep.subr.mxu0 0.0
        %1514 = vmatpush1.msra.mxu0 0.0
        %1515 = vmatprep.subr.mxu0 0.0
        %1516 = vmatpush1.msra.mxu0 0.0
        %1517 = vmatprep.subr.mxu0 0.0
        %1518 = vmatpush1.msra.mxu0 0.0
        %1519 = vmatprep.subr.mxu0 0.0
        %1520 = vmatpush1.msra.mxu0 0.0
        %1521 = vmatprep.subr.mxu0 0.0
        %1522 = vmatpush1.msra.mxu0 0.0
        %1523 = vmatprep.subr.mxu0 0.0
        %1524 = vmatpush1.msra.mxu0 0.0
        %1525 = vmatprep.subr.mxu0 0.0
        %1526 = vmatpush1.msra.mxu0 0.0
        %1527 = vmatprep.subr.mxu0 0.0
        %1528 = vmatpush1.msra.mxu0 0.0
        %1529 = vmatprep.subr.mxu0 0.0
        %1530 = vmatpush1.msra.mxu0 0.0
        %1531 = vmatprep.subr.mxu0 0.0
        %1532 = vmatpush1.msra.mxu0 0.0
        %1533 = vmatprep.subr.mxu0 0.0
        %1534 = vmatpush1.msra.mxu0 0.0
        %1535 = vmatprep.subr.mxu0 0.0
        %1536 = vmatpush1.msra.mxu0 0.0
        %1537 = vmatprep.subr.mxu0 0.0
        %1538 = vmatpush1.msra.mxu0 0.0
        %1539 = vmatprep.subr.mxu0 0.0
        %1540 = vmatpush1.msra.mxu0 0.0
        %1541 = vmatprep.subr.mxu0 0.0
        %1542 = vmatpush1.msra.mxu0 0.0
        %1543 = vmatprep.subr.mxu0 0.0
        %1544 = vmatpush1.msra.mxu0 0.0
        %1545 = vmatprep.mubr.f32.mxu0 0.0
        %1546 = vmatmul.mubr.f32.gmra.mrb[0].mxu0 %v1476
        %v1547 = vpop.f32.mrb[0].mxu0
        %v1548 = vadd.f32 0.0, %v1547
        %v1549 = vpop.f32.mrb[0].mxu0
        %1550 = vmatprep.mubr.f32.mxu0 0.0
        %1551 = vmatmul.mubr.f32.gmra.mrb[0].mxu0 %v1479
        %v1552 = vpop.f32.mrb[0].mxu0
        %v1553 = vadd.f32 0.0, %v1552
        %v1554 = vpop.f32.mrb[0].mxu0
        %1555 = vdwg.mxu0
        %v1556 = vadd.f32 %v1141, %v1548
        %v1557 = vadd.f32 %v1142, %v1553
        %1558 = vrot.lane.b32.xlu0 %v698, 112
        %v1559 = vpop.permute.xlu0 %1558
        %1560 = vrot.lane.b32.xlu0 %v708, 80
        %v1561 = vpop.permute.xlu0 %1560
        %v1562 = vsel %vm728, %v1559, 0
        %v1564 = vsel %vm728, %v1561, 0
        %1566 = vmatprep.subr.mxu0 0.0
        %1567 = vmatpush1.xpose.msra.mxu0 %v1564
        %1568 = vmatprep.subr.mxu0 0.0
        %1569 = vmatpush1.xpose.msra.mxu0 0.0
        %1570 = vmatprep.subr.mxu0 0.0
        %1571 = vmatpush1.xpose.msra.mxu0 0.0
        %1572 = vmatprep.subr.mxu0 0.0
        %1573 = vmatpush1.xpose.msra.mxu0 0.0
        %1574 = vmatprep.subr.mxu0 0.0
        %1575 = vmatpush1.xpose.msra.mxu0 0.0
        %1576 = vmatprep.subr.mxu0 0.0
        %1577 = vmatpush1.xpose.msra.mxu0 0.0
        %1578 = vmatprep.subr.mxu0 0.0
        %1579 = vmatpush1.xpose.msra.mxu0 0.0
        %1580 = vmatprep.subr.mxu0 0.0
        %1581 = vmatpush1.xpose.msra.mxu0 0.0
        %1582 = vmatprep.subr.mxu0 0.0
        %1583 = vmatpush1.xpose.msra.mxu0 0.0
        %1584 = vmatprep.subr.mxu0 0.0
        %1585 = vmatpush1.xpose.msra.mxu0 0.0
        %1586 = vmatprep.subr.mxu0 0.0
        %1587 = vmatpush1.xpose.msra.mxu0 0.0
        %1588 = vmatprep.subr.mxu0 0.0
        %1589 = vmatpush1.xpose.msra.mxu0 0.0
        %1590 = vmatprep.subr.mxu0 0.0
        %1591 = vmatpush1.xpose.msra.mxu0 0.0
        %1592 = vmatprep.subr.mxu0 0.0
        %1593 = vmatpush1.xpose.msra.mxu0 0.0
        %1594 = vmatprep.subr.mxu0 0.0
        %1595 = vmatpush1.xpose.msra.mxu0 0.0
        %1596 = vmatprep.subr.mxu0 0.0
        %1597 = vmatpush1.xpose.msra.mxu0 0.0
        %1598 = vmatprep.subr.mxu0 0.0
        %1599 = vmatpush1.xpose.msra.mxu0 0.0
        %1600 = vmatprep.subr.mxu0 0.0
        %1601 = vmatpush1.xpose.msra.mxu0 0.0
        %1602 = vmatprep.subr.mxu0 0.0
        %1603 = vmatpush1.xpose.msra.mxu0 0.0
        %1604 = vmatprep.subr.mxu0 0.0
        %1605 = vmatpush1.xpose.msra.mxu0 0.0
        %1606 = vmatprep.subr.mxu0 0.0
        %1607 = vmatpush1.xpose.msra.mxu0 0.0
        %1608 = vmatprep.subr.mxu0 0.0
        %1609 = vmatpush1.xpose.msra.mxu0 0.0
        %1610 = vmatprep.subr.mxu0 0.0
        %1611 = vmatpush1.xpose.msra.mxu0 0.0
        %1612 = vmatprep.subr.mxu0 0.0
        %1613 = vmatpush1.xpose.msra.mxu0 0.0
        %1614 = vmatprep.subr.mxu0 0.0
        %1615 = vmatpush1.xpose.msra.mxu0 0.0
        %1616 = vmatprep.subr.mxu0 0.0
        %1617 = vmatpush1.xpose.msra.mxu0 0.0
        %1618 = vmatprep.subr.mxu0 0.0
        %1619 = vmatpush1.xpose.msra.mxu0 0.0
        %1620 = vmatprep.subr.mxu0 0.0
        %1621 = vmatpush1.xpose.msra.mxu0 0.0
        %1622 = vmatprep.subr.mxu0 0.0
        %1623 = vmatpush1.xpose.msra.mxu0 0.0
        %1624 = vmatprep.subr.mxu0 0.0
        %1625 = vmatpush1.xpose.msra.mxu0 0.0
        %1626 = vmatprep.subr.mxu0 0.0
        %1627 = vmatpush1.xpose.msra.mxu0 0.0
        %1628 = vmatprep.subr.mxu0 0.0
        %1629 = vmatpush1.xpose.msra.mxu0 0.0
        %1630 = vmatprep.mubr.f32.mxu0 0.0
        %1631 = vmatmul.mubr.f32.gmra.mrb[0].mxu0 %v1562
        %v1632 = vpop.f32.mrb[0].mxu0
        %v1633 = vadd.f32 0.0, %v1632
        %v1634 = vpop.f32.mrb[0].mxu0
        %1635 = vdwg.mxu0
        %1636 = vrot.lane.b32.xlu0 %v699, 112
        %v1637 = vpop.permute.xlu0 %1636
        %1638 = vrot.lane.b32.xlu0 %v709, 80
        %v1639 = vpop.permute.xlu0 %1638
        %v1640 = vsel %vm728, %v1637, 0
        %v1642 = vsel %vm728, %v1639, 0
        %1644 = vmatprep.subr.mxu0 0.0
        %1645 = vmatpush1.xpose.msra.mxu0 %v1642
        %1646 = vmatprep.subr.mxu0 0.0
        %1647 = vmatpush1.xpose.msra.mxu0 0.0
        %1648 = vmatprep.subr.mxu0 0.0
        %1649 = vmatpush1.xpose.msra.mxu0 0.0
        %1650 = vmatprep.subr.mxu0 0.0
        %1651 = vmatpush1.xpose.msra.mxu0 0.0
        %1652 = vmatprep.subr.mxu0 0.0
        %1653 = vmatpush1.xpose.msra.mxu0 0.0
        %1654 = vmatprep.subr.mxu0 0.0
        %1655 = vmatpush1.xpose.msra.mxu0 0.0
        %1656 = vmatprep.subr.mxu0 0.0
        %1657 = vmatpush1.xpose.msra.mxu0 0.0
        %1658 = vmatprep.subr.mxu0 0.0
        %1659 = vmatpush1.xpose.msra.mxu0 0.0
        %1660 = vmatprep.subr.mxu0 0.0
        %1661 = vmatpush1.xpose.msra.mxu0 0.0
        %1662 = vmatprep.subr.mxu0 0.0
        %1663 = vmatpush1.xpose.msra.mxu0 0.0
        %1664 = vmatprep.subr.mxu0 0.0
        %1665 = vmatpush1.xpose.msra.mxu0 0.0
        %1666 = vmatprep.subr.mxu0 0.0
        %1667 = vmatpush1.xpose.msra.mxu0 0.0
        %1668 = vmatprep.subr.mxu0 0.0
        %1669 = vmatpush1.xpose.msra.mxu0 0.0
        %1670 = vmatprep.subr.mxu0 0.0
        %1671 = vmatpush1.xpose.msra.mxu0 0.0
        %1672 = vmatprep.subr.mxu0 0.0
        %1673 = vmatpush1.xpose.msra.mxu0 0.0
        %1674 = vmatprep.subr.mxu0 0.0
        %1675 = vmatpush1.xpose.msra.mxu0 0.0
        %1676 = vmatprep.subr.mxu0 0.0
        %1677 = vmatpush1.xpose.msra.mxu0 0.0
        %1678 = vmatprep.subr.mxu0 0.0
        %1679 = vmatpush1.xpose.msra.mxu0 0.0
        %1680 = vmatprep.subr.mxu0 0.0
        %1681 = vmatpush1.xpose.msra.mxu0 0.0
        %1682 = vmatprep.subr.mxu0 0.0
        %1683 = vmatpush1.xpose.msra.mxu0 0.0
        %1684 = vmatprep.subr.mxu0 0.0
        %1685 = vmatpush1.xpose.msra.mxu0 0.0
        %1686 = vmatprep.subr.mxu0 0.0
        %1687 = vmatpush1.xpose.msra.mxu0 0.0
        %1688 = vmatprep.subr.mxu0 0.0
        %1689 = vmatpush1.xpose.msra.mxu0 0.0
        %1690 = vmatprep.subr.mxu0 0.0
        %1691 = vmatpush1.xpose.msra.mxu0 0.0
        %1692 = vmatprep.subr.mxu0 0.0
        %1693 = vmatpush1.xpose.msra.mxu0 0.0
        %1694 = vmatprep.subr.mxu0 0.0
        %1695 = vmatpush1.xpose.msra.mxu0 0.0
        %1696 = vmatprep.subr.mxu0 0.0
        %1697 = vmatpush1.xpose.msra.mxu0 0.0
        %1698 = vmatprep.subr.mxu0 0.0
        %1699 = vmatpush1.xpose.msra.mxu0 0.0
        %1700 = vmatprep.subr.mxu0 0.0
        %1701 = vmatpush1.xpose.msra.mxu0 0.0
        %1702 = vmatprep.subr.mxu0 0.0
        %1703 = vmatpush1.xpose.msra.mxu0 0.0
        %1704 = vmatprep.subr.mxu0 0.0
        %1705 = vmatpush1.xpose.msra.mxu0 0.0
        %1706 = vmatprep.subr.mxu0 0.0
        %1707 = vmatpush1.xpose.msra.mxu0 0.0
        %1708 = vmatprep.mubr.f32.mxu0 0.0
        %1709 = vmatmul.mubr.f32.gmra.mrb[0].mxu0 %v1640
        %v1710 = vpop.f32.mrb[0].mxu0
        %v1711 = vadd.f32 0.0, %v1710
        %v1712 = vpop.f32.mrb[0].mxu0
        %1713 = vdwg.mxu0
        %v1714 = vmul.f32 %v1633, 0.35355338
        %v1715 = vmul.f32 %v1711, 0.35355338
        %v1716 = vsel %vm728, %v1714, -inf
        %1717 = vmax.xlane.f32.xlu0 %v1716
        %v1718 = vpop.xlane.xlu0 %1717
        %v1719 = vsel %vm728, %v1715, -inf
        %1720 = vmax.xlane.f32.xlu0 %v1719
        %v1721 = vpop.xlane.xlu0 %1720
        %v1722 = vsub.f32 %v1714, %v1718
        %v1723 = vsub.f32 %v1715, %v1721
        %v1724 = vmul.f32 %v1722, 1.442695
        %v1725 = vpow.pop %v1724
        %v1726 = vmul.f32 %v1723, 1.442695
        %v1727 = vpow.pop %v1726
        %v1728 = vsel %vm728, %v1725, 0.0
        %1729 = vadd.xlane.f32.xlu0 %v1728
        %v1730 = vpop.xlane.xlu0 %1729
        %v1731 = vsel %vm728, %v1727, 0.0
        %1732 = vadd.xlane.f32.xlu0 %v1731
        %v1733 = vpop.xlane.xlu0 %1732
        %v1734 = vrcp.pop %v1730
        %v1735 = vrcp.pop %v1733
        %v1736 = vmul.f32 %v1725, %v1734
        %v1737 = vmul.f32 %v1727, %v1735
        %1738 = vrot.lane.b32.xlu0 %v718, 48
        %v1739 = vpop.permute.xlu0 %1738
        %v1742 = vsel %vm728, %v1736, 0
        %1744 = vmatprep.subr.mxu0 0.0
        %1745 = vmatpush1.msra.mxu0 %v1739
        %1746 = vmatprep.subr.mxu0 0.0
        %1747 = vmatpush1.msra.mxu0 0.0
        %1748 = vmatprep.subr.mxu0 0.0
        %1749 = vmatpush1.msra.mxu0 0.0
        %1750 = vmatprep.subr.mxu0 0.0
        %1751 = vmatpush1.msra.mxu0 0.0
        %1752 = vmatprep.subr.mxu0 0.0
        %1753 = vmatpush1.msra.mxu0 0.0
        %1754 = vmatprep.subr.mxu0 0.0
        %1755 = vmatpush1.msra.mxu0 0.0
        %1756 = vmatprep.subr.mxu0 0.0
        %1757 = vmatpush1.msra.mxu0 0.0
        %1758 = vmatprep.subr.mxu0 0.0
        %1759 = vmatpush1.msra.mxu0 0.0
        %1760 = vmatprep.subr.mxu0 0.0
        %1761 = vmatpush1.msra.mxu0 0.0
        %1762 = vmatprep.subr.mxu0 0.0
        %1763 = vmatpush1.msra.mxu0 0.0
        %1764 = vmatprep.subr.mxu0 0.0
        %1765 = vmatpush1.msra.mxu0 0.0
        %1766 = vmatprep.subr.mxu0 0.0
        %1767 = vmatpush1.msra.mxu0 0.0
        %1768 = vmatprep.subr.mxu0 0.0
        %1769 = vmatpush1.msra.mxu0 0.0
        %1770 = vmatprep.subr.mxu0 0.0
        %1771 = vmatpush1.msra.mxu0 0.0
        %1772 = vmatprep.subr.mxu0 0.0
        %1773 = vmatpush1.msra.mxu0 0.0
        %1774 = vmatprep.subr.mxu0 0.0
        %1775 = vmatpush1.msra.mxu0 0.0
        %1776 = vmatprep.subr.mxu0 0.0
        %1777 = vmatpush1.msra.mxu0 0.0
        %1778 = vmatprep.subr.mxu0 0.0
        %1779 = vmatpush1.msra.mxu0 0.0
        %1780 = vmatprep.subr.mxu0 0.0
        %1781 = vmatpush1.msra.mxu0 0.0
        %1782 = vmatprep.subr.mxu0 0.0
        %1783 = vmatpush1.msra.mxu0 0.0
        %1784 = vmatprep.subr.mxu0 0.0
        %1785 = vmatpush1.msra.mxu0 0.0
        %1786 = vmatprep.subr.mxu0 0.0
        %1787 = vmatpush1.msra.mxu0 0.0
        %1788 = vmatprep.subr.mxu0 0.0
        %1789 = vmatpush1.msra.mxu0 0.0
        %1790 = vmatprep.subr.mxu0 0.0
        %1791 = vmatpush1.msra.mxu0 0.0
        %1792 = vmatprep.subr.mxu0 0.0
        %1793 = vmatpush1.msra.mxu0 0.0
        %1794 = vmatprep.subr.mxu0 0.0
        %1795 = vmatpush1.msra.mxu0 0.0
        %1796 = vmatprep.subr.mxu0 0.0
        %1797 = vmatpush1.msra.mxu0 0.0
        %1798 = vmatprep.subr.mxu0 0.0
        %1799 = vmatpush1.msra.mxu0 0.0
        %1800 = vmatprep.subr.mxu0 0.0
        %1801 = vmatpush1.msra.mxu0 0.0
        %1802 = vmatprep.subr.mxu0 0.0
        %1803 = vmatpush1.msra.mxu0 0.0
        %1804 = vmatprep.subr.mxu0 0.0
        %1805 = vmatpush1.msra.mxu0 0.0
        %1806 = vmatprep.subr.mxu0 0.0
        %1807 = vmatpush1.msra.mxu0 0.0
        %1808 = vmatprep.mubr.f32.mxu0 0.0
        %1809 = vmatmul.mubr.f32.gmra.mrb[0].mxu0 %v1742
        %v1810 = vpop.f32.mrb[0].mxu0
        %v1811 = vadd.f32 0.0, %v1810
        %v1812 = vpop.f32.mrb[0].mxu0
        %1813 = vdwg.mxu0
        %1814 = vrot.lane.b32.xlu0 %v719, 48
        %v1815 = vpop.permute.xlu0 %1814
        %v1818 = vsel %vm728, %v1737, 0
        %1820 = vmatprep.subr.mxu0 0.0
        %1821 = vmatpush1.msra.mxu0 %v1815
        %1822 = vmatprep.subr.mxu0 0.0
        %1823 = vmatpush1.msra.mxu0 0.0
        %1824 = vmatprep.subr.mxu0 0.0
        %1825 = vmatpush1.msra.mxu0 0.0
        %1826 = vmatprep.subr.mxu0 0.0
        %1827 = vmatpush1.msra.mxu0 0.0
        %1828 = vmatprep.subr.mxu0 0.0
        %1829 = vmatpush1.msra.mxu0 0.0
        %1830 = vmatprep.subr.mxu0 0.0
        %1831 = vmatpush1.msra.mxu0 0.0
        %1832 = vmatprep.subr.mxu0 0.0
        %1833 = vmatpush1.msra.mxu0 0.0
        %1834 = vmatprep.subr.mxu0 0.0
        %1835 = vmatpush1.msra.mxu0 0.0
        %1836 = vmatprep.subr.mxu0 0.0
        %1837 = vmatpush1.msra.mxu0 0.0
        %1838 = vmatprep.subr.mxu0 0.0
        %1839 = vmatpush1.msra.mxu0 0.0
        %1840 = vmatprep.subr.mxu0 0.0
        %1841 = vmatpush1.msra.mxu0 0.0
        %1842 = vmatprep.subr.mxu0 0.0
        %1843 = vmatpush1.msra.mxu0 0.0
        %1844 = vmatprep.subr.mxu0 0.0
        %1845 = vmatpush1.msra.mxu0 0.0
        %1846 = vmatprep.subr.mxu0 0.0
        %1847 = vmatpush1.msra.mxu0 0.0
        %1848 = vmatprep.subr.mxu0 0.0
        %1849 = vmatpush1.msra.mxu0 0.0
        %1850 = vmatprep.subr.mxu0 0.0
        %1851 = vmatpush1.msra.mxu0 0.0
        %1852 = vmatprep.subr.mxu0 0.0
        %1853 = vmatpush1.msra.mxu0 0.0
        %1854 = vmatprep.subr.mxu0 0.0
        %1855 = vmatpush1.msra.mxu0 0.0
        %1856 = vmatprep.subr.mxu0 0.0
        %1857 = vmatpush1.msra.mxu0 0.0
        %1858 = vmatprep.subr.mxu0 0.0
        %1859 = vmatpush1.msra.mxu0 0.0
        %1860 = vmatprep.subr.mxu0 0.0
        %1861 = vmatpush1.msra.mxu0 0.0
        %1862 = vmatprep.subr.mxu0 0.0
        %1863 = vmatpush1.msra.mxu0 0.0
        %1864 = vmatprep.subr.mxu0 0.0
        %1865 = vmatpush1.msra.mxu0 0.0
        %1866 = vmatprep.subr.mxu0 0.0
        %1867 = vmatpush1.msra.mxu0 0.0
        %1868 = vmatprep.subr.mxu0 0.0
        %1869 = vmatpush1.msra.mxu0 0.0
        %1870 = vmatprep.subr.mxu0 0.0
        %1871 = vmatpush1.msra.mxu0 0.0
        %1872 = vmatprep.subr.mxu0 0.0
        %1873 = vmatpush1.msra.mxu0 0.0
        %1874 = vmatprep.subr.mxu0 0.0
        %1875 = vmatpush1.msra.mxu0 0.0
        %1876 = vmatprep.subr.mxu0 0.0
        %1877 = vmatpush1.msra.mxu0 0.0
        %1878 = vmatprep.subr.mxu0 0.0
        %1879 = vmatpush1.msra.mxu0 0.0
        %1880 = vmatprep.subr.mxu0 0.0
        %1881 = vmatpush1.msra.mxu0 0.0
        %1882 = vmatprep.subr.mxu0 0.0
        %1883 = vmatpush1.msra.mxu0 0.0
        %1884 = vmatprep.mubr.f32.mxu0 0.0
        %1885 = vmatmul.mubr.f32.gmra.mrb[0].mxu0 %v1818
        %v1886 = vpop.f32.mrb[0].mxu0
        %v1887 = vadd.f32 0.0, %v1886
        %v1888 = vpop.f32.mrb[0].mxu0
        %1889 = vdwg.mxu0
        %v1891 = vsel %vm728, %v1811, 0
        %v1894 = vsel %vm728, %v1887, 0
        %1896 = vmatprep.subr.mxu0 0.0
        %1897 = vmatpush1.msra.mxu0 %v610
        %1898 = vmatprep.subr.mxu0 0.0
        %1899 = vmatpush1.msra.mxu0 0.0
        %1900 = vmatprep.subr.mxu0 0.0
        %1901 = vmatpush1.msra.mxu0 0.0
        %1902 = vmatprep.subr.mxu0 0.0
        %1903 = vmatpush1.msra.mxu0 0.0
        %1904 = vmatprep.subr.mxu0 0.0
        %1905 = vmatpush1.msra.mxu0 0.0
        %1906 = vmatprep.subr.mxu0 0.0
        %1907 = vmatpush1.msra.mxu0 0.0
        %1908 = vmatprep.subr.mxu0 0.0
        %1909 = vmatpush1.msra.mxu0 0.0
        %1910 = vmatprep.subr.mxu0 0.0
        %1911 = vmatpush1.msra.mxu0 0.0
        %1912 = vmatprep.subr.mxu0 0.0
        %1913 = vmatpush1.msra.mxu0 0.0
        %1914 = vmatprep.subr.mxu0 0.0
        %1915 = vmatpush1.msra.mxu0 0.0
        %1916 = vmatprep.subr.mxu0 0.0
        %1917 = vmatpush1.msra.mxu0 0.0
        %1918 = vmatprep.subr.mxu0 0.0
        %1919 = vmatpush1.msra.mxu0 0.0
        %1920 = vmatprep.subr.mxu0 0.0
        %1921 = vmatpush1.msra.mxu0 0.0
        %1922 = vmatprep.subr.mxu0 0.0
        %1923 = vmatpush1.msra.mxu0 0.0
        %1924 = vmatprep.subr.mxu0 0.0
        %1925 = vmatpush1.msra.mxu0 0.0
        %1926 = vmatprep.subr.mxu0 0.0
        %1927 = vmatpush1.msra.mxu0 0.0
        %1928 = vmatprep.subr.mxu0 0.0
        %1929 = vmatpush1.msra.mxu0 0.0
        %1930 = vmatprep.subr.mxu0 0.0
        %1931 = vmatpush1.msra.mxu0 0.0
        %1932 = vmatprep.subr.mxu0 0.0
        %1933 = vmatpush1.msra.mxu0 0.0
        %1934 = vmatprep.subr.mxu0 0.0
        %1935 = vmatpush1.msra.mxu0 0.0
        %1936 = vmatprep.subr.mxu0 0.0
        %1937 = vmatpush1.msra.mxu0 0.0
        %1938 = vmatprep.subr.mxu0 0.0
        %1939 = vmatpush1.msra.mxu0 0.0
        %1940 = vmatprep.subr.mxu0 0.0
        %1941 = vmatpush1.msra.mxu0 0.0
        %1942 = vmatprep.subr.mxu0 0.0
        %1943 = vmatpush1.msra.mxu0 0.0
        %1944 = vmatprep.subr.mxu0 0.0
        %1945 = vmatpush1.msra.mxu0 0.0
        %1946 = vmatprep.subr.mxu0 0.0
        %1947 = vmatpush1.msra.mxu0 0.0
        %1948 = vmatprep.subr.mxu0 0.0
        %1949 = vmatpush1.msra.mxu0 0.0
        %1950 = vmatprep.subr.mxu0 0.0
        %1951 = vmatpush1.msra.mxu0 0.0
        %1952 = vmatprep.subr.mxu0 0.0
        %1953 = vmatpush1.msra.mxu0 0.0
        %1954 = vmatprep.subr.mxu0 0.0
        %1955 = vmatpush1.msra.mxu0 0.0
        %1956 = vmatprep.subr.mxu0 0.0
        %1957 = vmatpush1.msra.mxu0 0.0
        %1958 = vmatprep.subr.mxu0 0.0
        %1959 = vmatpush1.msra.mxu0 0.0
        %1960 = vmatprep.mubr.f32.mxu0 0.0
        %1961 = vmatmul.mubr.f32.gmra.mrb[0].mxu0 %v1891
        %v1962 = vpop.f32.mrb[0].mxu0
        %v1963 = vadd.f32 0.0, %v1962
        %v1964 = vpop.f32.mrb[0].mxu0
        %1965 = vmatprep.mubr.f32.mxu0 0.0
        %1966 = vmatmul.mubr.f32.gmra.mrb[0].mxu0 %v1894
        %v1967 = vpop.f32.mrb[0].mxu0
        %v1968 = vadd.f32 0.0, %v1967
        %v1969 = vpop.f32.mrb[0].mxu0
        %1970 = vdwg.mxu0
        %v1971 = vadd.f32 %v1556, %v1963
        %v1972 = vadd.f32 %v1557, %v1968
        %1973 = vrot.lane.b32.xlu0 %v698, 104
        %v1974 = vpop.permute.xlu0 %1973
        %1975 = vrot.lane.b32.xlu0 %v708, 72
        %v1976 = vpop.permute.xlu0 %1975
        %v1977 = vsel %vm728, %v1974, 0
        %v1979 = vsel %vm728, %v1976, 0
        %1981 = vmatprep.subr.mxu0 0.0
        %1982 = vmatpush1.xpose.msra.mxu0 %v1979
        %1983 = vmatprep.subr.mxu0 0.0
        %1984 = vmatpush1.xpose.msra.mxu0 0.0
        %1985 = vmatprep.subr.mxu0 0.0
        %1986 = vmatpush1.xpose.msra.mxu0 0.0
        %1987 = vmatprep.subr.mxu0 0.0
        %1988 = vmatpush1.xpose.msra.mxu0 0.0
        %1989 = vmatprep.subr.mxu0 0.0
        %1990 = vmatpush1.xpose.msra.mxu0 0.0
        %1991 = vmatprep.subr.mxu0 0.0
        %1992 = vmatpush1.xpose.msra.mxu0 0.0
        %1993 = vmatprep.subr.mxu0 0.0
        %1994 = vmatpush1.xpose.msra.mxu0 0.0
        %1995 = vmatprep.subr.mxu0 0.0
        %1996 = vmatpush1.xpose.msra.mxu0 0.0
        %1997 = vmatprep.subr.mxu0 0.0
        %1998 = vmatpush1.xpose.msra.mxu0 0.0
        %1999 = vmatprep.subr.mxu0 0.0
        %2000 = vmatpush1.xpose.msra.mxu0 0.0
        %2001 = vmatprep.subr.mxu0 0.0
        %2002 = vmatpush1.xpose.msra.mxu0 0.0
        %2003 = vmatprep.subr.mxu0 0.0
        %2004 = vmatpush1.xpose.msra.mxu0 0.0
        %2005 = vmatprep.subr.mxu0 0.0
        %2006 = vmatpush1.xpose.msra.mxu0 0.0
        %2007 = vmatprep.subr.mxu0 0.0
        %2008 = vmatpush1.xpose.msra.mxu0 0.0
        %2009 = vmatprep.subr.mxu0 0.0
        %2010 = vmatpush1.xpose.msra.mxu0 0.0
        %2011 = vmatprep.subr.mxu0 0.0
        %2012 = vmatpush1.xpose.msra.mxu0 0.0
        %2013 = vmatprep.subr.mxu0 0.0
        %2014 = vmatpush1.xpose.msra.mxu0 0.0
        %2015 = vmatprep.subr.mxu0 0.0
        %2016 = vmatpush1.xpose.msra.mxu0 0.0
        %2017 = vmatprep.subr.mxu0 0.0
        %2018 = vmatpush1.xpose.msra.mxu0 0.0
        %2019 = vmatprep.subr.mxu0 0.0
        %2020 = vmatpush1.xpose.msra.mxu0 0.0
        %2021 = vmatprep.subr.mxu0 0.0
        %2022 = vmatpush1.xpose.msra.mxu0 0.0
        %2023 = vmatprep.subr.mxu0 0.0
        %2024 = vmatpush1.xpose.msra.mxu0 0.0
        %2025 = vmatprep.subr.mxu0 0.0
        %2026 = vmatpush1.xpose.msra.mxu0 0.0
        %2027 = vmatprep.subr.mxu0 0.0
        %2028 = vmatpush1.xpose.msra.mxu0 0.0
        %2029 = vmatprep.subr.mxu0 0.0
        %2030 = vmatpush1.xpose.msra.mxu0 0.0
        %2031 = vmatprep.subr.mxu0 0.0
        %2032 = vmatpush1.xpose.msra.mxu0 0.0
        %2033 = vmatprep.subr.mxu0 0.0
        %2034 = vmatpush1.xpose.msra.mxu0 0.0
        %2035 = vmatprep.subr.mxu0 0.0
        %2036 = vmatpush1.xpose.msra.mxu0 0.0
        %2037 = vmatprep.subr.mxu0 0.0
        %2038 = vmatpush1.xpose.msra.mxu0 0.0
        %2039 = vmatprep.subr.mxu0 0.0
        %2040 = vmatpush1.xpose.msra.mxu0 0.0
        %2041 = vmatprep.subr.mxu0 0.0
        %2042 = vmatpush1.xpose.msra.mxu0 0.0
        %2043 = vmatprep.subr.mxu0 0.0
        %2044 = vmatpush1.xpose.msra.mxu0 0.0
        %2045 = vmatprep.mubr.f32.mxu0 0.0
        %2046 = vmatmul.mubr.f32.gmra.mrb[0].mxu0 %v1977
        %v2047 = vpop.f32.mrb[0].mxu0
        %v2048 = vadd.f32 0.0, %v2047
        %v2049 = vpop.f32.mrb[0].mxu0
        %2050 = vdwg.mxu0
        %2051 = vrot.lane.b32.xlu0 %v699, 104
        %v2052 = vpop.permute.xlu0 %2051
        %2053 = vrot.lane.b32.xlu0 %v709, 72
        %v2054 = vpop.permute.xlu0 %2053
        %v2055 = vsel %vm728, %v2052, 0
        %v2057 = vsel %vm728, %v2054, 0
        %2059 = vmatprep.subr.mxu0 0.0
        %2060 = vmatpush1.xpose.msra.mxu0 %v2057
        %2061 = vmatprep.subr.mxu0 0.0
        %2062 = vmatpush1.xpose.msra.mxu0 0.0
        %2063 = vmatprep.subr.mxu0 0.0
        %2064 = vmatpush1.xpose.msra.mxu0 0.0
        %2065 = vmatprep.subr.mxu0 0.0
        %2066 = vmatpush1.xpose.msra.mxu0 0.0
        %2067 = vmatprep.subr.mxu0 0.0
        %2068 = vmatpush1.xpose.msra.mxu0 0.0
        %2069 = vmatprep.subr.mxu0 0.0
        %2070 = vmatpush1.xpose.msra.mxu0 0.0
        %2071 = vmatprep.subr.mxu0 0.0
        %2072 = vmatpush1.xpose.msra.mxu0 0.0
        %2073 = vmatprep.subr.mxu0 0.0
        %2074 = vmatpush1.xpose.msra.mxu0 0.0
        %2075 = vmatprep.subr.mxu0 0.0
        %2076 = vmatpush1.xpose.msra.mxu0 0.0
        %2077 = vmatprep.subr.mxu0 0.0
        %2078 = vmatpush1.xpose.msra.mxu0 0.0
        %2079 = vmatprep.subr.mxu0 0.0
        %2080 = vmatpush1.xpose.msra.mxu0 0.0
        %2081 = vmatprep.subr.mxu0 0.0
        %2082 = vmatpush1.xpose.msra.mxu0 0.0
        %2083 = vmatprep.subr.mxu0 0.0
        %2084 = vmatpush1.xpose.msra.mxu0 0.0
        %2085 = vmatprep.subr.mxu0 0.0
        %2086 = vmatpush1.xpose.msra.mxu0 0.0
        %2087 = vmatprep.subr.mxu0 0.0
        %2088 = vmatpush1.xpose.msra.mxu0 0.0
        %2089 = vmatprep.subr.mxu0 0.0
        %2090 = vmatpush1.xpose.msra.mxu0 0.0
        %2091 = vmatprep.subr.mxu0 0.0
        %2092 = vmatpush1.xpose.msra.mxu0 0.0
        %2093 = vmatprep.subr.mxu0 0.0
        %2094 = vmatpush1.xpose.msra.mxu0 0.0
        %2095 = vmatprep.subr.mxu0 0.0
        %2096 = vmatpush1.xpose.msra.mxu0 0.0
        %2097 = vmatprep.subr.mxu0 0.0
        %2098 = vmatpush1.xpose.msra.mxu0 0.0
        %2099 = vmatprep.subr.mxu0 0.0
        %2100 = vmatpush1.xpose.msra.mxu0 0.0
        %2101 = vmatprep.subr.mxu0 0.0
        %2102 = vmatpush1.xpose.msra.mxu0 0.0
        %2103 = vmatprep.subr.mxu0 0.0
        %2104 = vmatpush1.xpose.msra.mxu0 0.0
        %2105 = vmatprep.subr.mxu0 0.0
        %2106 = vmatpush1.xpose.msra.mxu0 0.0
        %2107 = vmatprep.subr.mxu0 0.0
        %2108 = vmatpush1.xpose.msra.mxu0 0.0
        %2109 = vmatprep.subr.mxu0 0.0
        %2110 = vmatpush1.xpose.msra.mxu0 0.0
        %2111 = vmatprep.subr.mxu0 0.0
        %2112 = vmatpush1.xpose.msra.mxu0 0.0
        %2113 = vmatprep.subr.mxu0 0.0
        %2114 = vmatpush1.xpose.msra.mxu0 0.0
        %2115 = vmatprep.subr.mxu0 0.0
        %2116 = vmatpush1.xpose.msra.mxu0 0.0
        %2117 = vmatprep.subr.mxu0 0.0
        %2118 = vmatpush1.xpose.msra.mxu0 0.0
        %2119 = vmatprep.subr.mxu0 0.0
        %2120 = vmatpush1.xpose.msra.mxu0 0.0
        %2121 = vmatprep.subr.mxu0 0.0
        %2122 = vmatpush1.xpose.msra.mxu0 0.0
        %2123 = vmatprep.mubr.f32.mxu0 0.0
        %2124 = vmatmul.mubr.f32.gmra.mrb[0].mxu0 %v2055
        %v2125 = vpop.f32.mrb[0].mxu0
        %v2126 = vadd.f32 0.0, %v2125
        %v2127 = vpop.f32.mrb[0].mxu0
        %2128 = vdwg.mxu0
        %v2129 = vmul.f32 %v2048, 0.35355338
        %v2130 = vmul.f32 %v2126, 0.35355338
        %v2131 = vsel %vm728, %v2129, -inf
        %2132 = vmax.xlane.f32.xlu0 %v2131
        %v2133 = vpop.xlane.xlu0 %2132
        %v2134 = vsel %vm728, %v2130, -inf
        %2135 = vmax.xlane.f32.xlu0 %v2134
        %v2136 = vpop.xlane.xlu0 %2135
        %v2137 = vsub.f32 %v2129, %v2133
        %v2138 = vsub.f32 %v2130, %v2136
        %v2139 = vmul.f32 %v2137, 1.442695
        %v2140 = vpow.pop %v2139
        %v2141 = vmul.f32 %v2138, 1.442695
        %v2142 = vpow.pop %v2141
        %v2143 = vsel %vm728, %v2140, 0.0
        %2144 = vadd.xlane.f32.xlu0 %v2143
        %v2145 = vpop.xlane.xlu0 %2144
        %v2146 = vsel %vm728, %v2142, 0.0
        %2147 = vadd.xlane.f32.xlu0 %v2146
        %v2148 = vpop.xlane.xlu0 %2147
        %v2149 = vrcp.pop %v2145
        %v2150 = vrcp.pop %v2148
        %v2151 = vmul.f32 %v2140, %v2149
        %v2152 = vmul.f32 %v2142, %v2150
        %2153 = vrot.lane.b32.xlu0 %v718, 40
        %v2154 = vpop.permute.xlu0 %2153
        %v2157 = vsel %vm728, %v2151, 0
        %2159 = vmatprep.subr.mxu0 0.0
        %2160 = vmatpush1.msra.mxu0 %v2154
        %2161 = vmatprep.subr.mxu0 0.0
        %2162 = vmatpush1.msra.mxu0 0.0
        %2163 = vmatprep.subr.mxu0 0.0
        %2164 = vmatpush1.msra.mxu0 0.0
        %2165 = vmatprep.subr.mxu0 0.0
        %2166 = vmatpush1.msra.mxu0 0.0
        %2167 = vmatprep.subr.mxu0 0.0
        %2168 = vmatpush1.msra.mxu0 0.0
        %2169 = vmatprep.subr.mxu0 0.0
        %2170 = vmatpush1.msra.mxu0 0.0
        %2171 = vmatprep.subr.mxu0 0.0
        %2172 = vmatpush1.msra.mxu0 0.0
        %2173 = vmatprep.subr.mxu0 0.0
        %2174 = vmatpush1.msra.mxu0 0.0
        %2175 = vmatprep.subr.mxu0 0.0
        %2176 = vmatpush1.msra.mxu0 0.0
        %2177 = vmatprep.subr.mxu0 0.0
        %2178 = vmatpush1.msra.mxu0 0.0
        %2179 = vmatprep.subr.mxu0 0.0
        %2180 = vmatpush1.msra.mxu0 0.0
        %2181 = vmatprep.subr.mxu0 0.0
        %2182 = vmatpush1.msra.mxu0 0.0
        %2183 = vmatprep.subr.mxu0 0.0
        %2184 = vmatpush1.msra.mxu0 0.0
        %2185 = vmatprep.subr.mxu0 0.0
        %2186 = vmatpush1.msra.mxu0 0.0
        %2187 = vmatprep.subr.mxu0 0.0
        %2188 = vmatpush1.msra.mxu0 0.0
        %2189 = vmatprep.subr.mxu0 0.0
        %2190 = vmatpush1.msra.mxu0 0.0
        %2191 = vmatprep.subr.mxu0 0.0
        %2192 = vmatpush1.msra.mxu0 0.0
        %2193 = vmatprep.subr.mxu0 0.0
        %2194 = vmatpush1.msra.mxu0 0.0
        %2195 = vmatprep.subr.mxu0 0.0
        %2196 = vmatpush1.msra.mxu0 0.0
        %2197 = vmatprep.subr.mxu0 0.0
        %2198 = vmatpush1.msra.mxu0 0.0
        %2199 = vmatprep.subr.mxu0 0.0
        %2200 = vmatpush1.msra.mxu0 0.0
        %2201 = vmatprep.subr.mxu0 0.0
        %2202 = vmatpush1.msra.mxu0 0.0
        %2203 = vmatprep.subr.mxu0 0.0
        %2204 = vmatpush1.msra.mxu0 0.0
        %2205 = vmatprep.subr.mxu0 0.0
        %2206 = vmatpush1.msra.mxu0 0.0
        %2207 = vmatprep.subr.mxu0 0.0
        %2208 = vmatpush1.msra.mxu0 0.0
        %2209 = vmatprep.subr.mxu0 0.0
        %2210 = vmatpush1.msra.mxu0 0.0
        %2211 = vmatprep.subr.mxu0 0.0
        %2212 = vmatpush1.msra.mxu0 0.0
        %2213 = vmatprep.subr.mxu0 0.0
        %2214 = vmatpush1.msra.mxu0 0.0
        %2215 = vmatprep.subr.mxu0 0.0
        %2216 = vmatpush1.msra.mxu0 0.0
        %2217 = vmatprep.subr.mxu0 0.0
        %2218 = vmatpush1.msra.mxu0 0.0
        %2219 = vmatprep.subr.mxu0 0.0
        %2220 = vmatpush1.msra.mxu0 0.0
        %2221 = vmatprep.subr.mxu0 0.0
        %2222 = vmatpush1.msra.mxu0 0.0
        %2223 = vmatprep.mubr.f32.mxu0 0.0
        %2224 = vmatmul.mubr.f32.gmra.mrb[0].mxu0 %v2157
        %v2225 = vpop.f32.mrb[0].mxu0
        %v2226 = vadd.f32 0.0, %v2225
        %v2227 = vpop.f32.mrb[0].mxu0
        %2228 = vdwg.mxu0
        %2229 = vrot.lane.b32.xlu0 %v719, 40
        %v2230 = vpop.permute.xlu0 %2229
        %v2233 = vsel %vm728, %v2152, 0
        %2235 = vmatprep.subr.mxu0 0.0
        %2236 = vmatpush1.msra.mxu0 %v2230
        %2237 = vmatprep.subr.mxu0 0.0
        %2238 = vmatpush1.msra.mxu0 0.0
        %2239 = vmatprep.subr.mxu0 0.0
        %2240 = vmatpush1.msra.mxu0 0.0
        %2241 = vmatprep.subr.mxu0 0.0
        %2242 = vmatpush1.msra.mxu0 0.0
        %2243 = vmatprep.subr.mxu0 0.0
        %2244 = vmatpush1.msra.mxu0 0.0
        %2245 = vmatprep.subr.mxu0 0.0
        %2246 = vmatpush1.msra.mxu0 0.0
        %2247 = vmatprep.subr.mxu0 0.0
        %2248 = vmatpush1.msra.mxu0 0.0
        %2249 = vmatprep.subr.mxu0 0.0
        %2250 = vmatpush1.msra.mxu0 0.0
        %2251 = vmatprep.subr.mxu0 0.0
        %2252 = vmatpush1.msra.mxu0 0.0
        %2253 = vmatprep.subr.mxu0 0.0
        %2254 = vmatpush1.msra.mxu0 0.0
        %2255 = vmatprep.subr.mxu0 0.0
        %2256 = vmatpush1.msra.mxu0 0.0
        %2257 = vmatprep.subr.mxu0 0.0
        %2258 = vmatpush1.msra.mxu0 0.0
        %2259 = vmatprep.subr.mxu0 0.0
        %2260 = vmatpush1.msra.mxu0 0.0
        %2261 = vmatprep.subr.mxu0 0.0
        %2262 = vmatpush1.msra.mxu0 0.0
        %2263 = vmatprep.subr.mxu0 0.0
        %2264 = vmatpush1.msra.mxu0 0.0
        %2265 = vmatprep.subr.mxu0 0.0
        %2266 = vmatpush1.msra.mxu0 0.0
        %2267 = vmatprep.subr.mxu0 0.0
        %2268 = vmatpush1.msra.mxu0 0.0
        %2269 = vmatprep.subr.mxu0 0.0
        %2270 = vmatpush1.msra.mxu0 0.0
        %2271 = vmatprep.subr.mxu0 0.0
        %2272 = vmatpush1.msra.mxu0 0.0
        %2273 = vmatprep.subr.mxu0 0.0
        %2274 = vmatpush1.msra.mxu0 0.0
        %2275 = vmatprep.subr.mxu0 0.0
        %2276 = vmatpush1.msra.mxu0 0.0
        %2277 = vmatprep.subr.mxu0 0.0
        %2278 = vmatpush1.msra.mxu0 0.0
        %2279 = vmatprep.subr.mxu0 0.0
        %2280 = vmatpush1.msra.mxu0 0.0
        %2281 = vmatprep.subr.mxu0 0.0
        %2282 = vmatpush1.msra.mxu0 0.0
        %2283 = vmatprep.subr.mxu0 0.0
        %2284 = vmatpush1.msra.mxu0 0.0
        %2285 = vmatprep.subr.mxu0 0.0
        %2286 = vmatpush1.msra.mxu0 0.0
        %2287 = vmatprep.subr.mxu0 0.0
        %2288 = vmatpush1.msra.mxu0 0.0
        %2289 = vmatprep.subr.mxu0 0.0
        %2290 = vmatpush1.msra.mxu0 0.0
        %2291 = vmatprep.subr.mxu0 0.0
        %2292 = vmatpush1.msra.mxu0 0.0
        %2293 = vmatprep.subr.mxu0 0.0
        %2294 = vmatpush1.msra.mxu0 0.0
        %2295 = vmatprep.subr.mxu0 0.0
        %2296 = vmatpush1.msra.mxu0 0.0
        %2297 = vmatprep.subr.mxu0 0.0
        %2298 = vmatpush1.msra.mxu0 0.0
        %2299 = vmatprep.mubr.f32.mxu0 0.0
        %2300 = vmatmul.mubr.f32.gmra.mrb[0].mxu0 %v2233
        %v2301 = vpop.f32.mrb[0].mxu0
        %v2302 = vadd.f32 0.0, %v2301
        %v2303 = vpop.f32.mrb[0].mxu0
        %2304 = vdwg.mxu0
        %v2306 = vsel %vm728, %v2226, 0
        %v2309 = vsel %vm728, %v2302, 0
        %2311 = vmatprep.subr.mxu0 0.0
        %2312 = vmatpush1.msra.mxu0 %v611
        %2313 = vmatprep.subr.mxu0 0.0
        %2314 = vmatpush1.msra.mxu0 0.0
        %2315 = vmatprep.subr.mxu0 0.0
        %2316 = vmatpush1.msra.mxu0 0.0
        %2317 = vmatprep.subr.mxu0 0.0
        %2318 = vmatpush1.msra.mxu0 0.0
        %2319 = vmatprep.subr.mxu0 0.0
        %2320 = vmatpush1.msra.mxu0 0.0
        %2321 = vmatprep.subr.mxu0 0.0
        %2322 = vmatpush1.msra.mxu0 0.0
        %2323 = vmatprep.subr.mxu0 0.0
        %2324 = vmatpush1.msra.mxu0 0.0
        %2325 = vmatprep.subr.mxu0 0.0
        %2326 = vmatpush1.msra.mxu0 0.0
        %2327 = vmatprep.subr.mxu0 0.0
        %2328 = vmatpush1.msra.mxu0 0.0
        %2329 = vmatprep.subr.mxu0 0.0
        %2330 = vmatpush1.msra.mxu0 0.0
        %2331 = vmatprep.subr.mxu0 0.0
        %2332 = vmatpush1.msra.mxu0 0.0
        %2333 = vmatprep.subr.mxu0 0.0
        %2334 = vmatpush1.msra.mxu0 0.0
        %2335 = vmatprep.subr.mxu0 0.0
        %2336 = vmatpush1.msra.mxu0 0.0
        %2337 = vmatprep.subr.mxu0 0.0
        %2338 = vmatpush1.msra.mxu0 0.0
        %2339 = vmatprep.subr.mxu0 0.0
        %2340 = vmatpush1.msra.mxu0 0.0
        %2341 = vmatprep.subr.mxu0 0.0
        %2342 = vmatpush1.msra.mxu0 0.0
        %2343 = vmatprep.subr.mxu0 0.0
        %2344 = vmatpush1.msra.mxu0 0.0
        %2345 = vmatprep.subr.mxu0 0.0
        %2346 = vmatpush1.msra.mxu0 0.0
        %2347 = vmatprep.subr.mxu0 0.0
        %2348 = vmatpush1.msra.mxu0 0.0
        %2349 = vmatprep.subr.mxu0 0.0
        %2350 = vmatpush1.msra.mxu0 0.0
        %2351 = vmatprep.subr.mxu0 0.0
        %2352 = vmatpush1.msra.mxu0 0.0
        %2353 = vmatprep.subr.mxu0 0.0
        %2354 = vmatpush1.msra.mxu0 0.0
        %2355 = vmatprep.subr.mxu0 0.0
        %2356 = vmatpush1.msra.mxu0 0.0
        %2357 = vmatprep.subr.mxu0 0.0
        %2358 = vmatpush1.msra.mxu0 0.0
        %2359 = vmatprep.subr.mxu0 0.0
        %2360 = vmatpush1.msra.mxu0 0.0
        %2361 = vmatprep.subr.mxu0 0.0
        %2362 = vmatpush1.msra.mxu0 0.0
        %2363 = vmatprep.subr.mxu0 0.0
        %2364 = vmatpush1.msra.mxu0 0.0
        %2365 = vmatprep.subr.mxu0 0.0
        %2366 = vmatpush1.msra.mxu0 0.0
        %2367 = vmatprep.subr.mxu0 0.0
        %2368 = vmatpush1.msra.mxu0 0.0
        %2369 = vmatprep.subr.mxu0 0.0
        %2370 = vmatpush1.msra.mxu0 0.0
        %2371 = vmatprep.subr.mxu0 0.0
        %2372 = vmatpush1.msra.mxu0 0.0
        %2373 = vmatprep.subr.mxu0 0.0
        %2374 = vmatpush1.msra.mxu0 0.0
        %2375 = vmatprep.mubr.f32.mxu0 0.0
        %2376 = vmatmul.mubr.f32.gmra.mrb[0].mxu0 %v2306
        %v2377 = vpop.f32.mrb[0].mxu0
        %v2378 = vadd.f32 0.0, %v2377
        %v2379 = vpop.f32.mrb[0].mxu0
        %2380 = vmatprep.mubr.f32.mxu0 0.0
        %2381 = vmatmul.mubr.f32.gmra.mrb[0].mxu0 %v2309
        %v2382 = vpop.f32.mrb[0].mxu0
        %v2383 = vadd.f32 0.0, %v2382
        %v2384 = vpop.f32.mrb[0].mxu0
        %2385 = vdwg.mxu0
        %v2386 = vadd.f32 %v1971, %v2378
        %v2387 = vadd.f32 %v1972, %v2383
        %v2388 = vadd.f32 %v600, %v2386
        %v2389 = vadd.f32 %v601, %v2387
        %v2390 = vsel %vm612, %v2388, 0.0
        %2391 = vadd.xlane.f32.xlu0 %v2390
        %v2392 = vpop.xlane.xlu0 %2391
        %v2393 = vsel %vm612, %v2389, 0.0
        %2394 = vadd.xlane.f32.xlu0 %v2393
        %v2395 = vpop.xlane.xlu0 %2394
        %v2396 = vrcp.pop 32.0
        %v2397 = vmul.f32 %v2392, %v2396
        %v2398 = vmul.f32 %v2395, %v2396
        %v2399 = vsub.f32 %v2388, %v2397
        %v2400 = vsub.f32 %v2389, %v2398
        %v2401 = vmul.f32 %v2399, %v2399
        %v2402 = vmul.f32 %v2400, %v2400
        %v2403 = vsel %vm612, %v2401, 0.0
        %2404 = vadd.xlane.f32.xlu0 %v2403
        %v2405 = vpop.xlane.xlu0 %2404
        %v2406 = vsel %vm612, %v2402, 0.0
        %2407 = vadd.xlane.f32.xlu0 %v2406
        %v2408 = vpop.xlane.xlu0 %2407
        %v2409 = vmul.f32 %v2405, %v2396
        %v2410 = vmul.f32 %v2408, %v2396
        %v2411 = vadd.f32 %v2409, 1e-05
        %v2412 = vadd.f32 %v2410, 1e-05
        %v2413 = vrsqrt.pop %v2411
        %v2414 = vrsqrt.pop %v2412
        %v2415 = vmul.f32 %v2399, %v2413
        %v2416 = vmul.f32 %v2400, %v2414
        %v2417 = vlaneseq
        %v2418 = vshrl.u32 %v2417, 7
        %v2419 = vsub.s32 6, %v2418
        %v2420 = vrot.slane %v602, %v2419
        %v2421 = vmul.f32 %v2415, %v2420
        %v2422 = vmul.f32 %v2416, %v2420
        %v2423 = vlaneseq
        %v2424 = vshrl.u32 %v2423, 7
        %v2425 = vsub.s32 7, %v2424
        %v2426 = vrot.slane %v602, %v2425
        %v2427 = vadd.f32 %v2421, %v2426
        %v2428 = vadd.f32 %v2422, %v2426
        %v2429 = vld [vmem:[%s426] sm:$0xff]
        %v2430 = vld [vmem:[%s426 + $0x8] sm:$0xff]
        %v2431 = vld [vmem:[%s426 + $0x10] sm:$0xff]
        %v2432 = vld [vmem:[%s426 + $0x18] sm:$0xff]
        %v2433 = vlaneseq
        %v2434 = vshrl.u32 %v2433, 7
        %v2435 = vsub.s32 4, %v2434
        %v2436 = vrot.slane %v602, %v2435
        %v2438 = vsel %vm612, %v2427, 0
        %v2441 = vsel %vm612, %v2428, 0
        %2443 = vmatprep.subr.mxu0 0.0
        %2444 = vmatpush1.msra.mxu0 %v2429
        %2445 = vmatprep.subr.mxu0 0.0
        %2446 = vmatpush1.msra.mxu0 %v2430
        %2447 = vmatprep.subr.mxu0 0.0
        %2448 = vmatpush1.msra.mxu0 %v2431
        %2449 = vmatprep.subr.mxu0 0.0
        %2450 = vmatpush1.msra.mxu0 %v2432
        %2451 = vmatprep.subr.mxu0 0.0
        %2452 = vmatpush1.msra.mxu0 0.0
        %2453 = vmatprep.subr.mxu0 0.0
        %2454 = vmatpush1.msra.mxu0 0.0
        %2455 = vmatprep.subr.mxu0 0.0
        %2456 = vmatpush1.msra.mxu0 0.0
        %2457 = vmatprep.subr.mxu0 0.0
        %2458 = vmatpush1.msra.mxu0 0.0
        %2459 = vmatprep.subr.mxu0 0.0
        %2460 = vmatpush1.msra.mxu0 0.0
        %2461 = vmatprep.subr.mxu0 0.0
        %2462 = vmatpush1.msra.mxu0 0.0
        %2463 = vmatprep.subr.mxu0 0.0
        %2464 = vmatpush1.msra.mxu0 0.0
        %2465 = vmatprep.subr.mxu0 0.0
        %2466 = vmatpush1.msra.mxu0 0.0
        %2467 = vmatprep.subr.mxu0 0.0
        %2468 = vmatpush1.msra.mxu0 0.0
        %2469 = vmatprep.subr.mxu0 0.0
        %2470 = vmatpush1.msra.mxu0 0.0
        %2471 = vmatprep.subr.mxu0 0.0
        %2472 = vmatpush1.msra.mxu0 0.0
        %2473 = vmatprep.subr.mxu0 0.0
        %2474 = vmatpush1.msra.mxu0 0.0
        %2475 = vmatprep.subr.mxu0 0.0
        %2476 = vmatpush1.msra.mxu0 0.0
        %2477 = vmatprep.subr.mxu0 0.0
        %2478 = vmatpush1.msra.mxu0 0.0
        %2479 = vmatprep.subr.mxu0 0.0
        %2480 = vmatpush1.msra.mxu0 0.0
        %2481 = vmatprep.subr.mxu0 0.0
        %2482 = vmatpush1.msra.mxu0 0.0
        %2483 = vmatprep.subr.mxu0 0.0
        %2484 = vmatpush1.msra.mxu0 0.0
        %2485 = vmatprep.subr.mxu0 0.0
        %2486 = vmatpush1.msra.mxu0 0.0
        %2487 = vmatprep.subr.mxu0 0.0
        %2488 = vmatpush1.msra.mxu0 0.0
        %2489 = vmatprep.subr.mxu0 0.0
        %2490 = vmatpush1.msra.mxu0 0.0
        %2491 = vmatprep.subr.mxu0 0.0
        %2492 = vmatpush1.msra.mxu0 0.0
        %2493 = vmatprep.subr.mxu0 0.0
        %2494 = vmatpush1.msra.mxu0 0.0
        %2495 = vmatprep.subr.mxu0 0.0
        %2496 = vmatpush1.msra.mxu0 0.0
        %2497 = vmatprep.subr.mxu0 0.0
        %2498 = vmatpush1.msra.mxu0 0.0
        %2499 = vmatprep.subr.mxu0 0.0
        %2500 = vmatpush1.msra.mxu0 0.0
        %2501 = vmatprep.subr.mxu0 0.0
        %2502 = vmatpush1.msra.mxu0 0.0
        %2503 = vmatprep.subr.mxu0 0.0
        %2504 = vmatpush1.msra.mxu0 0.0
        %2505 = vmatprep.subr.mxu0 0.0
        %2506 = vmatpush1.msra.mxu0 0.0
        %2507 = vmatprep.mubr.f32.mxu0 0.0
        %2508 = vmatmul.mubr.f32.gmra.mrb[0].mxu0 %v2438
        %v2509 = vpop.f32.mrb[0].mxu0
        %v2510 = vadd.f32 %v2436, %v2509
        %v2511 = vpop.f32.mrb[0].mxu0
        %2512 = vmatprep.mubr.f32.mxu0 0.0
        %2513 = vmatmul.mubr.f32.gmra.mrb[0].mxu0 %v2441
        %v2514 = vpop.f32.mrb[0].mxu0
        %v2515 = vadd.f32 %v2436, %v2514
        %v2516 = vpop.f32.mrb[0].mxu0
        %2517 = vdwg.mxu0
        %v2518 = vmul.f32 %v2510, %v2510
        %v2519 = vmul.f32 %v2515, %v2515
        %v2520 = vmul.f32 %v2510, %v2518
        %v2521 = vmul.f32 %v2515, %v2519
        %v2522 = vmul.f32 %v2520, 0.044715
        %v2523 = vmul.f32 %v2521, 0.044715
        %v2524 = vadd.f32 %v2510, %v2522
        %v2525 = vadd.f32 %v2515, %v2523
        %v2526 = vmul.f32 %v2524, 0.7978846
        %v2527 = vmul.f32 %v2525, 0.7978846
        %v2528 = vtanh.pop %v2526
        %v2529 = vtanh.pop %v2527
        %v2530 = vadd.f32 %v2528, 1.0
        %v2531 = vadd.f32 %v2529, 1.0
        %v2532 = vmul.f32 %v2530, 0.5
        %v2533 = vmul.f32 %v2531, 0.5
        %v2534 = vmul.f32 %v2510, %v2532
        %v2535 = vmul.f32 %v2515, %v2533
        %v2536 = vld [vmem:[%s496] sm:$0xff]
        %v2537 = vld [vmem:[%s496 + $0x8] sm:$0xff]
        %v2538 = vld [vmem:[%s496 + $0x10] sm:$0xff]
        %v2539 = vld [vmem:[%s496 + $0x18] sm:$0xff]
        %v2540 = vld [vmem:[%s496 + $0x20] sm:$0xff]
        %v2541 = vld [vmem:[%s496 + $0x28] sm:$0xff]
        %v2542 = vld [vmem:[%s496 + $0x30] sm:$0xff]
        %v2543 = vld [vmem:[%s496 + $0x38] sm:$0xff]
        %v2544 = vlaneseq
        %v2545 = vshrl.u32 %v2544, 7
        %v2546 = vsub.s32 5, %v2545
        %v2547 = vrot.slane %v602, %v2546
        %vm2548 = vcmask 523264
        %v2550 = vsel %vm2548, %v2534, 0
        %v2553 = vsel %vm2548, %v2535, 0
        %2555 = vmatprep.subr.mxu0 0.0
        %2556 = vmatpush1.msra.mxu0 %v2536
        %2557 = vmatprep.subr.mxu0 0.0
        %2558 = vmatpush1.msra.mxu0 %v2537
        %2559 = vmatprep.subr.mxu0 0.0
        %2560 = vmatpush1.msra.mxu0 %v2538
        %2561 = vmatprep.subr.mxu0 0.0
        %2562 = vmatpush1.msra.mxu0 %v2539
        %2563 = vmatprep.subr.mxu0 0.0
        %2564 = vmatpush1.msra.mxu0 %v2540
        %2565 = vmatprep.subr.mxu0 0.0
        %2566 = vmatpush1.msra.mxu0 %v2541
        %2567 = vmatprep.subr.mxu0 0.0
        %2568 = vmatpush1.msra.mxu0 %v2542
        %2569 = vmatprep.subr.mxu0 0.0
        %2570 = vmatpush1.msra.mxu0 %v2543
        %2571 = vmatprep.subr.mxu0 0.0
        %2572 = vmatpush1.msra.mxu0 0.0
        %2573 = vmatprep.subr.mxu0 0.0
        %2574 = vmatpush1.msra.mxu0 0.0
        %2575 = vmatprep.subr.mxu0 0.0
        %2576 = vmatpush1.msra.mxu0 0.0
        %2577 = vmatprep.subr.mxu0 0.0
        %2578 = vmatpush1.msra.mxu0 0.0
        %2579 = vmatprep.subr.mxu0 0.0
        %2580 = vmatpush1.msra.mxu0 0.0
        %2581 = vmatprep.subr.mxu0 0.0
        %2582 = vmatpush1.msra.mxu0 0.0
        %2583 = vmatprep.subr.mxu0 0.0
        %2584 = vmatpush1.msra.mxu0 0.0
        %2585 = vmatprep.subr.mxu0 0.0
        %2586 = vmatpush1.msra.mxu0 0.0
        %2587 = vmatprep.subr.mxu0 0.0
        %2588 = vmatpush1.msra.mxu0 0.0
        %2589 = vmatprep.subr.mxu0 0.0
        %2590 = vmatpush1.msra.mxu0 0.0
        %2591 = vmatprep.subr.mxu0 0.0
        %2592 = vmatpush1.msra.mxu0 0.0
        %2593 = vmatprep.subr.mxu0 0.0
        %2594 = vmatpush1.msra.mxu0 0.0
        %2595 = vmatprep.subr.mxu0 0.0
        %2596 = vmatpush1.msra.mxu0 0.0
        %2597 = vmatprep.subr.mxu0 0.0
        %2598 = vmatpush1.msra.mxu0 0.0
        %2599 = vmatprep.subr.mxu0 0.0
        %2600 = vmatpush1.msra.mxu0 0.0
        %2601 = vmatprep.subr.mxu0 0.0
        %2602 = vmatpush1.msra.mxu0 0.0
        %2603 = vmatprep.subr.mxu0 0.0
        %2604 = vmatpush1.msra.mxu0 0.0
        %2605 = vmatprep.subr.mxu0 0.0
        %2606 = vmatpush1.msra.mxu0 0.0
        %2607 = vmatprep.subr.mxu0 0.0
        %2608 = vmatpush1.msra.mxu0 0.0
        %2609 = vmatprep.subr.mxu0 0.0
        %2610 = vmatpush1.msra.mxu0 0.0
        %2611 = vmatprep.subr.mxu0 0.0
        %2612 = vmatpush1.msra.mxu0 0.0
        %2613 = vmatprep.subr.mxu0 0.0
        %2614 = vmatpush1.msra.mxu0 0.0
        %2615 = vmatprep.subr.mxu0 0.0
        %2616 = vmatpush1.msra.mxu0 0.0
        %2617 = vmatprep.subr.mxu0 0.0
        %2618 = vmatpush1.msra.mxu0 0.0
        %2619 = vmatprep.mubr.f32.mxu0 0.0
        %2620 = vmatmul.mubr.f32.gmra.mrb[0].mxu0 %v2550
        %v2621 = vpop.f32.mrb[0].mxu0
        %v2622 = vadd.f32 %v2547, %v2621
        %v2623 = vpop.f32.mrb[0].mxu0
        %2624 = vmatprep.mubr.f32.mxu0 0.0
        %2625 = vmatmul.mubr.f32.gmra.mrb[0].mxu0 %v2553
        %v2626 = vpop.f32.mrb[0].mxu0
        %v2627 = vadd.f32 %v2547, %v2626
        %v2628 = vpop.f32.mrb[0].mxu0
        %2629 = vdwg.mxu0
        %v2630 = vadd.f32 %v2427, %v2622
        %v2631 = vadd.f32 %v2428, %v2627
        %v2632 = vsel %vm612, %v2630, 0.0
        %2633 = vadd.xlane.f32.xlu0 %v2632
        %v2634 = vpop.xlane.xlu0 %2633
        %v2635 = vsel %vm612, %v2631, 0.0
        %2636 = vadd.xlane.f32.xlu0 %v2635
        %v2637 = vpop.xlane.xlu0 %2636
        %v2638 = vmul.f32 %v2634, %v2396
        %v2639 = vmul.f32 %v2637, %v2396
        %v2640 = vsub.f32 %v2630, %v2638
        %v2641 = vsub.f32 %v2631, %v2639
        %v2642 = vmul.f32 %v2640, %v2640
        %v2643 = vmul.f32 %v2641, %v2641
        %v2644 = vsel %vm612, %v2642, 0.0
        %2645 = vadd.xlane.f32.xlu0 %v2644
        %v2646 = vpop.xlane.xlu0 %2645
        %v2647 = vsel %vm612, %v2643, 0.0
        %2648 = vadd.xlane.f32.xlu0 %v2647
        %v2649 = vpop.xlane.xlu0 %2648
        %v2650 = vmul.f32 %v2646, %v2396
        %v2651 = vmul.f32 %v2649, %v2396
        %v2652 = vadd.f32 %v2650, 1e-05
        %v2653 = vadd.f32 %v2651, 1e-05
        %v2654 = vrsqrt.pop %v2652
        %v2655 = vrsqrt.pop %v2653
        %v2656 = vmul.f32 %v2640, %v2654
        %v2657 = vmul.f32 %v2641, %v2655
        %v2658 = vlaneseq
        %v2659 = vshrl.u32 %v2658, 7
        %v2660 = vsub.s32 0, %v2659
        %v2661 = vrot.slane %v603, %v2660
        %v2662 = vmul.f32 %v2656, %v2661
        %v2663 = vmul.f32 %v2657, %v2661
        %v2664 = vlaneseq
        %v2665 = vshrl.u32 %v2664, 7
        %v2666 = vsub.s32 1, %v2665
        %v2667 = vrot.slane %v603, %v2666
        %v2668 = vadd.f32 %v2662, %v2667
        %v2669 = vadd.f32 %v2663, %v2667
        %2670 = vst.msk [vmem:[#allocation2] sm:$0xff] %vm612, %v2668
        %2671 = vst.msk [vmem:[#allocation2 + $0x8] sm:$0xff] %vm612, %v2669
        %p2672 = scmp.eq.s32.totalorder %s34, 1
        // Predicated region
        $region73: #{tpu_custom_call.1} parent=55 // pred_check
          %p2673 = pneg %p2672
        $region74: #{tpu_custom_call.1} parent=55 // pred_check_branch
          %2675 = sbr.rel (%p2673) target = $region76
        $region75: #{tpu_custom_call.1} parent=55 // pred_region
          %v2676 = vld [vmem:[%s2] sm:$0x3]
          %v2677 = vsel %vm612, %v2668, 0.0
          %2678 = vadd.xlane.f32.xlu0 %v2677
          %v2679 = vpop.xlane.xlu0 %2678
          %v2680 = vsel %vm612, %v2669, 0.0
          %2681 = vadd.xlane.f32.xlu0 %v2680
          %v2682 = vpop.xlane.xlu0 %2681
          %v2683 = vmul.f32 %v2679, %v2396
          %v2684 = vmul.f32 %v2682, %v2396
          %v2685 = vsub.f32 %v2668, %v2683
          %v2686 = vsub.f32 %v2669, %v2684
          %v2687 = vmul.f32 %v2685, %v2685
          %v2688 = vmul.f32 %v2686, %v2686
          %v2689 = vsel %vm612, %v2687, 0.0
          %2690 = vadd.xlane.f32.xlu0 %v2689
          %v2691 = vpop.xlane.xlu0 %2690
          %v2692 = vsel %vm612, %v2688, 0.0
          %2693 = vadd.xlane.f32.xlu0 %v2692
          %v2694 = vpop.xlane.xlu0 %2693
          %v2695 = vmul.f32 %v2691, %v2396
          %v2696 = vmul.f32 %v2694, %v2396
          %v2697 = vadd.f32 %v2695, 1e-05
          %v2698 = vadd.f32 %v2696, 1e-05
          %v2699 = vrsqrt.pop %v2697
          %v2700 = vrsqrt.pop %v2698
          %v2701 = vmul.f32 %v2685, %v2699
          %v2702 = vmul.f32 %v2686, %v2700
          %v2703 = vlaneseq
          %v2704 = vshrl.u32 %v2703, 7
          %v2705 = vsub.s32 0, %v2704
          %v2706 = vrot.slane %v2676, %v2705
          %v2707 = vmul.f32 %v2701, %v2706
          %v2708 = vmul.f32 %v2702, %v2706
          %v2709 = vlaneseq
          %v2710 = vshrl.u32 %v2709, 7
          %v2711 = vsub.s32 1, %v2710
          %v2712 = vrot.slane %v2676, %v2711
          %v2713 = vadd.f32 %v2707, %v2712
          %v2714 = vadd.f32 %v2708, %v2712
          %v2715 = vld [vmem:[%s3] sm:$0xff]
          %v2716 = vld [vmem:[%s3 + $0x8] sm:$0xff]
          %v2717 = vld [vmem:[%s3 + $0x10] sm:$0xff]
          %v2718 = vld [vmem:[%s3 + $0x18] sm:$0xff]
          %v2719 = vld [vmem:[%s3 + $0x20] sm:$0xff]
          %v2720 = vld [vmem:[%s3 + $0x28] sm:$0xff]
          %v2721 = vld [vmem:[%s3 + $0x30] sm:$0xff]
          %v2722 = vld [vmem:[%s3 + $0x38] sm:$0xff]
          %v2723 = vld [vmem:[%s3 + $0x40] sm:$0xff]
          %v2724 = vld [vmem:[%s3 + $0x48] sm:$0xff]
          %v2725 = vld [vmem:[%s3 + $0x50] sm:$0xff]
          %v2726 = vld [vmem:[%s3 + $0x58] sm:$0xff]
          %v2727 = vld [vmem:[%s3 + $0x60] sm:$0xff]
          %v2728 = vld [vmem:[%s3 + $0x68] sm:$0xff]
          %v2729 = vld [vmem:[%s3 + $0x70] sm:$0xff]
          %v2730 = vld [vmem:[%s3 + $0x78] sm:$0xff]
          %v2731 = vld [vmem:[%s3 + $0x80] sm:$0xff]
          %v2732 = vld [vmem:[%s3 + $0x88] sm:$0xff]
          %v2733 = vld [vmem:[%s3 + $0x90] sm:$0xff]
          %v2734 = vld [vmem:[%s3 + $0x98] sm:$0xff]
          %v2735 = vld [vmem:[%s3 + $0xa0] sm:$0x1]
          %v2736 = vld [vmem:[%s3 + $0xa8] sm:$0x1]
          %v2737 = vld [vmem:[%s3 + $0xb0] sm:$0x1]
          %v2738 = vld [vmem:[%s3 + $0xb8] sm:$0x1]
          %v2739 = vld [vmem:[%s3 + $0xc0] sm:$0x1]
          %v2740 = vlaneseq
          %v2741 = vshrl.u32 %v2740, 7
          %v2742 = vsub.s32 0, %v2741
          %v2743 = vrot.slane %v2735, %v2742
          %v2744 = vlaneseq
          %v2745 = vshrl.u32 %v2744, 7
          %v2746 = vsub.s32 0, %v2745
          %v2747 = vrot.slane %v2736, %v2746
          %v2748 = vlaneseq
          %v2749 = vshrl.u32 %v2748, 7
          %v2750 = vsub.s32 0, %v2749
          %v2751 = vrot.slane %v2737, %v2750
          %v2752 = vlaneseq
          %v2753 = vshrl.u32 %v2752, 7
          %v2754 = vsub.s32 0, %v2753
          %v2755 = vrot.slane %v2738, %v2754
          %v2756 = vlaneseq
          %v2757 = vshrl.u32 %v2756, 7
          %v2758 = vsub.s32 0, %v2757
          %v2759 = vrot.slane %v2739, %v2758
          %v2761 = vsel %vm612, %v2713, 0
          %v2764 = vsel %vm612, %v2714, 0
          %2766 = vmatprep.subr.mxu0 %v2716
          %2767 = vmatpush1.msra.mxu0 %v2715
          %2768 = vmatprep.subr.mxu0 %v2721
          %2769 = vmatpush1.msra.mxu0 %v2720
          %2770 = vmatprep.subr.mxu0 %v2726
          %2771 = vmatpush1.msra.mxu0 %v2725
          %2772 = vmatprep.subr.mxu0 %v2731
          %2773 = vmatpush1.msra.mxu0 %v2730
          %2774 = vmatprep.subr.mxu0 0.0
          %2775 = vmatpush1.msra.mxu0 0.0
          %2776 = vmatprep.subr.mxu0 0.0
          %2777 = vmatpush1.msra.mxu0 0.0
          %2778 = vmatprep.subr.mxu0 0.0
          %2779 = vmatpush1.msra.mxu0 0.0
          %2780 = vmatprep.subr.mxu0 0.0
          %2781 = vmatpush1.msra.mxu0 0.0
          %2782 = vmatprep.subr.mxu0 0.0
          %2783 = vmatpush1.msra.mxu0 0.0
          %2784 = vmatprep.subr.mxu0 0.0
          %2785 = vmatpush1.msra.mxu0 0.0
          %2786 = vmatprep.subr.mxu0 0.0
          %2787 = vmatpush1.msra.mxu0 0.0
          %2788 = vmatprep.subr.mxu0 0.0
          %2789 = vmatpush1.msra.mxu0 0.0
          %2790 = vmatprep.subr.mxu0 0.0
          %2791 = vmatpush1.msra.mxu0 0.0
          %2792 = vmatprep.subr.mxu0 0.0
          %2793 = vmatpush1.msra.mxu0 0.0
          %2794 = vmatprep.subr.mxu0 0.0
          %2795 = vmatpush1.msra.mxu0 0.0
          %2796 = vmatprep.subr.mxu0 0.0
          %2797 = vmatpush1.msra.mxu0 0.0
          %2798 = vmatprep.subr.mxu0 0.0
          %2799 = vmatpush1.msra.mxu0 0.0
          %2800 = vmatprep.subr.mxu0 0.0
          %2801 = vmatpush1.msra.mxu0 0.0
          %2802 = vmatprep.subr.mxu0 0.0
          %2803 = vmatpush1.msra.mxu0 0.0
          %2804 = vmatprep.subr.mxu0 0.0
          %2805 = vmatpush1.msra.mxu0 0.0
          %2806 = vmatprep.subr.mxu0 0.0
          %2807 = vmatpush1.msra.mxu0 0.0
          %2808 = vmatprep.subr.mxu0 0.0
          %2809 = vmatpush1.msra.mxu0 0.0
          %2810 = vmatprep.subr.mxu0 0.0
          %2811 = vmatpush1.msra.mxu0 0.0
          %2812 = vmatprep.subr.mxu0 0.0
          %2813 = vmatpush1.msra.mxu0 0.0
          %2814 = vmatprep.subr.mxu0 0.0
          %2815 = vmatpush1.msra.mxu0 0.0
          %2816 = vmatprep.subr.mxu0 0.0
          %2817 = vmatpush1.msra.mxu0 0.0
          %2818 = vmatprep.subr.mxu0 0.0
          %2819 = vmatpush1.msra.mxu0 0.0
          %2820 = vmatprep.subr.mxu0 0.0
          %2821 = vmatpush1.msra.mxu0 0.0
          %2822 = vmatprep.subr.mxu0 0.0
          %2823 = vmatpush1.msra.mxu0 0.0
          %2824 = vmatprep.subr.mxu0 0.0
          %2825 = vmatpush1.msra.mxu0 0.0
          %2826 = vmatprep.subr.mxu0 0.0
          %2827 = vmatpush1.msra.mxu0 0.0
          %2828 = vmatprep.subr.mxu0 0.0
          %2829 = vmatpush1.msra.mxu0 0.0
          %2830 = vmatprep.mubr.f32.mxu0 0.0
          %2831 = vmatmul.mubr.f32.gmra.mrb[0].mxu0 %v2761
          %v2832 = vpop.f32.mrb[0].mxu0
          %v2833 = vadd.f32 %v2743, %v2832
          %v2834 = vpop.f32.mrb[0].mxu0
          %v2835 = vadd.f32 %v2747, %v2834
          %2836 = vmatprep.mubr.f32.mxu0 0.0
          %2837 = vmatmul.mubr.f32.gmra.mrb[0].mxu0 %v2764
          %v2838 = vpop.f32.mrb[0].mxu0
          %v2839 = vadd.f32 %v2743, %v2838
          %v2840 = vpop.f32.mrb[0].mxu0
          %v2841 = vadd.f32 %v2747, %v2840
          %2842 = vdwg.mxu0
          %2843 = vmatprep.subr.mxu0 %v2718
          %2844 = vmatpush1.msra.mxu0 %v2717
          %2845 = vmatprep.subr.mxu0 %v2723
          %2846 = vmatpush1.msra.mxu0 %v2722
          %2847 = vmatprep.subr.mxu0 %v2728
          %2848 = vmatpush1.msra.mxu0 %v2727
          %2849 = vmatprep.subr.mxu0 %v2733
          %2850 = vmatpush1.msra.mxu0 %v2732
          %2851 = vmatprep.subr.mxu0 0.0
          %2852 = vmatpush1.msra.mxu0 0.0
          %2853 = vmatprep.subr.mxu0 0.0
          %2854 = vmatpush1.msra.mxu0 0.0
          %2855 = vmatprep.subr.mxu0 0.0
          %2856 = vmatpush1.msra.mxu0 0.0
          %2857 = vmatprep.subr.mxu0 0.0
          %2858 = vmatpush1.msra.mxu0 0.0
          %2859 = vmatprep.subr.mxu0 0.0
          %2860 = vmatpush1.msra.mxu0 0.0
          %2861 = vmatprep.subr.mxu0 0.0
          %2862 = vmatpush1.msra.mxu0 0.0
          %2863 = vmatprep.subr.mxu0 0.0
          %2864 = vmatpush1.msra.mxu0 0.0
          %2865 = vmatprep.subr.mxu0 0.0
          %2866 = vmatpush1.msra.mxu0 0.0
          %2867 = vmatprep.subr.mxu0 0.0
          %2868 = vmatpush1.msra.mxu0 0.0
          %2869 = vmatprep.subr.mxu0 0.0
          %2870 = vmatpush1.msra.mxu0 0.0
          %2871 = vmatprep.subr.mxu0 0.0
          %2872 = vmatpush1.msra.mxu0 0.0
          %2873 = vmatprep.subr.mxu0 0.0
          %2874 = vmatpush1.msra.mxu0 0.0
          %2875 = vmatprep.subr.mxu0 0.0
          %2876 = vmatpush1.msra.mxu0 0.0
          %2877 = vmatprep.subr.mxu0 0.0
          %2878 = vmatpush1.msra.mxu0 0.0
          %2879 = vmatprep.subr.mxu0 0.0
          %2880 = vmatpush1.msra.mxu0 0.0
          %2881 = vmatprep.subr.mxu0 0.0
          %2882 = vmatpush1.msra.mxu0 0.0
          %2883 = vmatprep.subr.mxu0 0.0
          %2884 = vmatpush1.msra.mxu0 0.0
          %2885 = vmatprep.subr.mxu0 0.0
          %2886 = vmatpush1.msra.mxu0 0.0
          %2887 = vmatprep.subr.mxu0 0.0
          %2888 = vmatpush1.msra.mxu0 0.0
          %2889 = vmatprep.subr.mxu0 0.0
          %2890 = vmatpush1.msra.mxu0 0.0
          %2891 = vmatprep.subr.mxu0 0.0
          %2892 = vmatpush1.msra.mxu0 0.0
          %2893 = vmatprep.subr.mxu0 0.0
          %2894 = vmatpush1.msra.mxu0 0.0
          %2895 = vmatprep.subr.mxu0 0.0
          %2896 = vmatpush1.msra.mxu0 0.0
          %2897 = vmatprep.subr.mxu0 0.0
          %2898 = vmatpush1.msra.mxu0 0.0
          %2899 = vmatprep.subr.mxu0 0.0
          %2900 = vmatpush1.msra.mxu0 0.0
          %2901 = vmatprep.subr.mxu0 0.0
          %2902 = vmatpush1.msra.mxu0 0.0
          %2903 = vmatprep.subr.mxu0 0.0
          %2904 = vmatpush1.msra.mxu0 0.0
          %2905 = vmatprep.subr.mxu0 0.0
          %2906 = vmatpush1.msra.mxu0 0.0
          %2907 = vmatprep.mubr.f32.mxu0 0.0
          %2908 = vmatmul.mubr.f32.gmra.mrb[0].mxu0 %v2761
          %v2909 = vpop.f32.mrb[0].mxu0
          %v2910 = vadd.f32 %v2751, %v2909
          %v2911 = vpop.f32.mrb[0].mxu0
          %v2912 = vadd.f32 %v2755, %v2911
          %2913 = vmatprep.mubr.f32.mxu0 0.0
          %2914 = vmatmul.mubr.f32.gmra.mrb[0].mxu0 %v2764
          %v2915 = vpop.f32.mrb[0].mxu0
          %v2916 = vadd.f32 %v2751, %v2915
          %v2917 = vpop.f32.mrb[0].mxu0
          %v2918 = vadd.f32 %v2755, %v2917
          %2919 = vdwg.mxu0
          %2920 = vmatprep.subr.mxu0 0.0
          %2921 = vmatpush1.msra.mxu0 %v2719
          %2922 = vmatprep.subr.mxu0 0.0
          %2923 = vmatpush1.msra.mxu0 %v2724
          %2924 = vmatprep.subr.mxu0 0.0
          %2925 = vmatpush1.msra.mxu0 %v2729
          %2926 = vmatprep.subr.mxu0 0.0
          %2927 = vmatpush1.msra.mxu0 %v2734
          %2928 = vmatprep.subr.mxu0 0.0
          %2929 = vmatpush1.msra.mxu0 0.0
          %2930 = vmatprep.subr.mxu0 0.0
          %2931 = vmatpush1.msra.mxu0 0.0
          %2932 = vmatprep.subr.mxu0 0.0
          %2933 = vmatpush1.msra.mxu0 0.0
          %2934 = vmatprep.subr.mxu0 0.0
          %2935 = vmatpush1.msra.mxu0 0.0
          %2936 = vmatprep.subr.mxu0 0.0
          %2937 = vmatpush1.msra.mxu0 0.0
          %2938 = vmatprep.subr.mxu0 0.0
          %2939 = vmatpush1.msra.mxu0 0.0
          %2940 = vmatprep.subr.mxu0 0.0
          %2941 = vmatpush1.msra.mxu0 0.0
          %2942 = vmatprep.subr.mxu0 0.0
          %2943 = vmatpush1.msra.mxu0 0.0
          %2944 = vmatprep.subr.mxu0 0.0
          %2945 = vmatpush1.msra.mxu0 0.0
          %2946 = vmatprep.subr.mxu0 0.0
          %2947 = vmatpush1.msra.mxu0 0.0
          %2948 = vmatprep.subr.mxu0 0.0
          %2949 = vmatpush1.msra.mxu0 0.0
          %2950 = vmatprep.subr.mxu0 0.0
          %2951 = vmatpush1.msra.mxu0 0.0
          %2952 = vmatprep.subr.mxu0 0.0
          %2953 = vmatpush1.msra.mxu0 0.0
          %2954 = vmatprep.subr.mxu0 0.0
          %2955 = vmatpush1.msra.mxu0 0.0
          %2956 = vmatprep.subr.mxu0 0.0
          %2957 = vmatpush1.msra.mxu0 0.0
          %2958 = vmatprep.subr.mxu0 0.0
          %2959 = vmatpush1.msra.mxu0 0.0
          %2960 = vmatprep.subr.mxu0 0.0
          %2961 = vmatpush1.msra.mxu0 0.0
          %2962 = vmatprep.subr.mxu0 0.0
          %2963 = vmatpush1.msra.mxu0 0.0
          %2964 = vmatprep.subr.mxu0 0.0
          %2965 = vmatpush1.msra.mxu0 0.0
          %2966 = vmatprep.subr.mxu0 0.0
          %2967 = vmatpush1.msra.mxu0 0.0
          %2968 = vmatprep.subr.mxu0 0.0
          %2969 = vmatpush1.msra.mxu0 0.0
          %2970 = vmatprep.subr.mxu0 0.0
          %2971 = vmatpush1.msra.mxu0 0.0
          %2972 = vmatprep.subr.mxu0 0.0
          %2973 = vmatpush1.msra.mxu0 0.0
          %2974 = vmatprep.subr.mxu0 0.0
          %2975 = vmatpush1.msra.mxu0 0.0
          %2976 = vmatprep.subr.mxu0 0.0
          %2977 = vmatpush1.msra.mxu0 0.0
          %2978 = vmatprep.subr.mxu0 0.0
          %2979 = vmatpush1.msra.mxu0 0.0
          %2980 = vmatprep.subr.mxu0 0.0
          %2981 = vmatpush1.msra.mxu0 0.0
          %2982 = vmatprep.subr.mxu0 0.0
          %2983 = vmatpush1.msra.mxu0 0.0
          %2984 = vmatprep.mubr.f32.mxu0 0.0
          %2985 = vmatmul.mubr.f32.gmra.mrb[0].mxu0 %v2761
          %v2986 = vpop.f32.mrb[0].mxu0
          %v2987 = vadd.f32 %v2759, %v2986
          %v2988 = vpop.f32.mrb[0].mxu0
          %2989 = vmatprep.mubr.f32.mxu0 0.0
          %2990 = vmatmul.mubr.f32.gmra.mrb[0].mxu0 %v2764
          %v2991 = vpop.f32.mrb[0].mxu0
          %v2992 = vadd.f32 %v2759, %v2991
          %v2993 = vpop.f32.mrb[0].mxu0
          %2994 = vdwg.mxu0
          %vm2995 = vcmask 31744
          %v2996 = vsel %vm2995, %v2987, -inf
          %2997 = vmax.xlane.f32.xlu0 %v2996
          %v2998 = vpop.xlane.xlu0 %2997
          %v2999 = vsel %vm2995, %v2992, -inf
          %3000 = vmax.xlane.f32.xlu0 %v2999
          %v3001 = vpop.xlane.xlu0 %3000
          %v3002 = vsub.f32 %v2987, %v2998
          %v3003 = vsub.f32 %v2992, %v3001
          %v3004 = vmul.f32 %v3002, 1.442695
          %v3005 = vpow.pop %v3004
          %v3006 = vmul.f32 %v3003, 1.442695
          %v3007 = vpow.pop %v3006
          %v3008 = vsel %vm2995, %v3005, 0.0
          %3009 = vadd.xlane.f32.xlu0 %v3008
          %v3010 = vpop.xlane.xlu0 %3009
          %v3011 = vsel %vm2995, %v3007, 0.0
          %3012 = vadd.xlane.f32.xlu0 %v3011
          %v3013 = vpop.xlane.xlu0 %3012
          %v3014 = vrcp.pop %v3010
          %v3015 = vrcp.pop %v3013
          %v3016 = vmul.f32 %v3005, %v3014
          %v3017 = vmul.f32 %v3007, %v3015
          %3019 = vset.pattern.permute.xlu0 0
          %3020 = vperm.xlu0 %3019, %v3016
          %v3021 = vpop.permute.xlu0 %3020
          %3024 = vset.pattern.permute.xlu0 0
          %3025 = vperm.xlu0 %3024, %v3017
          %v3026 = vpop.permute.xlu0 %3025
          %v3028 = vmul.f32 %v3021, %v2833
          %v3029 = vmul.f32 %v3026, %v2839
          %3030 = vset.pattern.permute.xlu0 1
          %3031 = vperm.xlu0 %3030, %v3016
          %v3032 = vpop.permute.xlu0 %3031
          %3034 = vset.pattern.permute.xlu0 1
          %3035 = vperm.xlu0 %3034, %v3017
          %v3036 = vpop.permute.xlu0 %3035
          %v3038 = vmul.f32 %v3032, %v2835
          %v3039 = vmul.f32 %v3036, %v2841
          %v3040 = vadd.f32 %v3028, %v3038
          %v3041 = vadd.f32 %v3029, %v3039
          %3042 = vset.pattern.permute.xlu0 2
          %3043 = vperm.xlu0 %3042, %v3016
          %v3044 = vpop.permute.xlu0 %3043
          %3046 = vset.pattern.permute.xlu0 2
          %3047 = vperm.xlu0 %3046, %v3017
          %v3048 = vpop.permute.xlu0 %3047
          %v3050 = vmul.f32 %v3044, %v2910
          %v3051 = vmul.f32 %v3048, %v2916
          %v3052 = vadd.f32 %v3040, %v3050
          %v3053 = vadd.f32 %v3041, %v3051
          %3054 = vset.pattern.permute.xlu0 3
          %3055 = vperm.xlu0 %3054, %v3016
          %v3056 = vpop.permute.xlu0 %3055
          %3058 = vset.pattern.permute.xlu0 3
          %3059 = vperm.xlu0 %3058, %v3017
          %v3060 = vpop.permute.xlu0 %3059
          %v3062 = vmul.f32 %v3056, %v2912
          %v3063 = vmul.f32 %v3060, %v2918
          %v3064 = vadd.f32 %v3052, %v3062
          %v3065 = vadd.f32 %v3053, %v3063
          %3066 = vst [vmem:[%s485] sm:$0xff] %v3064
          %3067 = vst [vmem:[%s485 + $0x8] sm:$0xff] %v3065
        $region76: #{tpu_custom_call.1} parent=55 // pred_fallthru
          _
        %s3068 = sand.u32 %s268, 1
        %s3069 = scalar_lea.sflag [#allocation5], %s3068
        %s3070 = sand.u32 %s268, 1
        %s3071 = smul.addr %s3070, 16
        %s3072 = scalar_lea.vmem [#allocation9], %s3071
        // Predicated region
        $region77: #{tpu_custom_call.1} parent=55 // pred_check
          %p3073 = pneg %p278
        $region78: #{tpu_custom_call.1} parent=55 // pred_check_branch
          %3075 = sbr.rel (%p3073) target = $region80
        $region79: #{tpu_custom_call.1} parent=55 // pred_region
          %s3076 = smul.u32 2, %s33
          %s3078 = ssub.s32 256, 256
          %3079 = vsyncadd %s3069, %s3078
          %s3080 = smul.addr %s3076, 128
          %s3081 = scalar_lea.hbm %s9, %s3080
          %s3082 = sshll.u32 %s3072, 4
          %s3083 = int_to_ptr.vmem [resolvable:$true] %s3082
          %3088 = dma.vmem_to_hbm [thread:$0]  %s3083, 256, %s3081, %s3069, 128, 128, 8
        $region80: #{tpu_custom_call.1} parent=55 // pred_fallthru
          _
      $region56: #{tpu_custom_call.1} parent=5 // pred_fallthru
        _
      %p3089 = scmp.le.s32.totalorder 2, %s24
      // Predicated region
      $region81: #{tpu_custom_call.1} parent=5 // pred_check
        %p3090 = pneg %p3089
      $region82: #{tpu_custom_call.1} parent=5 // pred_check_branch
        %3092 = sbr.rel (%p3090) target = $region84
      $region83: #{tpu_custom_call.1} parent=5 // pred_region
        %s3093 = ssub.s32 %s24, 2
        // Predicated region
        $region85: #{tpu_custom_call.1} parent=83 // pred_check
          %p3094 = pneg %p284
        $region86: #{tpu_custom_call.1} parent=83 // pred_check_branch
          %3096 = sbr.rel (%p3094) target = $region88
        $region87: #{tpu_custom_call.1} parent=83 // pred_region
          %s3097 = sand.u32 %s269, 1
          %s3098 = scalar_lea.sflag [#allocation5], %s3097
          %s3099 = sand.u32 %s269, 1
          %s3100 = smul.addr %s3099, 16
          %s3101 = scalar_lea.vmem [#allocation9], %s3100
          %3102 = dma.done %s3098, 256
        $region88: #{tpu_custom_call.1} parent=83 // pred_fallthru
          _
      $region84: #{tpu_custom_call.1} parent=5 // pred_fallthru
        _
    $region6: #{tpu_custom_call.1} parent=1 // loop_footer
      %s28 = sadd.s32 1, %s24
    $region7: #{tpu_custom_call.1} parent=1 // loop_footer_branch
      %23 = sbr.rel target = $region3
    $region8: #{tpu_custom_call.1} parent=1 // loop_exit
      _
    %3103 = vsyncpa [#allocation4], 1
    %s3104 = scalar_lea.sflag [#allocation4], 1
    %3105 = vsyncpa %s3104, 1
    %3106 = vsyncpa [#allocation7], 1
    %s3107 = scalar_lea.sflag [#allocation7], 1
    %3108 = vsyncpa %s3107, 1
    %3109 = vsyncpa [#allocation5], 1
    %s3110 = scalar_lea.sflag [#allocation5], 1
    %3111 = vsyncpa %s3110, 1

</llo_original>
